<compile_context>
chip_gen: v7x
topology: tpu7x:2x2x1
jax: 0.10.0
libtpu: 0.0.40
codegen_flags: <defaults>
</compile_context>

<pallas_src>
import jax
import jax.numpy as jnp
from jax.experimental import pallas as pl
from jax.experimental.pallas import tpu as pltpu

EPS = 1e-5


def fused_bn_relu_conv_bn_kernel(x_ref, g1_ref, b1_ref, w_ref, g2_ref, b2_ref,
                                 o_ref):
    # x_ref:  (Cin, M)     g1/b1: (Cin, 1)
    # w_ref:  (TN, Cin)    g2/b2: (TN, 1)
    # o_ref:  (TN, M)
    x = x_ref[...]                       # (Cin, M) f32
    m = x.shape[1]
    inv_m = 1.0 / m                      # static

    # ---- BatchNorm2d #1 (batch stats, biased variance), one-pass stats ----
    mean1 = jnp.sum(x, axis=1, keepdims=True) * inv_m
    ex2 = jnp.sum(x * x, axis=1, keepdims=True) * inv_m
    var1 = ex2 - mean1 * mean1
    scale1 = g1_ref[...] * jax.lax.rsqrt(var1 + EPS)     # (Cin, 1)
    shift1 = b1_ref[...] - mean1 * scale1                # (Cin, 1)

    # ---- ReLU (fused with BN1 scale/shift) ----
    y = jnp.maximum(x * scale1 + shift1, 0.0)            # (Cin, M)

    # ---- Conv2d 1x1 (no bias): (TN, Cin) @ (Cin, M) on the MXU ----
    z = jnp.dot(w_ref[...], y, preferred_element_type=jnp.float32)  # (TN, M)

    # ---- BatchNorm2d #2 (per-output-channel, independent per Cout tile) ----
    mean2 = jnp.sum(z, axis=1, keepdims=True) * inv_m
    ez2 = jnp.sum(z * z, axis=1, keepdims=True) * inv_m
    var2 = ez2 - mean2 * mean2
    scale2 = g2_ref[...] * jax.lax.rsqrt(var2 + EPS)     # (TN, 1)
    shift2 = b2_ref[...] - mean2 * scale2                # (TN, 1)

    o_ref[...] = (z * scale2 + shift2).astype(o_ref.dtype)


def fused_forward(x_nchw, gamma1, beta1, w_oi, gamma2, beta2, *, tile_n=256):
    """x_nchw: (N, Cin, H, W) f32; w_oi: (Cout, Cin) f32 (from (Cout,Cin,1,1))."""
    N, Cin, H, W = x_nchw.shape
    Cout = w_oi.shape[0]
    M = N * H * W

    if Cout % tile_n != 0:
        tile_n = Cout  # fallback: single tile (spec shape is divisible anyway)

    # Channel-major 2-D view (Cin, M).  For N == 1 the transpose is a no-op
    # permutation of a size-1 axis, so this is just a reshape (no HBM copy).
    x_cm = jnp.transpose(x_nchw, (1, 0, 2, 3)).reshape(Cin, M)

    g1 = gamma1.reshape(Cin, 1)
    b1 = beta1.reshape(Cin, 1)
    g2 = gamma2.reshape(Cout, 1)
    b2 = beta2.reshape(Cout, 1)

    grid = (Cout // tile_n,)

    out_cm = pl.pallas_call(
        fused_bn_relu_conv_bn_kernel,
        out_shape=jax.ShapeDtypeStruct((Cout, M), jnp.float32),
        grid=grid,
        in_specs=[
            pl.BlockSpec((Cin, M), lambda j: (0, 0)),        # x: resident
            pl.BlockSpec((Cin, 1), lambda j: (0, 0)),        # gamma1
            pl.BlockSpec((Cin, 1), lambda j: (0, 0)),        # beta1
            pl.BlockSpec((tile_n, Cin), lambda j: (j, 0)),   # weight tile (streamed)
            pl.BlockSpec((tile_n, 1), lambda j: (j, 0)),     # gamma2 tile
            pl.BlockSpec((tile_n, 1), lambda j: (j, 0)),     # beta2 tile
        ],
        out_specs=pl.BlockSpec((tile_n, M), lambda j: (j, 0)),
        compiler_params=pltpu.CompilerParams(
            dimension_semantics=("parallel",),               # megacore on v7x
            vmem_limit_bytes=32 * 1024 * 1024),
    )(x_cm, g1, b1, w_oi, g2, b2)

    # (Cout, M) -> (N, Cout, H, W).  For N == 1 this is again a pure reshape.
    return jnp.transpose(out_cm.reshape(Cout, N, H, W), (1, 0, 2, 3))


def reference_forward(x_nchw, gamma1, beta1, w_oi, gamma2, beta2):
    """Pure-JAX reference mirroring PyTorch training-mode forward."""
    def bn(x, g, b):
        mean = jnp.mean(x, axis=(0, 2, 3), keepdims=True)
        var = jnp.mean((x - mean) ** 2, axis=(0, 2, 3), keepdims=True)
        return (x - mean) * jax.lax.rsqrt(var + EPS) * g.reshape(1, -1, 1, 1) \
            + b.reshape(1, -1, 1, 1)

    h = jnp.maximum(bn(x_nchw, gamma1, beta1), 0.0)
    z = jnp.einsum('nchw,oc->nohw', h, w_oi)   # 1x1 conv
    return bn(z, gamma2, beta2)


if __name__ == "__main__":
    # Shapes implied by the module: input (1, 512, 7, 7), Conv2d 512 -> 2048.
    N, Cin, H, W = 1, 512, 7, 7
    Cout = 2048

    key = jax.random.PRNGKey(0)
    k_x, k_w, k_g1, k_b1, k_g2, k_b2 = jax.random.split(key, 6)

    x = jax.random.normal(k_x, (N, Cin, H, W), dtype=jnp.float32)
    w = jax.random.normal(k_w, (Cout, Cin), dtype=jnp.float32) * 0.02
    gamma1 = 1.0 + 0.1 * jax.random.normal(k_g1, (Cin,), dtype=jnp.float32)
    beta1 = 0.1 * jax.random.normal(k_b1, (Cin,), dtype=jnp.float32)
    gamma2 = 1.0 + 0.1 * jax.random.normal(k_g2, (Cout,), dtype=jnp.float32)
    beta2 = 0.1 * jax.random.normal(k_b2, (Cout,), dtype=jnp.float32)

    out = jax.block_until_ready(
        fused_forward(x, gamma1, beta1, w, gamma2, beta2))

    ref = jax.block_until_ready(
        reference_forward(x, gamma1, beta1, w, gamma2, beta2))

    assert out.shape == (N, Cout, H, W), out.shape
    assert jnp.allclose(out, ref, atol=1e-3, rtol=1e-3), \
        float(jnp.max(jnp.abs(out - ref)))

    print("KERNEL_OK")
</pallas_src>

<mosaic_0001>
module attributes {stable_mosaic.version = 11 : i64} {
  func.func @fused_bn_relu_conv_bn_kernel(%arg0: i32, %arg1: memref<512x49xf32, #tpu.memory_space<vmem>>, %arg2: memref<512x1xf32, #tpu.memory_space<vmem>>, %arg3: memref<512x1xf32, #tpu.memory_space<vmem>>, %arg4: memref<256x512xf32, #tpu.memory_space<vmem>>, %arg5: memref<256x1xf32, #tpu.memory_space<vmem>>, %arg6: memref<256x1xf32, #tpu.memory_space<vmem>>, %arg7: memref<256x49xf32, #tpu.memory_space<vmem>>) attributes {dimension_semantics = [#tpu.dimension_semantics<parallel>], iteration_bounds = array<i64: 8>, scalar_prefetch = 0 : i64, scratch_operands = 0 : i64, tpu.core_type = #tpu.core_type<tc>, window_params = [{pipeline_mode = #tpu.pipeline_mode<synchronous>, transform_indices = @transform_0, window_bounds = array<i64: 512, 49>}, {pipeline_mode = #tpu.pipeline_mode<synchronous>, transform_indices = @transform_1, window_bounds = array<i64: 512, 1>}, {pipeline_mode = #tpu.pipeline_mode<synchronous>, transform_indices = @transform_2, window_bounds = array<i64: 512, 1>}, {transform_indices = @transform_3, window_bounds = array<i64: 256, 512>}, {transform_indices = @transform_4, window_bounds = array<i64: 256, 1>}, {transform_indices = @transform_5, window_bounds = array<i64: 256, 1>}, {transform_indices = @transform_6, window_bounds = array<i64: 256, 49>}]} {
    %c0 = arith.constant 0 : index
    %c0_0 = arith.constant 0 : index
    %0 = vector.load %arg1[%c0, %c0_0] : memref<512x49xf32, #tpu.memory_space<vmem>>, vector<512x49xf32>
    %cst = arith.constant dense<0.000000e+00> : vector<512xf32>
    %1 = vector.multi_reduction <add>, %0, %cst [1] : vector<512x49xf32> to vector<512xf32>
    %2 = vector.shape_cast %1 : vector<512xf32> to vector<512x1xf32>
    %cst_1 = arith.constant 0.0204081628 : f32
    %3 = vector.broadcast %cst_1 : f32 to vector<512x1xf32>
    %4 = arith.mulf %2, %3 : vector<512x1xf32>
    %5 = arith.mulf %0, %0 : vector<512x49xf32>
    %cst_2 = arith.constant dense<0.000000e+00> : vector<512xf32>
    %6 = vector.multi_reduction <add>, %5, %cst_2 [1] : vector<512x49xf32> to vector<512xf32>
    %7 = vector.shape_cast %6 : vector<512xf32> to vector<512x1xf32>
    %cst_3 = arith.constant 0.0204081628 : f32
    %8 = vector.broadcast %cst_3 : f32 to vector<512x1xf32>
    %9 = arith.mulf %7, %8 : vector<512x1xf32>
    %10 = arith.mulf %4, %4 : vector<512x1xf32>
    %11 = arith.subf %9, %10 : vector<512x1xf32>
    %c0_4 = arith.constant 0 : index
    %c0_5 = arith.constant 0 : index
    %12 = vector.load %arg2[%c0_4, %c0_5] : memref<512x1xf32, #tpu.memory_space<vmem>>, vector<512x1xf32>
    %cst_6 = arith.constant 9.99999974E-6 : f32
    %13 = vector.broadcast %cst_6 : f32 to vector<512x1xf32>
    %14 = arith.addf %11, %13 : vector<512x1xf32>
    %15 = math.rsqrt %14 : vector<512x1xf32>
    %16 = arith.mulf %12, %15 : vector<512x1xf32>
    %c0_7 = arith.constant 0 : index
    %c0_8 = arith.constant 0 : index
    %17 = vector.load %arg3[%c0_7, %c0_8] : memref<512x1xf32, #tpu.memory_space<vmem>>, vector<512x1xf32>
    %18 = arith.mulf %4, %16 : vector<512x1xf32>
    %19 = arith.subf %17, %18 : vector<512x1xf32>
    %20 = vector.broadcast %16 : vector<512x1xf32> to vector<512x49xf32>
    %21 = arith.mulf %0, %20 : vector<512x49xf32>
    %22 = vector.broadcast %19 : vector<512x1xf32> to vector<512x49xf32>
    %23 = arith.addf %21, %22 : vector<512x49xf32>
    %cst_9 = arith.constant 0.000000e+00 : f32
    %24 = vector.broadcast %cst_9 : f32 to vector<512x49xf32>
    %25 = arith.maximumf %23, %24 : vector<512x49xf32>
    %c0_10 = arith.constant 0 : index
    %c0_11 = arith.constant 0 : index
    %26 = vector.load %arg4[%c0_10, %c0_11] : memref<256x512xf32, #tpu.memory_space<vmem>>, vector<256x512xf32>
    %cst_12 = arith.constant dense<0.000000e+00> : vector<256x49xf32>
    %27 = tpu.matmul %26, %25, %cst_12 {dimension_numbers = #tpu.dot_dimension_numbers<[1], [0], [0], [1], [0, 0, 1, 1], [], []>} : vector<256x512xf32>, vector<512x49xf32>, vector<256x49xf32> -> vector<256x49xf32>
    %cst_13 = arith.constant dense<0.000000e+00> : vector<256xf32>
    %28 = vector.multi_reduction <add>, %27, %cst_13 [1] : vector<256x49xf32> to vector<256xf32>
    %29 = vector.shape_cast %28 : vector<256xf32> to vector<256x1xf32>
    %cst_14 = arith.constant 0.0204081628 : f32
    %30 = vector.broadcast %cst_14 : f32 to vector<256x1xf32>
    %31 = arith.mulf %29, %30 : vector<256x1xf32>
    %32 = arith.mulf %27, %27 : vector<256x49xf32>
    %cst_15 = arith.constant dense<0.000000e+00> : vector<256xf32>
    %33 = vector.multi_reduction <add>, %32, %cst_15 [1] : vector<256x49xf32> to vector<256xf32>
    %34 = vector.shape_cast %33 : vector<256xf32> to vector<256x1xf32>
    %cst_16 = arith.constant 0.0204081628 : f32
    %35 = vector.broadcast %cst_16 : f32 to vector<256x1xf32>
    %36 = arith.mulf %34, %35 : vector<256x1xf32>
    %37 = arith.mulf %31, %31 : vector<256x1xf32>
    %38 = arith.subf %36, %37 : vector<256x1xf32>
    %c0_17 = arith.constant 0 : index
    %c0_18 = arith.constant 0 : index
    %39 = vector.load %arg5[%c0_17, %c0_18] : memref<256x1xf32, #tpu.memory_space<vmem>>, vector<256x1xf32>
    %cst_19 = arith.constant 9.99999974E-6 : f32
    %40 = vector.broadcast %cst_19 : f32 to vector<256x1xf32>
    %41 = arith.addf %38, %40 : vector<256x1xf32>
    %42 = math.rsqrt %41 : vector<256x1xf32>
    %43 = arith.mulf %39, %42 : vector<256x1xf32>
    %c0_20 = arith.constant 0 : index
    %c0_21 = arith.constant 0 : index
    %44 = vector.load %arg6[%c0_20, %c0_21] : memref<256x1xf32, #tpu.memory_space<vmem>>, vector<256x1xf32>
    %45 = arith.mulf %31, %43 : vector<256x1xf32>
    %46 = arith.subf %44, %45 : vector<256x1xf32>
    %47 = vector.broadcast %43 : vector<256x1xf32> to vector<256x49xf32>
    %48 = arith.mulf %27, %47 : vector<256x49xf32>
    %49 = vector.broadcast %46 : vector<256x1xf32> to vector<256x49xf32>
    %50 = arith.addf %48, %49 : vector<256x49xf32>
    %c0_22 = arith.constant 0 : index
    %c0_23 = arith.constant 0 : index
    %51 = vector.load %arg7[%c0_22, %c0_23] : memref<256x49xf32, #tpu.memory_space<vmem>>, vector<256x49xf32>
    tpu.vector_store %arg7[%c0_22, %c0_23], %50 {strides = array<i32>} : memref<256x49xf32, #tpu.memory_space<vmem>>, vector<256x49xf32>,
    return
  }
  func.func @transform_0(%arg0: i32) -> (i32, i32) {
    %c0_i32 = arith.constant 0 : i32
    %c0_i32_0 = arith.constant 0 : i32
    %c0_i32_1 = arith.constant 0 : i32
    return %c0_i32, %c0_i32_0 : i32, i32
  }
  func.func @transform_1(%arg0: i32) -> (i32, i32) {
    %c0_i32 = arith.constant 0 : i32
    %c0_i32_0 = arith.constant 0 : i32
    %c0_i32_1 = arith.constant 0 : i32
    return %c0_i32, %c0_i32_0 : i32, i32
  }
  func.func @transform_2(%arg0: i32) -> (i32, i32) {
    %c0_i32 = arith.constant 0 : i32
    %c0_i32_0 = arith.constant 0 : i32
    %c0_i32_1 = arith.constant 0 : i32
    return %c0_i32, %c0_i32_0 : i32, i32
  }
  func.func @transform_3(%arg0: i32) -> (i32, i32) {
    %c0_i32 = arith.constant 0 : i32
    %c0_i32_0 = arith.constant 0 : i32
    return %arg0, %c0_i32 : i32, i32
  }
  func.func @transform_4(%arg0: i32) -> (i32, i32) {
    %c0_i32 = arith.constant 0 : i32
    %c0_i32_0 = arith.constant 0 : i32
    return %arg0, %c0_i32 : i32, i32
  }
  func.func @transform_5(%arg0: i32) -> (i32, i32) {
    %c0_i32 = arith.constant 0 : i32
    %c0_i32_0 = arith.constant 0 : i32
    return %arg0, %c0_i32 : i32, i32
  }
  func.func @transform_6(%arg0: i32) -> (i32, i32) {
    %c0_i32 = arith.constant 0 : i32
    %c0_i32_0 = arith.constant 0 : i32
    return %arg0, %c0_i32 : i32, i32
  }
}

</mosaic_0001>

<llo_original>
// kernel: tpu_custom_call.1
$region0: #{tpu_custom_call.1}
  #allocation0 [shape = 'u32[]', space=smem, size = 0x4, offset = 0x4, fixed_abs, tag = 'smem constant byte address 0x4 - core index']
  #allocation1 [shape = 'u32[144,128]{1,0:T(1,128)}', space=vmem, size = 0x12000, scoped, tag = 'internal scratch']
  %s0 = inlined_call_operand.vmem [shape: f32[512,49], index: 0, kind: input, shape index: {}]
  %s1 = inlined_call_operand.vmem [shape: f32[512,1], index: 1, kind: input, shape index: {}]
  %s2 = inlined_call_operand.vmem [shape: f32[512,1], index: 2, kind: input, shape index: {}]
  %s3 = inlined_call_operand.hbm [shape: f32[2048,512], index: 3, kind: input, shape index: {}]
  %s4 = inlined_call_operand.vmem [shape: f32[2048,1], index: 4, kind: input, shape index: {}]
  %s5 = inlined_call_operand.vmem [shape: f32[2048,1], index: 5, kind: input, shape index: {}]
  %s6 = inlined_call_operand.vmem [shape: f32[2048,49], index: 6, kind: output, shape index: {}]
  %s7 = sld [smem:[#allocation0]]
  $region61: #{tpu_custom_call.1} parent=0
    _
  %s9 = ssub.s32 1, %s7
  %s10 = scalar_select 0, %s9, %s7
  $region1: #{tpu_custom_call.1} parent=0
    #allocation2 [shape = 'u8[1048576]{0}', space=vmem, size = 0x100000, scoped, tag = 'input window, operand 3']
    #allocation3 [shape = 's32[2]{0}', space=sflag, size = 0x8, scoped, tag = 'scoped memory for tpu_custom_call.1']
    %11 = vsyncpa [#allocation3], 0
    %s12 = scalar_lea.sflag [#allocation3], 1
    %13 = vsyncpa %s12, 0
    loop: start=0, step=1, limit=10
    $region2: #{tpu_custom_call.1} parent=1 // loop_pre_header
      _
    $region3: #{tpu_custom_call.1} parent=1 // loop_header
      %s15 = sphi 0, %s19
      %p16 = scmp.ge.s32.totalorder %s15, 10
      %s23 = sphi 0, %s23
      %s25 = sphi 0, %s23
      %s26 = sphi 0, %s25
      %s40 = sphi 0, %s26
      %s44 = sphi 0, %s44
      %s46 = sphi 0, %s44
      %s47 = sphi 0, %s46
      %s61 = sphi 0, %s47
      %s65 = sphi 0, %s65
      %s67 = sphi 0, %s65
      %s68 = sphi 0, %s67
      %s82 = sphi 0, %s68
      %s88 = sphi 0, %s90
      %s91 = sphi 0, %s88
      %s92 = sphi 0, %s91
      %s108 = sphi 0, %s92
      %s114 = sphi 0, %s116
      %s117 = sphi 0, %s114
      %s118 = sphi 0, %s117
      %s134 = sphi 0, %s118
      %s140 = sphi 0, %s142
      %s143 = sphi 0, %s140
      %s144 = sphi 0, %s143
      %s160 = sphi 0, %s144
      %s166 = sphi 0, %s168
      %s169 = sphi 0, %s166
      %s170 = sphi 0, %s169
      %s186 = sphi 0, %s170
    $region4: #{tpu_custom_call.1} parent=1 // loop_header_branch
      %18 = sbr.rel (%p16) target = $region8
    $region5: #{tpu_custom_call.1} parent=1 // loop_body
      %s20 = ssub.s32 %s15, 1
      %s21 = ssub.s32 %s15, 2
      %s22 = sadd.s32 %s15, 1
      %s24 = sadd.s32 %s23, 1
      %p27 = scmp.eq.s32.totalorder %s15, 7
      %p28 = scmp.ne.s32.totalorder %s23, %s25
      %p29 = scmp.eq.s32.totalorder %s15, 0
      %p30 = por %p28, %p29
      %p31 = scmp.ne.s32.totalorder %s23, %s25
      %p32 = scmp.eq.s32.totalorder %s20, 7
      %p33 = por %p31, %p32
      %p34 = scmp.ne.s32.totalorder %s25, %s26
      %p35 = scmp.eq.s32.totalorder %s20, 0
      %p36 = por %p34, %p35
      %p37 = scmp.ne.s32.totalorder %s25, %s26
      %p38 = scmp.eq.s32.totalorder %s21, 7
      %p39 = por %p37, %p38
      %p41 = scmp.ne.s32.totalorder %s26, %s40
      %p42 = scmp.eq.s32.totalorder %s21, 0
      %p43 = por %p41, %p42
      %s45 = sadd.s32 %s44, 1
      %p48 = scmp.eq.s32.totalorder %s15, 7
      %p49 = scmp.ne.s32.totalorder %s44, %s46
      %p50 = scmp.eq.s32.totalorder %s15, 0
      %p51 = por %p49, %p50
      %p52 = scmp.ne.s32.totalorder %s44, %s46
      %p53 = scmp.eq.s32.totalorder %s20, 7
      %p54 = por %p52, %p53
      %p55 = scmp.ne.s32.totalorder %s46, %s47
      %p56 = scmp.eq.s32.totalorder %s20, 0
      %p57 = por %p55, %p56
      %p58 = scmp.ne.s32.totalorder %s46, %s47
      %p59 = scmp.eq.s32.totalorder %s21, 7
      %p60 = por %p58, %p59
      %p62 = scmp.ne.s32.totalorder %s47, %s61
      %p63 = scmp.eq.s32.totalorder %s21, 0
      %p64 = por %p62, %p63
      %s66 = sadd.s32 %s65, 1
      %p69 = scmp.eq.s32.totalorder %s15, 7
      %p70 = scmp.ne.s32.totalorder %s65, %s67
      %p71 = scmp.eq.s32.totalorder %s15, 0
      %p72 = por %p70, %p71
      %p73 = scmp.ne.s32.totalorder %s65, %s67
      %p74 = scmp.eq.s32.totalorder %s20, 7
      %p75 = por %p73, %p74
      %p76 = scmp.ne.s32.totalorder %s67, %s68
      %p77 = scmp.eq.s32.totalorder %s20, 0
      %p78 = por %p76, %p77
      %p79 = scmp.ne.s32.totalorder %s67, %s68
      %p80 = scmp.eq.s32.totalorder %s21, 7
      %p81 = por %p79, %p80
      %p83 = scmp.ne.s32.totalorder %s68, %s82
      %p84 = scmp.eq.s32.totalorder %s21, 0
      %p85 = por %p83, %p84
      %s86 = ssub.s32 %s15, %s22
      %p87 = scmp.eq.s32.totalorder %s86, 0
      %s89 = sadd.s32 %s88, 1
      %s90 = scalar_select %p87, %s88, %s89
      %p93 = pneg %p87
      %p94 = scmp.eq.s32.totalorder %s15, 7
      %p95 = por %p93, %p94
      %p96 = scmp.ne.s32.totalorder %s88, %s91
      %p97 = scmp.eq.s32.totalorder %s15, 0
      %p98 = por %p96, %p97
      %p99 = scmp.ne.s32.totalorder %s88, %s91
      %p100 = scmp.eq.s32.totalorder %s20, 7
      %p101 = por %p99, %p100
      %p102 = scmp.ne.s32.totalorder %s91, %s92
      %p103 = scmp.eq.s32.totalorder %s20, 0
      %p104 = por %p102, %p103
      %p105 = scmp.ne.s32.totalorder %s91, %s92
      %p106 = scmp.eq.s32.totalorder %s21, 7
      %p107 = por %p105, %p106
      %p109 = scmp.ne.s32.totalorder %s92, %s108
      %p110 = scmp.eq.s32.totalorder %s21, 0
      %p111 = por %p109, %p110
      %s112 = ssub.s32 %s15, %s22
      %p113 = scmp.eq.s32.totalorder %s112, 0
      %s115 = sadd.s32 %s114, 1
      %s116 = scalar_select %p113, %s114, %s115
      %p119 = pneg %p113
      %p120 = scmp.eq.s32.totalorder %s15, 7
      %p121 = por %p119, %p120
      %p122 = scmp.ne.s32.totalorder %s114, %s117
      %p123 = scmp.eq.s32.totalorder %s15, 0
      %p124 = por %p122, %p123
      %p125 = scmp.ne.s32.totalorder %s114, %s117
      %p126 = scmp.eq.s32.totalorder %s20, 7
      %p127 = por %p125, %p126
      %p128 = scmp.ne.s32.totalorder %s117, %s118
      %p129 = scmp.eq.s32.totalorder %s20, 0
      %p130 = por %p128, %p129
      %p131 = scmp.ne.s32.totalorder %s117, %s118
      %p132 = scmp.eq.s32.totalorder %s21, 7
      %p133 = por %p131, %p132
      %p135 = scmp.ne.s32.totalorder %s118, %s134
      %p136 = scmp.eq.s32.totalorder %s21, 0
      %p137 = por %p135, %p136
      %s138 = ssub.s32 %s15, %s22
      %p139 = scmp.eq.s32.totalorder %s138, 0
      %s141 = sadd.s32 %s140, 1
      %s142 = scalar_select %p139, %s140, %s141
      %p145 = pneg %p139
      %p146 = scmp.eq.s32.totalorder %s15, 7
      %p147 = por %p145, %p146
      %p148 = scmp.ne.s32.totalorder %s140, %s143
      %p149 = scmp.eq.s32.totalorder %s15, 0
      %p150 = por %p148, %p149
      %p151 = scmp.ne.s32.totalorder %s140, %s143
      %p152 = scmp.eq.s32.totalorder %s20, 7
      %p153 = por %p151, %p152
      %p154 = scmp.ne.s32.totalorder %s143, %s144
      %p155 = scmp.eq.s32.totalorder %s20, 0
      %p156 = por %p154, %p155
      %p157 = scmp.ne.s32.totalorder %s143, %s144
      %p158 = scmp.eq.s32.totalorder %s21, 7
      %p159 = por %p157, %p158
      %p161 = scmp.ne.s32.totalorder %s144, %s160
      %p162 = scmp.eq.s32.totalorder %s21, 0
      %p163 = por %p161, %p162
      %s164 = ssub.s32 %s15, %s22
      %p165 = scmp.eq.s32.totalorder %s164, 0
      %s167 = sadd.s32 %s166, 1
      %s168 = scalar_select %p165, %s166, %s167
      %p171 = pneg %p165
      %p172 = scmp.eq.s32.totalorder %s15, 7
      %p173 = por %p171, %p172
      %p174 = scmp.ne.s32.totalorder %s166, %s169
      %p175 = scmp.eq.s32.totalorder %s15, 0
      %p176 = por %p174, %p175
      %p177 = scmp.ne.s32.totalorder %s166, %s169
      %p178 = scmp.eq.s32.totalorder %s20, 7
      %p179 = por %p177, %p178
      %p180 = scmp.ne.s32.totalorder %s169, %s170
      %p181 = scmp.eq.s32.totalorder %s20, 0
      %p182 = por %p180, %p181
      %p183 = scmp.ne.s32.totalorder %s169, %s170
      %p184 = scmp.eq.s32.totalorder %s21, 7
      %p185 = por %p183, %p184
      %p187 = scmp.ne.s32.totalorder %s170, %s186
      %p188 = scmp.eq.s32.totalorder %s21, 0
      %p189 = por %p187, %p188
      %p190 = scmp.le.s32.totalorder 1, %s15
      %p191 = scmp.lt.s32.totalorder %s15, 9
      %p192 = pnand %p190, %p191
      %p193 = pneg %p192
      // Predicated region
      $region9: #{tpu_custom_call.1} parent=5 // pred_check
        _
      $region10: #{tpu_custom_call.1} parent=5 // pred_check_branch
        %195 = sbr.rel (%p192) target = $region12
      $region11: #{tpu_custom_call.1} parent=5 // pred_region
        %s196 = ssub.s32 %s15, 1
        // Predicated region
        $region13: #{tpu_custom_call.1} parent=11 // pred_check
          %p197 = pneg %p36
        $region14: #{tpu_custom_call.1} parent=11 // pred_check_branch
          %199 = sbr.rel (%p197) target = $region16
        $region15: #{tpu_custom_call.1} parent=11 // pred_region
          _
        $region16: #{tpu_custom_call.1} parent=11 // pred_fallthru
          _
        // Predicated region
        $region17: #{tpu_custom_call.1} parent=11 // pred_check
          %p200 = pneg %p57
        $region18: #{tpu_custom_call.1} parent=11 // pred_check_branch
          %202 = sbr.rel (%p200) target = $region20
        $region19: #{tpu_custom_call.1} parent=11 // pred_region
          _
        $region20: #{tpu_custom_call.1} parent=11 // pred_fallthru
          _
        // Predicated region
        $region21: #{tpu_custom_call.1} parent=11 // pred_check
          %p203 = pneg %p78
        $region22: #{tpu_custom_call.1} parent=11 // pred_check_branch
          %205 = sbr.rel (%p203) target = $region24
        $region23: #{tpu_custom_call.1} parent=11 // pred_region
          _
        $region24: #{tpu_custom_call.1} parent=11 // pred_fallthru
          _
      $region12: #{tpu_custom_call.1} parent=5 // pred_fallthru
        _
      %p206 = scmp.lt.s32.totalorder %s15, 8
      // Predicated region
      $region25: #{tpu_custom_call.1} parent=5 // pred_check
        %p207 = pneg %p206
      $region26: #{tpu_custom_call.1} parent=5 // pred_check_branch
        %209 = sbr.rel (%p207) target = $region28
      $region27: #{tpu_custom_call.1} parent=5 // pred_region
        // Predicated region
        $region29: #{tpu_custom_call.1} parent=27 // pred_check
          %p210 = pneg %p98
        $region30: #{tpu_custom_call.1} parent=27 // pred_check_branch
          %212 = sbr.rel (%p210) target = $region32
        $region31: #{tpu_custom_call.1} parent=27 // pred_region
          %s213 = sand.u32 %s88, 1
          %s214 = scalar_lea.sflag [#allocation3], %s213
          %s215 = sand.u32 %s88, 1
          %s216 = smul.addr %s215, 1024
          %s217 = scalar_lea.vmem [#allocation2], %s216
          %s218 = smul.u32 32, %s15
          %s220 = ssub.s32 16384, 16384
          %221 = vsyncadd %s214, %s220
          %s222 = smul.addr %s218, 4
          %s223 = smul.addr %s222, 128
          %s224 = scalar_lea.hbm %s3, %s223
          %s225 = sshll.u32 %s217, 4
          %s226 = int_to_ptr.vmem [resolvable:$true] %s225
          %231 = dma.hbm_to_vmem [thread:$0]  %s224, 16384, %s226, %s214, 512, 512, 32
        $region32: #{tpu_custom_call.1} parent=27 // pred_fallthru
          _
        // Predicated region
        $region33: #{tpu_custom_call.1} parent=27 // pred_check
          %p232 = pneg %p124
        $region34: #{tpu_custom_call.1} parent=27 // pred_check_branch
          %234 = sbr.rel (%p232) target = $region36
        $region35: #{tpu_custom_call.1} parent=27 // pred_region
          %s235 = smul.u32 32, %s15
          %p236 = scmp.lt.s32.totalorder %s235, 255
          %s237 = scalar_select %p236, %s235, 255
          %s238 = smul.addr %s237, 8
          %s239 = scalar_lea.vmem %s4, %s238
          %s240 = smul.u32 32, %s15
        $region36: #{tpu_custom_call.1} parent=27 // pred_fallthru
          _
        // Predicated region
        $region37: #{tpu_custom_call.1} parent=27 // pred_check
          %p241 = pneg %p150
        $region38: #{tpu_custom_call.1} parent=27 // pred_check_branch
          %243 = sbr.rel (%p241) target = $region40
        $region39: #{tpu_custom_call.1} parent=27 // pred_region
          %s244 = smul.u32 32, %s15
          %p245 = scmp.lt.s32.totalorder %s244, 255
          %s246 = scalar_select %p245, %s244, 255
          %s247 = smul.addr %s246, 8
          %s248 = scalar_lea.vmem %s5, %s247
          %s249 = smul.u32 32, %s15
        $region40: #{tpu_custom_call.1} parent=27 // pred_fallthru
          _
      $region28: #{tpu_custom_call.1} parent=5 // pred_fallthru
        _
      %p250 = scmp.le.s32.totalorder 1, %s15
      %p251 = scmp.lt.s32.totalorder %s15, 9
      %p252 = pnand %p250, %p251
      %p253 = pneg %p252
      // Predicated region
      $region41: #{tpu_custom_call.1} parent=5 // pred_check
        _
      $region42: #{tpu_custom_call.1} parent=5 // pred_check_branch
        %255 = sbr.rel (%p252) target = $region44
      $region43: #{tpu_custom_call.1} parent=5 // pred_region
        %s256 = ssub.s32 %s15, 1
        %s257 = sand.u32 %s91, 1
        %s258 = scalar_lea.sflag [#allocation3], %s257
        %s259 = sand.u32 %s91, 1
        %s260 = smul.addr %s259, 1024
        %s261 = scalar_lea.vmem [#allocation2], %s260
        // Predicated region
        $region45: #{tpu_custom_call.1} parent=43 // pred_check
          %p262 = pneg %p104
        $region46: #{tpu_custom_call.1} parent=43 // pred_check_branch
          %264 = sbr.rel (%p262) target = $region48
        $region47: #{tpu_custom_call.1} parent=43 // pred_region
          %265 = dma.done %s258, 16384
        $region48: #{tpu_custom_call.1} parent=43 // pred_fallthru
          _
        %p266 = pneg %p36
        %p267 = pneg %p33
        %p268 = pneg %p57
        %p269 = pneg %p54
        %p270 = pneg %p78
        %p271 = pneg %p75
        %s272 = sand.u32 %s91, 1
        %s273 = scalar_lea.sflag [#allocation3], %s272
        %s274 = sand.u32 %s91, 1
        %s275 = smul.addr %s274, 1024
        %s276 = scalar_lea.vmem [#allocation2], %s275
        %p277 = pneg %p104
        %p278 = pneg %p101
        %s279 = smul.u32 32, %s20
        %p280 = scmp.lt.s32.totalorder %s279, 255
        %s281 = scalar_select %p280, %s279, 255
        %s282 = smul.addr %s281, 8
        %s283 = scalar_lea.vmem %s4, %s282
        %p284 = pneg %p130
        %p285 = pneg %p127
        %s286 = smul.u32 32, %s20
        %p287 = scmp.lt.s32.totalorder %s286, 255
        %s288 = scalar_select %p287, %s286, 255
        %s289 = smul.addr %s288, 8
        %s290 = scalar_lea.vmem %s5, %s289
        %p291 = pneg %p156
        %p292 = pneg %p153
        %p293 = pneg %p182
        %p294 = pneg %p179
        %s295 = smul.u32 32, %s20
        %p296 = scmp.lt.s32.totalorder %s295, 255
        %s297 = scalar_select %p296, %s295, 255
        %s298 = smul.addr %s297, 8
        %s299 = scalar_lea.vmem %s6, %s298
        %s300 = smul.u32 32, %s20
        %s301 = smul.u32 32, %s20
        %p302 = scmp.lt.s32.totalorder %s301, 255
        %s303 = scalar_select %p302, %s301, 255
        %s304 = smul.addr %s303, 8
        %s305 = scalar_lea.vmem %s4, %s304
        %s306 = smul.u32 32, %s20
        %s307 = smul.u32 32, %s20
        %p308 = scmp.lt.s32.totalorder %s307, 255
        %s309 = scalar_select %p308, %s307, 255
        %s310 = smul.addr %s309, 8
        %s311 = scalar_lea.vmem %s5, %s310
        %s312 = smul.u32 32, %s20
        %s313 = smul.u32 32, %s20
        %p314 = scmp.lt.s32.totalorder %s313, 255
        %s315 = scalar_select %p314, %s313, 255
        %s316 = smul.addr %s315, 8
        %s317 = scalar_lea.vmem %s6, %s316
        %s318 = smul.u32 32, %s20
        %v319 = vld [vmem:[%s0] sm:$0xff]
        %v320 = vld [vmem:[%s0 + $0x8] sm:$0xff]
        %v321 = vld [vmem:[%s0 + $0x10] sm:$0xff]
        %v322 = vld [vmem:[%s0 + $0x18] sm:$0xff]
        %v323 = vld [vmem:[%s0 + $0x20] sm:$0xff]
        %v324 = vld [vmem:[%s0 + $0x28] sm:$0xff]
        %v325 = vld [vmem:[%s0 + $0x30] sm:$0xff]
        %v326 = vld [vmem:[%s0 + $0x38] sm:$0xff]
        %v327 = vld [vmem:[%s0 + $0x40] sm:$0xff]
        %v328 = vld [vmem:[%s0 + $0x48] sm:$0xff]
        %v329 = vld [vmem:[%s0 + $0x50] sm:$0xff]
        %v330 = vld [vmem:[%s0 + $0x58] sm:$0xff]
        %v331 = vld [vmem:[%s0 + $0x60] sm:$0xff]
        %v332 = vld [vmem:[%s0 + $0x68] sm:$0xff]
        %v333 = vld [vmem:[%s0 + $0x70] sm:$0xff]
        %v334 = vld [vmem:[%s0 + $0x78] sm:$0xff]
        %v335 = vld [vmem:[%s0 + $0x80] sm:$0xff]
        %v336 = vld [vmem:[%s0 + $0x88] sm:$0xff]
        %v337 = vld [vmem:[%s0 + $0x90] sm:$0xff]
        %v338 = vld [vmem:[%s0 + $0x98] sm:$0xff]
        %v339 = vld [vmem:[%s0 + $0xa0] sm:$0xff]
        %v340 = vld [vmem:[%s0 + $0xa8] sm:$0xff]
        %v341 = vld [vmem:[%s0 + $0xb0] sm:$0xff]
        %v342 = vld [vmem:[%s0 + $0xb8] sm:$0xff]
        %v343 = vld [vmem:[%s0 + $0xc0] sm:$0xff]
        %v344 = vld [vmem:[%s0 + $0xc8] sm:$0xff]
        %v345 = vld [vmem:[%s0 + $0xd0] sm:$0xff]
        %v346 = vld [vmem:[%s0 + $0xd8] sm:$0xff]
        %v347 = vld [vmem:[%s0 + $0xe0] sm:$0xff]
        %v348 = vld [vmem:[%s0 + $0xe8] sm:$0xff]
        %v349 = vld [vmem:[%s0 + $0xf0] sm:$0xff]
        %v350 = vld [vmem:[%s0 + $0xf8] sm:$0xff]
        %v351 = vld [vmem:[%s0 + $0x100] sm:$0xff]
        %v352 = vld [vmem:[%s0 + $0x108] sm:$0xff]
        %v353 = vld [vmem:[%s0 + $0x110] sm:$0xff]
        %v354 = vld [vmem:[%s0 + $0x118] sm:$0xff]
        %v355 = vld [vmem:[%s0 + $0x120] sm:$0xff]
        %v356 = vld [vmem:[%s0 + $0x128] sm:$0xff]
        %v357 = vld [vmem:[%s0 + $0x130] sm:$0xff]
        %v358 = vld [vmem:[%s0 + $0x138] sm:$0xff]
        %v359 = vld [vmem:[%s0 + $0x140] sm:$0xff]
        %v360 = vld [vmem:[%s0 + $0x148] sm:$0xff]
        %v361 = vld [vmem:[%s0 + $0x150] sm:$0xff]
        %v362 = vld [vmem:[%s0 + $0x158] sm:$0xff]
        %v363 = vld [vmem:[%s0 + $0x160] sm:$0xff]
        %v364 = vld [vmem:[%s0 + $0x168] sm:$0xff]
        %v365 = vld [vmem:[%s0 + $0x170] sm:$0xff]
        %v366 = vld [vmem:[%s0 + $0x178] sm:$0xff]
        %v367 = vld [vmem:[%s0 + $0x180] sm:$0xff]
        %v368 = vld [vmem:[%s0 + $0x188] sm:$0xff]
        %v369 = vld [vmem:[%s0 + $0x190] sm:$0xff]
        %v370 = vld [vmem:[%s0 + $0x198] sm:$0xff]
        %v371 = vld [vmem:[%s0 + $0x1a0] sm:$0xff]
        %v372 = vld [vmem:[%s0 + $0x1a8] sm:$0xff]
        %v373 = vld [vmem:[%s0 + $0x1b0] sm:$0xff]
        %v374 = vld [vmem:[%s0 + $0x1b8] sm:$0xff]
        %v375 = vld [vmem:[%s0 + $0x1c0] sm:$0xff]
        %v376 = vld [vmem:[%s0 + $0x1c8] sm:$0xff]
        %v377 = vld [vmem:[%s0 + $0x1d0] sm:$0xff]
        %v378 = vld [vmem:[%s0 + $0x1d8] sm:$0xff]
        %v379 = vld [vmem:[%s0 + $0x1e0] sm:$0xff]
        %v380 = vld [vmem:[%s0 + $0x1e8] sm:$0xff]
        %v381 = vld [vmem:[%s0 + $0x1f0] sm:$0xff]
        %v382 = vld [vmem:[%s0 + $0x1f8] sm:$0xff]
        %vm383 = vcmask 400384
        %v384 = vsel %vm383, %v319, 0.0
        %385 = vadd.xlane.f32.xlu0 %v384
        %v386 = vpop.xlane.xlu0 %385
        %v387 = vsel %vm383, %v320, 0.0
        %388 = vadd.xlane.f32.xlu0 %v387
        %v389 = vpop.xlane.xlu0 %388
        %v390 = vsel %vm383, %v321, 0.0
        %391 = vadd.xlane.f32.xlu0 %v390
        %v392 = vpop.xlane.xlu0 %391
        %v393 = vsel %vm383, %v322, 0.0
        %394 = vadd.xlane.f32.xlu0 %v393
        %v395 = vpop.xlane.xlu0 %394
        %v396 = vsel %vm383, %v323, 0.0
        %397 = vadd.xlane.f32.xlu0 %v396
        %v398 = vpop.xlane.xlu0 %397
        %v399 = vsel %vm383, %v324, 0.0
        %400 = vadd.xlane.f32.xlu0 %v399
        %v401 = vpop.xlane.xlu0 %400
        %v402 = vsel %vm383, %v325, 0.0
        %403 = vadd.xlane.f32.xlu0 %v402
        %v404 = vpop.xlane.xlu0 %403
        %v405 = vsel %vm383, %v326, 0.0
        %406 = vadd.xlane.f32.xlu0 %v405
        %v407 = vpop.xlane.xlu0 %406
        %v408 = vsel %vm383, %v327, 0.0
        %409 = vadd.xlane.f32.xlu0 %v408
        %v410 = vpop.xlane.xlu0 %409
        %v411 = vsel %vm383, %v328, 0.0
        %412 = vadd.xlane.f32.xlu0 %v411
        %v413 = vpop.xlane.xlu0 %412
        %v414 = vsel %vm383, %v329, 0.0
        %415 = vadd.xlane.f32.xlu0 %v414
        %v416 = vpop.xlane.xlu0 %415
        %v417 = vsel %vm383, %v330, 0.0
        %418 = vadd.xlane.f32.xlu0 %v417
        %v419 = vpop.xlane.xlu0 %418
        %v420 = vsel %vm383, %v331, 0.0
        %421 = vadd.xlane.f32.xlu0 %v420
        %v422 = vpop.xlane.xlu0 %421
        %v423 = vsel %vm383, %v332, 0.0
        %424 = vadd.xlane.f32.xlu0 %v423
        %v425 = vpop.xlane.xlu0 %424
        %v426 = vsel %vm383, %v333, 0.0
        %427 = vadd.xlane.f32.xlu0 %v426
        %v428 = vpop.xlane.xlu0 %427
        %v429 = vsel %vm383, %v334, 0.0
        %430 = vadd.xlane.f32.xlu0 %v429
        %v431 = vpop.xlane.xlu0 %430
        %v432 = vsel %vm383, %v335, 0.0
        %433 = vadd.xlane.f32.xlu0 %v432
        %v434 = vpop.xlane.xlu0 %433
        %v435 = vsel %vm383, %v336, 0.0
        %436 = vadd.xlane.f32.xlu0 %v435
        %v437 = vpop.xlane.xlu0 %436
        %v438 = vsel %vm383, %v337, 0.0
        %439 = vadd.xlane.f32.xlu0 %v438
        %v440 = vpop.xlane.xlu0 %439
        %v441 = vsel %vm383, %v338, 0.0
        %442 = vadd.xlane.f32.xlu0 %v441
        %v443 = vpop.xlane.xlu0 %442
        %v444 = vsel %vm383, %v339, 0.0
        %445 = vadd.xlane.f32.xlu0 %v444
        %v446 = vpop.xlane.xlu0 %445
        %v447 = vsel %vm383, %v340, 0.0
        %448 = vadd.xlane.f32.xlu0 %v447
        %v449 = vpop.xlane.xlu0 %448
        %v450 = vsel %vm383, %v341, 0.0
        %451 = vadd.xlane.f32.xlu0 %v450
        %v452 = vpop.xlane.xlu0 %451
        %v453 = vsel %vm383, %v342, 0.0
        %454 = vadd.xlane.f32.xlu0 %v453
        %v455 = vpop.xlane.xlu0 %454
        %v456 = vsel %vm383, %v343, 0.0
        %457 = vadd.xlane.f32.xlu0 %v456
        %v458 = vpop.xlane.xlu0 %457
        %v459 = vsel %vm383, %v344, 0.0
        %460 = vadd.xlane.f32.xlu0 %v459
        %v461 = vpop.xlane.xlu0 %460
        %v462 = vsel %vm383, %v345, 0.0
        %463 = vadd.xlane.f32.xlu0 %v462
        %v464 = vpop.xlane.xlu0 %463
        %v465 = vsel %vm383, %v346, 0.0
        %466 = vadd.xlane.f32.xlu0 %v465
        %v467 = vpop.xlane.xlu0 %466
        %v468 = vsel %vm383, %v347, 0.0
        %469 = vadd.xlane.f32.xlu0 %v468
        %v470 = vpop.xlane.xlu0 %469
        %v471 = vsel %vm383, %v348, 0.0
        %472 = vadd.xlane.f32.xlu0 %v471
        %v473 = vpop.xlane.xlu0 %472
        %v474 = vsel %vm383, %v349, 0.0
        %475 = vadd.xlane.f32.xlu0 %v474
        %v476 = vpop.xlane.xlu0 %475
        %v477 = vsel %vm383, %v350, 0.0
        %478 = vadd.xlane.f32.xlu0 %v477
        %v479 = vpop.xlane.xlu0 %478
        %v480 = vsel %vm383, %v351, 0.0
        %481 = vadd.xlane.f32.xlu0 %v480
        %v482 = vpop.xlane.xlu0 %481
        %v483 = vsel %vm383, %v352, 0.0
        %484 = vadd.xlane.f32.xlu0 %v483
        %v485 = vpop.xlane.xlu0 %484
        %v486 = vsel %vm383, %v353, 0.0
        %487 = vadd.xlane.f32.xlu0 %v486
        %v488 = vpop.xlane.xlu0 %487
        %v489 = vsel %vm383, %v354, 0.0
        %490 = vadd.xlane.f32.xlu0 %v489
        %v491 = vpop.xlane.xlu0 %490
        %v492 = vsel %vm383, %v355, 0.0
        %493 = vadd.xlane.f32.xlu0 %v492
        %v494 = vpop.xlane.xlu0 %493
        %v495 = vsel %vm383, %v356, 0.0
        %496 = vadd.xlane.f32.xlu0 %v495
        %v497 = vpop.xlane.xlu0 %496
        %v498 = vsel %vm383, %v357, 0.0
        %499 = vadd.xlane.f32.xlu0 %v498
        %v500 = vpop.xlane.xlu0 %499
        %v501 = vsel %vm383, %v358, 0.0
        %502 = vadd.xlane.f32.xlu0 %v501
        %v503 = vpop.xlane.xlu0 %502
        %v504 = vsel %vm383, %v359, 0.0
        %505 = vadd.xlane.f32.xlu0 %v504
        %v506 = vpop.xlane.xlu0 %505
        %v507 = vsel %vm383, %v360, 0.0
        %508 = vadd.xlane.f32.xlu0 %v507
        %v509 = vpop.xlane.xlu0 %508
        %v510 = vsel %vm383, %v361, 0.0
        %511 = vadd.xlane.f32.xlu0 %v510
        %v512 = vpop.xlane.xlu0 %511
        %v513 = vsel %vm383, %v362, 0.0
        %514 = vadd.xlane.f32.xlu0 %v513
        %v515 = vpop.xlane.xlu0 %514
        %v516 = vsel %vm383, %v363, 0.0
        %517 = vadd.xlane.f32.xlu0 %v516
        %v518 = vpop.xlane.xlu0 %517
        %v519 = vsel %vm383, %v364, 0.0
        %520 = vadd.xlane.f32.xlu0 %v519
        %v521 = vpop.xlane.xlu0 %520
        %v522 = vsel %vm383, %v365, 0.0
        %523 = vadd.xlane.f32.xlu0 %v522
        %v524 = vpop.xlane.xlu0 %523
        %v525 = vsel %vm383, %v366, 0.0
        %526 = vadd.xlane.f32.xlu0 %v525
        %v527 = vpop.xlane.xlu0 %526
        %v528 = vsel %vm383, %v367, 0.0
        %529 = vadd.xlane.f32.xlu0 %v528
        %v530 = vpop.xlane.xlu0 %529
        %v531 = vsel %vm383, %v368, 0.0
        %532 = vadd.xlane.f32.xlu0 %v531
        %v533 = vpop.xlane.xlu0 %532
        %v534 = vsel %vm383, %v369, 0.0
        %535 = vadd.xlane.f32.xlu0 %v534
        %v536 = vpop.xlane.xlu0 %535
        %v537 = vsel %vm383, %v370, 0.0
        %538 = vadd.xlane.f32.xlu0 %v537
        %v539 = vpop.xlane.xlu0 %538
        %v540 = vsel %vm383, %v371, 0.0
        %541 = vadd.xlane.f32.xlu0 %v540
        %v542 = vpop.xlane.xlu0 %541
        %v543 = vsel %vm383, %v372, 0.0
        %544 = vadd.xlane.f32.xlu0 %v543
        %v545 = vpop.xlane.xlu0 %544
        %v546 = vsel %vm383, %v373, 0.0
        %547 = vadd.xlane.f32.xlu0 %v546
        %v548 = vpop.xlane.xlu0 %547
        %v549 = vsel %vm383, %v374, 0.0
        %550 = vadd.xlane.f32.xlu0 %v549
        %v551 = vpop.xlane.xlu0 %550
        %v552 = vsel %vm383, %v375, 0.0
        %553 = vadd.xlane.f32.xlu0 %v552
        %v554 = vpop.xlane.xlu0 %553
        %v555 = vsel %vm383, %v376, 0.0
        %556 = vadd.xlane.f32.xlu0 %v555
        %v557 = vpop.xlane.xlu0 %556
        %v558 = vsel %vm383, %v377, 0.0
        %559 = vadd.xlane.f32.xlu0 %v558
        %v560 = vpop.xlane.xlu0 %559
        %v561 = vsel %vm383, %v378, 0.0
        %562 = vadd.xlane.f32.xlu0 %v561
        %v563 = vpop.xlane.xlu0 %562
        %v564 = vsel %vm383, %v379, 0.0
        %565 = vadd.xlane.f32.xlu0 %v564
        %v566 = vpop.xlane.xlu0 %565
        %v567 = vsel %vm383, %v380, 0.0
        %568 = vadd.xlane.f32.xlu0 %v567
        %v569 = vpop.xlane.xlu0 %568
        %v570 = vsel %vm383, %v381, 0.0
        %571 = vadd.xlane.f32.xlu0 %v570
        %v572 = vpop.xlane.xlu0 %571
        %v573 = vsel %vm383, %v382, 0.0
        %574 = vadd.xlane.f32.xlu0 %v573
        %v575 = vpop.xlane.xlu0 %574
        %v576 = vmul.f32 %v386, 0.020408163
        %v577 = vmul.f32 %v389, 0.020408163
        %v578 = vmul.f32 %v392, 0.020408163
        %v579 = vmul.f32 %v395, 0.020408163
        %v580 = vmul.f32 %v398, 0.020408163
        %v581 = vmul.f32 %v401, 0.020408163
        %v582 = vmul.f32 %v404, 0.020408163
        %v583 = vmul.f32 %v407, 0.020408163
        %v584 = vmul.f32 %v410, 0.020408163
        %v585 = vmul.f32 %v413, 0.020408163
        %v586 = vmul.f32 %v416, 0.020408163
        %v587 = vmul.f32 %v419, 0.020408163
        %v588 = vmul.f32 %v422, 0.020408163
        %v589 = vmul.f32 %v425, 0.020408163
        %v590 = vmul.f32 %v428, 0.020408163
        %v591 = vmul.f32 %v431, 0.020408163
        %v592 = vmul.f32 %v434, 0.020408163
        %v593 = vmul.f32 %v437, 0.020408163
        %v594 = vmul.f32 %v440, 0.020408163
        %v595 = vmul.f32 %v443, 0.020408163
        %v596 = vmul.f32 %v446, 0.020408163
        %v597 = vmul.f32 %v449, 0.020408163
        %v598 = vmul.f32 %v452, 0.020408163
        %v599 = vmul.f32 %v455, 0.020408163
        %v600 = vmul.f32 %v458, 0.020408163
        %v601 = vmul.f32 %v461, 0.020408163
        %v602 = vmul.f32 %v464, 0.020408163
        %v603 = vmul.f32 %v467, 0.020408163
        %v604 = vmul.f32 %v470, 0.020408163
        %v605 = vmul.f32 %v473, 0.020408163
        %v606 = vmul.f32 %v476, 0.020408163
        %v607 = vmul.f32 %v479, 0.020408163
        %v608 = vmul.f32 %v482, 0.020408163
        %v609 = vmul.f32 %v485, 0.020408163
        %v610 = vmul.f32 %v488, 0.020408163
        %v611 = vmul.f32 %v491, 0.020408163
        %v612 = vmul.f32 %v494, 0.020408163
        %v613 = vmul.f32 %v497, 0.020408163
        %v614 = vmul.f32 %v500, 0.020408163
        %v615 = vmul.f32 %v503, 0.020408163
        %v616 = vmul.f32 %v506, 0.020408163
        %v617 = vmul.f32 %v509, 0.020408163
        %v618 = vmul.f32 %v512, 0.020408163
        %v619 = vmul.f32 %v515, 0.020408163
        %v620 = vmul.f32 %v518, 0.020408163
        %v621 = vmul.f32 %v521, 0.020408163
        %v622 = vmul.f32 %v524, 0.020408163
        %v623 = vmul.f32 %v527, 0.020408163
        %v624 = vmul.f32 %v530, 0.020408163
        %v625 = vmul.f32 %v533, 0.020408163
        %v626 = vmul.f32 %v536, 0.020408163
        %v627 = vmul.f32 %v539, 0.020408163
        %v628 = vmul.f32 %v542, 0.020408163
        %v629 = vmul.f32 %v545, 0.020408163
        %v630 = vmul.f32 %v548, 0.020408163
        %v631 = vmul.f32 %v551, 0.020408163
        %v632 = vmul.f32 %v554, 0.020408163
        %v633 = vmul.f32 %v557, 0.020408163
        %v634 = vmul.f32 %v560, 0.020408163
        %v635 = vmul.f32 %v563, 0.020408163
        %v636 = vmul.f32 %v566, 0.020408163
        %v637 = vmul.f32 %v569, 0.020408163
        %v638 = vmul.f32 %v572, 0.020408163
        %v639 = vmul.f32 %v575, 0.020408163
        %v640 = vmul.f32 %v319, %v319
        %v641 = vmul.f32 %v320, %v320
        %v642 = vmul.f32 %v321, %v321
        %v643 = vmul.f32 %v322, %v322
        %v644 = vmul.f32 %v323, %v323
        %v645 = vmul.f32 %v324, %v324
        %v646 = vmul.f32 %v325, %v325
        %v647 = vmul.f32 %v326, %v326
        %v648 = vmul.f32 %v327, %v327
        %v649 = vmul.f32 %v328, %v328
        %v650 = vmul.f32 %v329, %v329
        %v651 = vmul.f32 %v330, %v330
        %v652 = vmul.f32 %v331, %v331
        %v653 = vmul.f32 %v332, %v332
        %v654 = vmul.f32 %v333, %v333
        %v655 = vmul.f32 %v334, %v334
        %v656 = vmul.f32 %v335, %v335
        %v657 = vmul.f32 %v336, %v336
        %v658 = vmul.f32 %v337, %v337
        %v659 = vmul.f32 %v338, %v338
        %v660 = vmul.f32 %v339, %v339
        %v661 = vmul.f32 %v340, %v340
        %v662 = vmul.f32 %v341, %v341
        %v663 = vmul.f32 %v342, %v342
        %v664 = vmul.f32 %v343, %v343
        %v665 = vmul.f32 %v344, %v344
        %v666 = vmul.f32 %v345, %v345
        %v667 = vmul.f32 %v346, %v346
        %v668 = vmul.f32 %v347, %v347
        %v669 = vmul.f32 %v348, %v348
        %v670 = vmul.f32 %v349, %v349
        %v671 = vmul.f32 %v350, %v350
        %v672 = vmul.f32 %v351, %v351
        %v673 = vmul.f32 %v352, %v352
        %v674 = vmul.f32 %v353, %v353
        %v675 = vmul.f32 %v354, %v354
        %v676 = vmul.f32 %v355, %v355
        %v677 = vmul.f32 %v356, %v356
        %v678 = vmul.f32 %v357, %v357
        %v679 = vmul.f32 %v358, %v358
        %v680 = vmul.f32 %v359, %v359
        %v681 = vmul.f32 %v360, %v360
        %v682 = vmul.f32 %v361, %v361
        %v683 = vmul.f32 %v362, %v362
        %v684 = vmul.f32 %v363, %v363
        %v685 = vmul.f32 %v364, %v364
        %v686 = vmul.f32 %v365, %v365
        %v687 = vmul.f32 %v366, %v366
        %v688 = vmul.f32 %v367, %v367
        %v689 = vmul.f32 %v368, %v368
        %v690 = vmul.f32 %v369, %v369
        %v691 = vmul.f32 %v370, %v370
        %v692 = vmul.f32 %v371, %v371
        %v693 = vmul.f32 %v372, %v372
        %v694 = vmul.f32 %v373, %v373
        %v695 = vmul.f32 %v374, %v374
        %v696 = vmul.f32 %v375, %v375
        %v697 = vmul.f32 %v376, %v376
        %v698 = vmul.f32 %v377, %v377
        %v699 = vmul.f32 %v378, %v378
        %v700 = vmul.f32 %v379, %v379
        %v701 = vmul.f32 %v380, %v380
        %v702 = vmul.f32 %v381, %v381
        %v703 = vmul.f32 %v382, %v382
        %v704 = vsel %vm383, %v640, 0.0
        %705 = vadd.xlane.f32.xlu0 %v704
        %v706 = vpop.xlane.xlu0 %705
        %v707 = vsel %vm383, %v641, 0.0
        %708 = vadd.xlane.f32.xlu0 %v707
        %v709 = vpop.xlane.xlu0 %708
        %v710 = vsel %vm383, %v642, 0.0
        %711 = vadd.xlane.f32.xlu0 %v710
        %v712 = vpop.xlane.xlu0 %711
        %v713 = vsel %vm383, %v643, 0.0
        %714 = vadd.xlane.f32.xlu0 %v713
        %v715 = vpop.xlane.xlu0 %714
        %v716 = vsel %vm383, %v644, 0.0
        %717 = vadd.xlane.f32.xlu0 %v716
        %v718 = vpop.xlane.xlu0 %717
        %v719 = vsel %vm383, %v645, 0.0
        %720 = vadd.xlane.f32.xlu0 %v719
        %v721 = vpop.xlane.xlu0 %720
        %v722 = vsel %vm383, %v646, 0.0
        %723 = vadd.xlane.f32.xlu0 %v722
        %v724 = vpop.xlane.xlu0 %723
        %v725 = vsel %vm383, %v647, 0.0
        %726 = vadd.xlane.f32.xlu0 %v725
        %v727 = vpop.xlane.xlu0 %726
        %v728 = vsel %vm383, %v648, 0.0
        %729 = vadd.xlane.f32.xlu0 %v728
        %v730 = vpop.xlane.xlu0 %729
        %v731 = vsel %vm383, %v649, 0.0
        %732 = vadd.xlane.f32.xlu0 %v731
        %v733 = vpop.xlane.xlu0 %732
        %v734 = vsel %vm383, %v650, 0.0
        %735 = vadd.xlane.f32.xlu0 %v734
        %v736 = vpop.xlane.xlu0 %735
        %v737 = vsel %vm383, %v651, 0.0
        %738 = vadd.xlane.f32.xlu0 %v737
        %v739 = vpop.xlane.xlu0 %738
        %v740 = vsel %vm383, %v652, 0.0
        %741 = vadd.xlane.f32.xlu0 %v740
        %v742 = vpop.xlane.xlu0 %741
        %v743 = vsel %vm383, %v653, 0.0
        %744 = vadd.xlane.f32.xlu0 %v743
        %v745 = vpop.xlane.xlu0 %744
        %v746 = vsel %vm383, %v654, 0.0
        %747 = vadd.xlane.f32.xlu0 %v746
        %v748 = vpop.xlane.xlu0 %747
        %v749 = vsel %vm383, %v655, 0.0
        %750 = vadd.xlane.f32.xlu0 %v749
        %v751 = vpop.xlane.xlu0 %750
        %v752 = vsel %vm383, %v656, 0.0
        %753 = vadd.xlane.f32.xlu0 %v752
        %v754 = vpop.xlane.xlu0 %753
        %v755 = vsel %vm383, %v657, 0.0
        %756 = vadd.xlane.f32.xlu0 %v755
        %v757 = vpop.xlane.xlu0 %756
        %v758 = vsel %vm383, %v658, 0.0
        %759 = vadd.xlane.f32.xlu0 %v758
        %v760 = vpop.xlane.xlu0 %759
        %v761 = vsel %vm383, %v659, 0.0
        %762 = vadd.xlane.f32.xlu0 %v761
        %v763 = vpop.xlane.xlu0 %762
        %v764 = vsel %vm383, %v660, 0.0
        %765 = vadd.xlane.f32.xlu0 %v764
        %v766 = vpop.xlane.xlu0 %765
        %v767 = vsel %vm383, %v661, 0.0
        %768 = vadd.xlane.f32.xlu0 %v767
        %v769 = vpop.xlane.xlu0 %768
        %v770 = vsel %vm383, %v662, 0.0
        %771 = vadd.xlane.f32.xlu0 %v770
        %v772 = vpop.xlane.xlu0 %771
        %v773 = vsel %vm383, %v663, 0.0
        %774 = vadd.xlane.f32.xlu0 %v773
        %v775 = vpop.xlane.xlu0 %774
        %v776 = vsel %vm383, %v664, 0.0
        %777 = vadd.xlane.f32.xlu0 %v776
        %v778 = vpop.xlane.xlu0 %777
        %v779 = vsel %vm383, %v665, 0.0
        %780 = vadd.xlane.f32.xlu0 %v779
        %v781 = vpop.xlane.xlu0 %780
        %v782 = vsel %vm383, %v666, 0.0
        %783 = vadd.xlane.f32.xlu0 %v782
        %v784 = vpop.xlane.xlu0 %783
        %v785 = vsel %vm383, %v667, 0.0
        %786 = vadd.xlane.f32.xlu0 %v785
        %v787 = vpop.xlane.xlu0 %786
        %v788 = vsel %vm383, %v668, 0.0
        %789 = vadd.xlane.f32.xlu0 %v788
        %v790 = vpop.xlane.xlu0 %789
        %v791 = vsel %vm383, %v669, 0.0
        %792 = vadd.xlane.f32.xlu0 %v791
        %v793 = vpop.xlane.xlu0 %792
        %v794 = vsel %vm383, %v670, 0.0
        %795 = vadd.xlane.f32.xlu0 %v794
        %v796 = vpop.xlane.xlu0 %795
        %v797 = vsel %vm383, %v671, 0.0
        %798 = vadd.xlane.f32.xlu0 %v797
        %v799 = vpop.xlane.xlu0 %798
        %v800 = vsel %vm383, %v672, 0.0
        %801 = vadd.xlane.f32.xlu0 %v800
        %v802 = vpop.xlane.xlu0 %801
        %v803 = vsel %vm383, %v673, 0.0
        %804 = vadd.xlane.f32.xlu0 %v803
        %v805 = vpop.xlane.xlu0 %804
        %v806 = vsel %vm383, %v674, 0.0
        %807 = vadd.xlane.f32.xlu0 %v806
        %v808 = vpop.xlane.xlu0 %807
        %v809 = vsel %vm383, %v675, 0.0
        %810 = vadd.xlane.f32.xlu0 %v809
        %v811 = vpop.xlane.xlu0 %810
        %v812 = vsel %vm383, %v676, 0.0
        %813 = vadd.xlane.f32.xlu0 %v812
        %v814 = vpop.xlane.xlu0 %813
        %v815 = vsel %vm383, %v677, 0.0
        %816 = vadd.xlane.f32.xlu0 %v815
        %v817 = vpop.xlane.xlu0 %816
        %v818 = vsel %vm383, %v678, 0.0
        %819 = vadd.xlane.f32.xlu0 %v818
        %v820 = vpop.xlane.xlu0 %819
        %v821 = vsel %vm383, %v679, 0.0
        %822 = vadd.xlane.f32.xlu0 %v821
        %v823 = vpop.xlane.xlu0 %822
        %v824 = vsel %vm383, %v680, 0.0
        %825 = vadd.xlane.f32.xlu0 %v824
        %v826 = vpop.xlane.xlu0 %825
        %v827 = vsel %vm383, %v681, 0.0
        %828 = vadd.xlane.f32.xlu0 %v827
        %v829 = vpop.xlane.xlu0 %828
        %v830 = vsel %vm383, %v682, 0.0
        %831 = vadd.xlane.f32.xlu0 %v830
        %v832 = vpop.xlane.xlu0 %831
        %v833 = vsel %vm383, %v683, 0.0
        %834 = vadd.xlane.f32.xlu0 %v833
        %v835 = vpop.xlane.xlu0 %834
        %v836 = vsel %vm383, %v684, 0.0
        %837 = vadd.xlane.f32.xlu0 %v836
        %v838 = vpop.xlane.xlu0 %837
        %v839 = vsel %vm383, %v685, 0.0
        %840 = vadd.xlane.f32.xlu0 %v839
        %v841 = vpop.xlane.xlu0 %840
        %v842 = vsel %vm383, %v686, 0.0
        %843 = vadd.xlane.f32.xlu0 %v842
        %v844 = vpop.xlane.xlu0 %843
        %v845 = vsel %vm383, %v687, 0.0
        %846 = vadd.xlane.f32.xlu0 %v845
        %v847 = vpop.xlane.xlu0 %846
        %v848 = vsel %vm383, %v688, 0.0
        %849 = vadd.xlane.f32.xlu0 %v848
        %v850 = vpop.xlane.xlu0 %849
        %v851 = vsel %vm383, %v689, 0.0
        %852 = vadd.xlane.f32.xlu0 %v851
        %v853 = vpop.xlane.xlu0 %852
        %v854 = vsel %vm383, %v690, 0.0
        %855 = vadd.xlane.f32.xlu0 %v854
        %v856 = vpop.xlane.xlu0 %855
        %v857 = vsel %vm383, %v691, 0.0
        %858 = vadd.xlane.f32.xlu0 %v857
        %v859 = vpop.xlane.xlu0 %858
        %v860 = vsel %vm383, %v692, 0.0
        %861 = vadd.xlane.f32.xlu0 %v860
        %v862 = vpop.xlane.xlu0 %861
        %v863 = vsel %vm383, %v693, 0.0
        %864 = vadd.xlane.f32.xlu0 %v863
        %v865 = vpop.xlane.xlu0 %864
        %v866 = vsel %vm383, %v694, 0.0
        %867 = vadd.xlane.f32.xlu0 %v866
        %v868 = vpop.xlane.xlu0 %867
        %v869 = vsel %vm383, %v695, 0.0
        %870 = vadd.xlane.f32.xlu0 %v869
        %v871 = vpop.xlane.xlu0 %870
        %v872 = vsel %vm383, %v696, 0.0
        %873 = vadd.xlane.f32.xlu0 %v872
        %v874 = vpop.xlane.xlu0 %873
        %v875 = vsel %vm383, %v697, 0.0
        %876 = vadd.xlane.f32.xlu0 %v875
        %v877 = vpop.xlane.xlu0 %876
        %v878 = vsel %vm383, %v698, 0.0
        %879 = vadd.xlane.f32.xlu0 %v878
        %v880 = vpop.xlane.xlu0 %879
        %v881 = vsel %vm383, %v699, 0.0
        %882 = vadd.xlane.f32.xlu0 %v881
        %v883 = vpop.xlane.xlu0 %882
        %v884 = vsel %vm383, %v700, 0.0
        %885 = vadd.xlane.f32.xlu0 %v884
        %v886 = vpop.xlane.xlu0 %885
        %v887 = vsel %vm383, %v701, 0.0
        %888 = vadd.xlane.f32.xlu0 %v887
        %v889 = vpop.xlane.xlu0 %888
        %v890 = vsel %vm383, %v702, 0.0
        %891 = vadd.xlane.f32.xlu0 %v890
        %v892 = vpop.xlane.xlu0 %891
        %v893 = vsel %vm383, %v703, 0.0
        %894 = vadd.xlane.f32.xlu0 %v893
        %v895 = vpop.xlane.xlu0 %894
        %v896 = vmul.f32 %v706, 0.020408163
        %v897 = vmul.f32 %v709, 0.020408163
        %v898 = vmul.f32 %v712, 0.020408163
        %v899 = vmul.f32 %v715, 0.020408163
        %v900 = vmul.f32 %v718, 0.020408163
        %v901 = vmul.f32 %v721, 0.020408163
        %v902 = vmul.f32 %v724, 0.020408163
        %v903 = vmul.f32 %v727, 0.020408163
        %v904 = vmul.f32 %v730, 0.020408163
        %v905 = vmul.f32 %v733, 0.020408163
        %v906 = vmul.f32 %v736, 0.020408163
        %v907 = vmul.f32 %v739, 0.020408163
        %v908 = vmul.f32 %v742, 0.020408163
        %v909 = vmul.f32 %v745, 0.020408163
        %v910 = vmul.f32 %v748, 0.020408163
        %v911 = vmul.f32 %v751, 0.020408163
        %v912 = vmul.f32 %v754, 0.020408163
        %v913 = vmul.f32 %v757, 0.020408163
        %v914 = vmul.f32 %v760, 0.020408163
        %v915 = vmul.f32 %v763, 0.020408163
        %v916 = vmul.f32 %v766, 0.020408163
        %v917 = vmul.f32 %v769, 0.020408163
        %v918 = vmul.f32 %v772, 0.020408163
        %v919 = vmul.f32 %v775, 0.020408163
        %v920 = vmul.f32 %v778, 0.020408163
        %v921 = vmul.f32 %v781, 0.020408163
        %v922 = vmul.f32 %v784, 0.020408163
        %v923 = vmul.f32 %v787, 0.020408163
        %v924 = vmul.f32 %v790, 0.020408163
        %v925 = vmul.f32 %v793, 0.020408163
        %v926 = vmul.f32 %v796, 0.020408163
        %v927 = vmul.f32 %v799, 0.020408163
        %v928 = vmul.f32 %v802, 0.020408163
        %v929 = vmul.f32 %v805, 0.020408163
        %v930 = vmul.f32 %v808, 0.020408163
        %v931 = vmul.f32 %v811, 0.020408163
        %v932 = vmul.f32 %v814, 0.020408163
        %v933 = vmul.f32 %v817, 0.020408163
        %v934 = vmul.f32 %v820, 0.020408163
        %v935 = vmul.f32 %v823, 0.020408163
        %v936 = vmul.f32 %v826, 0.020408163
        %v937 = vmul.f32 %v829, 0.020408163
        %v938 = vmul.f32 %v832, 0.020408163
        %v939 = vmul.f32 %v835, 0.020408163
        %v940 = vmul.f32 %v838, 0.020408163
        %v941 = vmul.f32 %v841, 0.020408163
        %v942 = vmul.f32 %v844, 0.020408163
        %v943 = vmul.f32 %v847, 0.020408163
        %v944 = vmul.f32 %v850, 0.020408163
        %v945 = vmul.f32 %v853, 0.020408163
        %v946 = vmul.f32 %v856, 0.020408163
        %v947 = vmul.f32 %v859, 0.020408163
        %v948 = vmul.f32 %v862, 0.020408163
        %v949 = vmul.f32 %v865, 0.020408163
        %v950 = vmul.f32 %v868, 0.020408163
        %v951 = vmul.f32 %v871, 0.020408163
        %v952 = vmul.f32 %v874, 0.020408163
        %v953 = vmul.f32 %v877, 0.020408163
        %v954 = vmul.f32 %v880, 0.020408163
        %v955 = vmul.f32 %v883, 0.020408163
        %v956 = vmul.f32 %v886, 0.020408163
        %v957 = vmul.f32 %v889, 0.020408163
        %v958 = vmul.f32 %v892, 0.020408163
        %v959 = vmul.f32 %v895, 0.020408163
        %v960 = vmul.f32 %v576, %v576
        %v961 = vmul.f32 %v577, %v577
        %v962 = vmul.f32 %v578, %v578
        %v963 = vmul.f32 %v579, %v579
        %v964 = vmul.f32 %v580, %v580
        %v965 = vmul.f32 %v581, %v581
        %v966 = vmul.f32 %v582, %v582
        %v967 = vmul.f32 %v583, %v583
        %v968 = vmul.f32 %v584, %v584
        %v969 = vmul.f32 %v585, %v585
        %v970 = vmul.f32 %v586, %v586
        %v971 = vmul.f32 %v587, %v587
        %v972 = vmul.f32 %v588, %v588
        %v973 = vmul.f32 %v589, %v589
        %v974 = vmul.f32 %v590, %v590
        %v975 = vmul.f32 %v591, %v591
        %v976 = vmul.f32 %v592, %v592
        %v977 = vmul.f32 %v593, %v593
        %v978 = vmul.f32 %v594, %v594
        %v979 = vmul.f32 %v595, %v595
        %v980 = vmul.f32 %v596, %v596
        %v981 = vmul.f32 %v597, %v597
        %v982 = vmul.f32 %v598, %v598
        %v983 = vmul.f32 %v599, %v599
        %v984 = vmul.f32 %v600, %v600
        %v985 = vmul.f32 %v601, %v601
        %v986 = vmul.f32 %v602, %v602
        %v987 = vmul.f32 %v603, %v603
        %v988 = vmul.f32 %v604, %v604
        %v989 = vmul.f32 %v605, %v605
        %v990 = vmul.f32 %v606, %v606
        %v991 = vmul.f32 %v607, %v607
        %v992 = vmul.f32 %v608, %v608
        %v993 = vmul.f32 %v609, %v609
        %v994 = vmul.f32 %v610, %v610
        %v995 = vmul.f32 %v611, %v611
        %v996 = vmul.f32 %v612, %v612
        %v997 = vmul.f32 %v613, %v613
        %v998 = vmul.f32 %v614, %v614
        %v999 = vmul.f32 %v615, %v615
        %v1000 = vmul.f32 %v616, %v616
        %v1001 = vmul.f32 %v617, %v617
        %v1002 = vmul.f32 %v618, %v618
        %v1003 = vmul.f32 %v619, %v619
        %v1004 = vmul.f32 %v620, %v620
        %v1005 = vmul.f32 %v621, %v621
        %v1006 = vmul.f32 %v622, %v622
        %v1007 = vmul.f32 %v623, %v623
        %v1008 = vmul.f32 %v624, %v624
        %v1009 = vmul.f32 %v625, %v625
        %v1010 = vmul.f32 %v626, %v626
        %v1011 = vmul.f32 %v627, %v627
        %v1012 = vmul.f32 %v628, %v628
        %v1013 = vmul.f32 %v629, %v629
        %v1014 = vmul.f32 %v630, %v630
        %v1015 = vmul.f32 %v631, %v631
        %v1016 = vmul.f32 %v632, %v632
        %v1017 = vmul.f32 %v633, %v633
        %v1018 = vmul.f32 %v634, %v634
        %v1019 = vmul.f32 %v635, %v635
        %v1020 = vmul.f32 %v636, %v636
        %v1021 = vmul.f32 %v637, %v637
        %v1022 = vmul.f32 %v638, %v638
        %v1023 = vmul.f32 %v639, %v639
        %v1024 = vsub.f32 %v896, %v960
        %v1025 = vsub.f32 %v897, %v961
        %v1026 = vsub.f32 %v898, %v962
        %v1027 = vsub.f32 %v899, %v963
        %v1028 = vsub.f32 %v900, %v964
        %v1029 = vsub.f32 %v901, %v965
        %v1030 = vsub.f32 %v902, %v966
        %v1031 = vsub.f32 %v903, %v967
        %v1032 = vsub.f32 %v904, %v968
        %v1033 = vsub.f32 %v905, %v969
        %v1034 = vsub.f32 %v906, %v970
        %v1035 = vsub.f32 %v907, %v971
        %v1036 = vsub.f32 %v908, %v972
        %v1037 = vsub.f32 %v909, %v973
        %v1038 = vsub.f32 %v910, %v974
        %v1039 = vsub.f32 %v911, %v975
        %v1040 = vsub.f32 %v912, %v976
        %v1041 = vsub.f32 %v913, %v977
        %v1042 = vsub.f32 %v914, %v978
        %v1043 = vsub.f32 %v915, %v979
        %v1044 = vsub.f32 %v916, %v980
        %v1045 = vsub.f32 %v917, %v981
        %v1046 = vsub.f32 %v918, %v982
        %v1047 = vsub.f32 %v919, %v983
        %v1048 = vsub.f32 %v920, %v984
        %v1049 = vsub.f32 %v921, %v985
        %v1050 = vsub.f32 %v922, %v986
        %v1051 = vsub.f32 %v923, %v987
        %v1052 = vsub.f32 %v924, %v988
        %v1053 = vsub.f32 %v925, %v989
        %v1054 = vsub.f32 %v926, %v990
        %v1055 = vsub.f32 %v927, %v991
        %v1056 = vsub.f32 %v928, %v992
        %v1057 = vsub.f32 %v929, %v993
        %v1058 = vsub.f32 %v930, %v994
        %v1059 = vsub.f32 %v931, %v995
        %v1060 = vsub.f32 %v932, %v996
        %v1061 = vsub.f32 %v933, %v997
        %v1062 = vsub.f32 %v934, %v998
        %v1063 = vsub.f32 %v935, %v999
        %v1064 = vsub.f32 %v936, %v1000
        %v1065 = vsub.f32 %v937, %v1001
        %v1066 = vsub.f32 %v938, %v1002
        %v1067 = vsub.f32 %v939, %v1003
        %v1068 = vsub.f32 %v940, %v1004
        %v1069 = vsub.f32 %v941, %v1005
        %v1070 = vsub.f32 %v942, %v1006
        %v1071 = vsub.f32 %v943, %v1007
        %v1072 = vsub.f32 %v944, %v1008
        %v1073 = vsub.f32 %v945, %v1009
        %v1074 = vsub.f32 %v946, %v1010
        %v1075 = vsub.f32 %v947, %v1011
        %v1076 = vsub.f32 %v948, %v1012
        %v1077 = vsub.f32 %v949, %v1013
        %v1078 = vsub.f32 %v950, %v1014
        %v1079 = vsub.f32 %v951, %v1015
        %v1080 = vsub.f32 %v952, %v1016
        %v1081 = vsub.f32 %v953, %v1017
        %v1082 = vsub.f32 %v954, %v1018
        %v1083 = vsub.f32 %v955, %v1019
        %v1084 = vsub.f32 %v956, %v1020
        %v1085 = vsub.f32 %v957, %v1021
        %v1086 = vsub.f32 %v958, %v1022
        %v1087 = vsub.f32 %v959, %v1023
        %v1088 = vld [vmem:[%s1] sm:$0xff]
        %v1089 = vld [vmem:[%s1 + $0x8] sm:$0xff]
        %v1090 = vld [vmem:[%s1 + $0x10] sm:$0xff]
        %v1091 = vld [vmem:[%s1 + $0x18] sm:$0xff]
        %v1092 = vld [vmem:[%s1 + $0x20] sm:$0xff]
        %v1093 = vld [vmem:[%s1 + $0x28] sm:$0xff]
        %v1094 = vld [vmem:[%s1 + $0x30] sm:$0xff]
        %v1095 = vld [vmem:[%s1 + $0x38] sm:$0xff]
        %v1096 = vld [vmem:[%s1 + $0x40] sm:$0xff]
        %v1097 = vld [vmem:[%s1 + $0x48] sm:$0xff]
        %v1098 = vld [vmem:[%s1 + $0x50] sm:$0xff]
        %v1099 = vld [vmem:[%s1 + $0x58] sm:$0xff]
        %v1100 = vld [vmem:[%s1 + $0x60] sm:$0xff]
        %v1101 = vld [vmem:[%s1 + $0x68] sm:$0xff]
        %v1102 = vld [vmem:[%s1 + $0x70] sm:$0xff]
        %v1103 = vld [vmem:[%s1 + $0x78] sm:$0xff]
        %v1104 = vld [vmem:[%s1 + $0x80] sm:$0xff]
        %v1105 = vld [vmem:[%s1 + $0x88] sm:$0xff]
        %v1106 = vld [vmem:[%s1 + $0x90] sm:$0xff]
        %v1107 = vld [vmem:[%s1 + $0x98] sm:$0xff]
        %v1108 = vld [vmem:[%s1 + $0xa0] sm:$0xff]
        %v1109 = vld [vmem:[%s1 + $0xa8] sm:$0xff]
        %v1110 = vld [vmem:[%s1 + $0xb0] sm:$0xff]
        %v1111 = vld [vmem:[%s1 + $0xb8] sm:$0xff]
        %v1112 = vld [vmem:[%s1 + $0xc0] sm:$0xff]
        %v1113 = vld [vmem:[%s1 + $0xc8] sm:$0xff]
        %v1114 = vld [vmem:[%s1 + $0xd0] sm:$0xff]
        %v1115 = vld [vmem:[%s1 + $0xd8] sm:$0xff]
        %v1116 = vld [vmem:[%s1 + $0xe0] sm:$0xff]
        %v1117 = vld [vmem:[%s1 + $0xe8] sm:$0xff]
        %v1118 = vld [vmem:[%s1 + $0xf0] sm:$0xff]
        %v1119 = vld [vmem:[%s1 + $0xf8] sm:$0xff]
        %v1120 = vld [vmem:[%s1 + $0x100] sm:$0xff]
        %v1121 = vld [vmem:[%s1 + $0x108] sm:$0xff]
        %v1122 = vld [vmem:[%s1 + $0x110] sm:$0xff]
        %v1123 = vld [vmem:[%s1 + $0x118] sm:$0xff]
        %v1124 = vld [vmem:[%s1 + $0x120] sm:$0xff]
        %v1125 = vld [vmem:[%s1 + $0x128] sm:$0xff]
        %v1126 = vld [vmem:[%s1 + $0x130] sm:$0xff]
        %v1127 = vld [vmem:[%s1 + $0x138] sm:$0xff]
        %v1128 = vld [vmem:[%s1 + $0x140] sm:$0xff]
        %v1129 = vld [vmem:[%s1 + $0x148] sm:$0xff]
        %v1130 = vld [vmem:[%s1 + $0x150] sm:$0xff]
        %v1131 = vld [vmem:[%s1 + $0x158] sm:$0xff]
        %v1132 = vld [vmem:[%s1 + $0x160] sm:$0xff]
        %v1133 = vld [vmem:[%s1 + $0x168] sm:$0xff]
        %v1134 = vld [vmem:[%s1 + $0x170] sm:$0xff]
        %v1135 = vld [vmem:[%s1 + $0x178] sm:$0xff]
        %v1136 = vld [vmem:[%s1 + $0x180] sm:$0xff]
        %v1137 = vld [vmem:[%s1 + $0x188] sm:$0xff]
        %v1138 = vld [vmem:[%s1 + $0x190] sm:$0xff]
        %v1139 = vld [vmem:[%s1 + $0x198] sm:$0xff]
        %v1140 = vld [vmem:[%s1 + $0x1a0] sm:$0xff]
        %v1141 = vld [vmem:[%s1 + $0x1a8] sm:$0xff]
        %v1142 = vld [vmem:[%s1 + $0x1b0] sm:$0xff]
        %v1143 = vld [vmem:[%s1 + $0x1b8] sm:$0xff]
        %v1144 = vld [vmem:[%s1 + $0x1c0] sm:$0xff]
        %v1145 = vld [vmem:[%s1 + $0x1c8] sm:$0xff]
        %v1146 = vld [vmem:[%s1 + $0x1d0] sm:$0xff]
        %v1147 = vld [vmem:[%s1 + $0x1d8] sm:$0xff]
        %v1148 = vld [vmem:[%s1 + $0x1e0] sm:$0xff]
        %v1149 = vld [vmem:[%s1 + $0x1e8] sm:$0xff]
        %v1150 = vld [vmem:[%s1 + $0x1f0] sm:$0xff]
        %v1151 = vld [vmem:[%s1 + $0x1f8] sm:$0xff]
        %v1152 = vadd.f32 %v1024, 1e-05
        %v1153 = vadd.f32 %v1025, 1e-05
        %v1154 = vadd.f32 %v1026, 1e-05
        %v1155 = vadd.f32 %v1027, 1e-05
        %v1156 = vadd.f32 %v1028, 1e-05
        %v1157 = vadd.f32 %v1029, 1e-05
        %v1158 = vadd.f32 %v1030, 1e-05
        %v1159 = vadd.f32 %v1031, 1e-05
        %v1160 = vadd.f32 %v1032, 1e-05
        %v1161 = vadd.f32 %v1033, 1e-05
        %v1162 = vadd.f32 %v1034, 1e-05
        %v1163 = vadd.f32 %v1035, 1e-05
        %v1164 = vadd.f32 %v1036, 1e-05
        %v1165 = vadd.f32 %v1037, 1e-05
        %v1166 = vadd.f32 %v1038, 1e-05
        %v1167 = vadd.f32 %v1039, 1e-05
        %v1168 = vadd.f32 %v1040, 1e-05
        %v1169 = vadd.f32 %v1041, 1e-05
        %v1170 = vadd.f32 %v1042, 1e-05
        %v1171 = vadd.f32 %v1043, 1e-05
        %v1172 = vadd.f32 %v1044, 1e-05
        %v1173 = vadd.f32 %v1045, 1e-05
        %v1174 = vadd.f32 %v1046, 1e-05
        %v1175 = vadd.f32 %v1047, 1e-05
        %v1176 = vadd.f32 %v1048, 1e-05
        %v1177 = vadd.f32 %v1049, 1e-05
        %v1178 = vadd.f32 %v1050, 1e-05
        %v1179 = vadd.f32 %v1051, 1e-05
        %v1180 = vadd.f32 %v1052, 1e-05
        %v1181 = vadd.f32 %v1053, 1e-05
        %v1182 = vadd.f32 %v1054, 1e-05
        %v1183 = vadd.f32 %v1055, 1e-05
        %v1184 = vadd.f32 %v1056, 1e-05
        %v1185 = vadd.f32 %v1057, 1e-05
        %v1186 = vadd.f32 %v1058, 1e-05
        %v1187 = vadd.f32 %v1059, 1e-05
        %v1188 = vadd.f32 %v1060, 1e-05
        %v1189 = vadd.f32 %v1061, 1e-05
        %v1190 = vadd.f32 %v1062, 1e-05
        %v1191 = vadd.f32 %v1063, 1e-05
        %v1192 = vadd.f32 %v1064, 1e-05
        %v1193 = vadd.f32 %v1065, 1e-05
        %v1194 = vadd.f32 %v1066, 1e-05
        %v1195 = vadd.f32 %v1067, 1e-05
        %v1196 = vadd.f32 %v1068, 1e-05
        %v1197 = vadd.f32 %v1069, 1e-05
        %v1198 = vadd.f32 %v1070, 1e-05
        %v1199 = vadd.f32 %v1071, 1e-05
        %v1200 = vadd.f32 %v1072, 1e-05
        %v1201 = vadd.f32 %v1073, 1e-05
        %v1202 = vadd.f32 %v1074, 1e-05
        %v1203 = vadd.f32 %v1075, 1e-05
        %v1204 = vadd.f32 %v1076, 1e-05
        %v1205 = vadd.f32 %v1077, 1e-05
        %v1206 = vadd.f32 %v1078, 1e-05
        %v1207 = vadd.f32 %v1079, 1e-05
        %v1208 = vadd.f32 %v1080, 1e-05
        %v1209 = vadd.f32 %v1081, 1e-05
        %v1210 = vadd.f32 %v1082, 1e-05
        %v1211 = vadd.f32 %v1083, 1e-05
        %v1212 = vadd.f32 %v1084, 1e-05
        %v1213 = vadd.f32 %v1085, 1e-05
        %v1214 = vadd.f32 %v1086, 1e-05
        %v1215 = vadd.f32 %v1087, 1e-05
        %v1216 = vrsqrt.pop %v1152
        %v1217 = vrsqrt.pop %v1153
        %v1218 = vrsqrt.pop %v1154
        %v1219 = vrsqrt.pop %v1155
        %v1220 = vrsqrt.pop %v1156
        %v1221 = vrsqrt.pop %v1157
        %v1222 = vrsqrt.pop %v1158
        %v1223 = vrsqrt.pop %v1159
        %v1224 = vrsqrt.pop %v1160
        %v1225 = vrsqrt.pop %v1161
        %v1226 = vrsqrt.pop %v1162
        %v1227 = vrsqrt.pop %v1163
        %v1228 = vrsqrt.pop %v1164
        %v1229 = vrsqrt.pop %v1165
        %v1230 = vrsqrt.pop %v1166
        %v1231 = vrsqrt.pop %v1167
        %v1232 = vrsqrt.pop %v1168
        %v1233 = vrsqrt.pop %v1169
        %v1234 = vrsqrt.pop %v1170
        %v1235 = vrsqrt.pop %v1171
        %v1236 = vrsqrt.pop %v1172
        %v1237 = vrsqrt.pop %v1173
        %v1238 = vrsqrt.pop %v1174
        %v1239 = vrsqrt.pop %v1175
        %v1240 = vrsqrt.pop %v1176
        %v1241 = vrsqrt.pop %v1177
        %v1242 = vrsqrt.pop %v1178
        %v1243 = vrsqrt.pop %v1179
        %v1244 = vrsqrt.pop %v1180
        %v1245 = vrsqrt.pop %v1181
        %v1246 = vrsqrt.pop %v1182
        %v1247 = vrsqrt.pop %v1183
        %v1248 = vrsqrt.pop %v1184
        %v1249 = vrsqrt.pop %v1185
        %v1250 = vrsqrt.pop %v1186
        %v1251 = vrsqrt.pop %v1187
        %v1252 = vrsqrt.pop %v1188
        %v1253 = vrsqrt.pop %v1189
        %v1254 = vrsqrt.pop %v1190
        %v1255 = vrsqrt.pop %v1191
        %v1256 = vrsqrt.pop %v1192
        %v1257 = vrsqrt.pop %v1193
        %v1258 = vrsqrt.pop %v1194
        %v1259 = vrsqrt.pop %v1195
        %v1260 = vrsqrt.pop %v1196
        %v1261 = vrsqrt.pop %v1197
        %v1262 = vrsqrt.pop %v1198
        %v1263 = vrsqrt.pop %v1199
        %v1264 = vrsqrt.pop %v1200
        %v1265 = vrsqrt.pop %v1201
        %v1266 = vrsqrt.pop %v1202
        %v1267 = vrsqrt.pop %v1203
        %v1268 = vrsqrt.pop %v1204
        %v1269 = vrsqrt.pop %v1205
        %v1270 = vrsqrt.pop %v1206
        %v1271 = vrsqrt.pop %v1207
        %v1272 = vrsqrt.pop %v1208
        %v1273 = vrsqrt.pop %v1209
        %v1274 = vrsqrt.pop %v1210
        %v1275 = vrsqrt.pop %v1211
        %v1276 = vrsqrt.pop %v1212
        %v1277 = vrsqrt.pop %v1213
        %v1278 = vrsqrt.pop %v1214
        %v1279 = vrsqrt.pop %v1215
        %v1280 = vmul.f32 %v1088, %v1216
        %v1281 = vmul.f32 %v1089, %v1217
        %v1282 = vmul.f32 %v1090, %v1218
        %v1283 = vmul.f32 %v1091, %v1219
        %v1284 = vmul.f32 %v1092, %v1220
        %v1285 = vmul.f32 %v1093, %v1221
        %v1286 = vmul.f32 %v1094, %v1222
        %v1287 = vmul.f32 %v1095, %v1223
        %v1288 = vmul.f32 %v1096, %v1224
        %v1289 = vmul.f32 %v1097, %v1225
        %v1290 = vmul.f32 %v1098, %v1226
        %v1291 = vmul.f32 %v1099, %v1227
        %v1292 = vmul.f32 %v1100, %v1228
        %v1293 = vmul.f32 %v1101, %v1229
        %v1294 = vmul.f32 %v1102, %v1230
        %v1295 = vmul.f32 %v1103, %v1231
        %v1296 = vmul.f32 %v1104, %v1232
        %v1297 = vmul.f32 %v1105, %v1233
        %v1298 = vmul.f32 %v1106, %v1234
        %v1299 = vmul.f32 %v1107, %v1235
        %v1300 = vmul.f32 %v1108, %v1236
        %v1301 = vmul.f32 %v1109, %v1237
        %v1302 = vmul.f32 %v1110, %v1238
        %v1303 = vmul.f32 %v1111, %v1239
        %v1304 = vmul.f32 %v1112, %v1240
        %v1305 = vmul.f32 %v1113, %v1241
        %v1306 = vmul.f32 %v1114, %v1242
        %v1307 = vmul.f32 %v1115, %v1243
        %v1308 = vmul.f32 %v1116, %v1244
        %v1309 = vmul.f32 %v1117, %v1245
        %v1310 = vmul.f32 %v1118, %v1246
        %v1311 = vmul.f32 %v1119, %v1247
        %v1312 = vmul.f32 %v1120, %v1248
        %v1313 = vmul.f32 %v1121, %v1249
        %v1314 = vmul.f32 %v1122, %v1250
        %v1315 = vmul.f32 %v1123, %v1251
        %v1316 = vmul.f32 %v1124, %v1252
        %v1317 = vmul.f32 %v1125, %v1253
        %v1318 = vmul.f32 %v1126, %v1254
        %v1319 = vmul.f32 %v1127, %v1255
        %v1320 = vmul.f32 %v1128, %v1256
        %v1321 = vmul.f32 %v1129, %v1257
        %v1322 = vmul.f32 %v1130, %v1258
        %v1323 = vmul.f32 %v1131, %v1259
        %v1324 = vmul.f32 %v1132, %v1260
        %v1325 = vmul.f32 %v1133, %v1261
        %v1326 = vmul.f32 %v1134, %v1262
        %v1327 = vmul.f32 %v1135, %v1263
        %v1328 = vmul.f32 %v1136, %v1264
        %v1329 = vmul.f32 %v1137, %v1265
        %v1330 = vmul.f32 %v1138, %v1266
        %v1331 = vmul.f32 %v1139, %v1267
        %v1332 = vmul.f32 %v1140, %v1268
        %v1333 = vmul.f32 %v1141, %v1269
        %v1334 = vmul.f32 %v1142, %v1270
        %v1335 = vmul.f32 %v1143, %v1271
        %v1336 = vmul.f32 %v1144, %v1272
        %v1337 = vmul.f32 %v1145, %v1273
        %v1338 = vmul.f32 %v1146, %v1274
        %v1339 = vmul.f32 %v1147, %v1275
        %v1340 = vmul.f32 %v1148, %v1276
        %v1341 = vmul.f32 %v1149, %v1277
        %v1342 = vmul.f32 %v1150, %v1278
        %v1343 = vmul.f32 %v1151, %v1279
        %v1344 = vld [vmem:[%s2] sm:$0xff]
        %v1345 = vld [vmem:[%s2 + $0x8] sm:$0xff]
        %v1346 = vld [vmem:[%s2 + $0x10] sm:$0xff]
        %v1347 = vld [vmem:[%s2 + $0x18] sm:$0xff]
        %v1348 = vld [vmem:[%s2 + $0x20] sm:$0xff]
        %v1349 = vld [vmem:[%s2 + $0x28] sm:$0xff]
        %v1350 = vld [vmem:[%s2 + $0x30] sm:$0xff]
        %v1351 = vld [vmem:[%s2 + $0x38] sm:$0xff]
        %v1352 = vld [vmem:[%s2 + $0x40] sm:$0xff]
        %v1353 = vld [vmem:[%s2 + $0x48] sm:$0xff]
        %v1354 = vld [vmem:[%s2 + $0x50] sm:$0xff]
        %v1355 = vld [vmem:[%s2 + $0x58] sm:$0xff]
        %v1356 = vld [vmem:[%s2 + $0x60] sm:$0xff]
        %v1357 = vld [vmem:[%s2 + $0x68] sm:$0xff]
        %v1358 = vld [vmem:[%s2 + $0x70] sm:$0xff]
        %v1359 = vld [vmem:[%s2 + $0x78] sm:$0xff]
        %v1360 = vld [vmem:[%s2 + $0x80] sm:$0xff]
        %v1361 = vld [vmem:[%s2 + $0x88] sm:$0xff]
        %v1362 = vld [vmem:[%s2 + $0x90] sm:$0xff]
        %v1363 = vld [vmem:[%s2 + $0x98] sm:$0xff]
        %v1364 = vld [vmem:[%s2 + $0xa0] sm:$0xff]
        %v1365 = vld [vmem:[%s2 + $0xa8] sm:$0xff]
        %v1366 = vld [vmem:[%s2 + $0xb0] sm:$0xff]
        %v1367 = vld [vmem:[%s2 + $0xb8] sm:$0xff]
        %v1368 = vld [vmem:[%s2 + $0xc0] sm:$0xff]
        %v1369 = vld [vmem:[%s2 + $0xc8] sm:$0xff]
        %v1370 = vld [vmem:[%s2 + $0xd0] sm:$0xff]
        %v1371 = vld [vmem:[%s2 + $0xd8] sm:$0xff]
        %v1372 = vld [vmem:[%s2 + $0xe0] sm:$0xff]
        %v1373 = vld [vmem:[%s2 + $0xe8] sm:$0xff]
        %v1374 = vld [vmem:[%s2 + $0xf0] sm:$0xff]
        %v1375 = vld [vmem:[%s2 + $0xf8] sm:$0xff]
        %v1376 = vld [vmem:[%s2 + $0x100] sm:$0xff]
        %v1377 = vld [vmem:[%s2 + $0x108] sm:$0xff]
        %v1378 = vld [vmem:[%s2 + $0x110] sm:$0xff]
        %v1379 = vld [vmem:[%s2 + $0x118] sm:$0xff]
        %v1380 = vld [vmem:[%s2 + $0x120] sm:$0xff]
        %v1381 = vld [vmem:[%s2 + $0x128] sm:$0xff]
        %v1382 = vld [vmem:[%s2 + $0x130] sm:$0xff]
        %v1383 = vld [vmem:[%s2 + $0x138] sm:$0xff]
        %v1384 = vld [vmem:[%s2 + $0x140] sm:$0xff]
        %v1385 = vld [vmem:[%s2 + $0x148] sm:$0xff]
        %v1386 = vld [vmem:[%s2 + $0x150] sm:$0xff]
        %v1387 = vld [vmem:[%s2 + $0x158] sm:$0xff]
        %v1388 = vld [vmem:[%s2 + $0x160] sm:$0xff]
        %v1389 = vld [vmem:[%s2 + $0x168] sm:$0xff]
        %v1390 = vld [vmem:[%s2 + $0x170] sm:$0xff]
        %v1391 = vld [vmem:[%s2 + $0x178] sm:$0xff]
        %v1392 = vld [vmem:[%s2 + $0x180] sm:$0xff]
        %v1393 = vld [vmem:[%s2 + $0x188] sm:$0xff]
        %v1394 = vld [vmem:[%s2 + $0x190] sm:$0xff]
        %v1395 = vld [vmem:[%s2 + $0x198] sm:$0xff]
        %v1396 = vld [vmem:[%s2 + $0x1a0] sm:$0xff]
        %v1397 = vld [vmem:[%s2 + $0x1a8] sm:$0xff]
        %v1398 = vld [vmem:[%s2 + $0x1b0] sm:$0xff]
        %v1399 = vld [vmem:[%s2 + $0x1b8] sm:$0xff]
        %v1400 = vld [vmem:[%s2 + $0x1c0] sm:$0xff]
        %v1401 = vld [vmem:[%s2 + $0x1c8] sm:$0xff]
        %v1402 = vld [vmem:[%s2 + $0x1d0] sm:$0xff]
        %v1403 = vld [vmem:[%s2 + $0x1d8] sm:$0xff]
        %v1404 = vld [vmem:[%s2 + $0x1e0] sm:$0xff]
        %v1405 = vld [vmem:[%s2 + $0x1e8] sm:$0xff]
        %v1406 = vld [vmem:[%s2 + $0x1f0] sm:$0xff]
        %v1407 = vld [vmem:[%s2 + $0x1f8] sm:$0xff]
        %v1408 = vmul.f32 %v576, %v1280
        %v1409 = vmul.f32 %v577, %v1281
        %v1410 = vmul.f32 %v578, %v1282
        %v1411 = vmul.f32 %v579, %v1283
        %v1412 = vmul.f32 %v580, %v1284
        %v1413 = vmul.f32 %v581, %v1285
        %v1414 = vmul.f32 %v582, %v1286
        %v1415 = vmul.f32 %v583, %v1287
        %v1416 = vmul.f32 %v584, %v1288
        %v1417 = vmul.f32 %v585, %v1289
        %v1418 = vmul.f32 %v586, %v1290
        %v1419 = vmul.f32 %v587, %v1291
        %v1420 = vmul.f32 %v588, %v1292
        %v1421 = vmul.f32 %v589, %v1293
        %v1422 = vmul.f32 %v590, %v1294
        %v1423 = vmul.f32 %v591, %v1295
        %v1424 = vmul.f32 %v592, %v1296
        %v1425 = vmul.f32 %v593, %v1297
        %v1426 = vmul.f32 %v594, %v1298
        %v1427 = vmul.f32 %v595, %v1299
        %v1428 = vmul.f32 %v596, %v1300
        %v1429 = vmul.f32 %v597, %v1301
        %v1430 = vmul.f32 %v598, %v1302
        %v1431 = vmul.f32 %v599, %v1303
        %v1432 = vmul.f32 %v600, %v1304
        %v1433 = vmul.f32 %v601, %v1305
        %v1434 = vmul.f32 %v602, %v1306
        %v1435 = vmul.f32 %v603, %v1307
        %v1436 = vmul.f32 %v604, %v1308
        %v1437 = vmul.f32 %v605, %v1309
        %v1438 = vmul.f32 %v606, %v1310
        %v1439 = vmul.f32 %v607, %v1311
        %v1440 = vmul.f32 %v608, %v1312
        %v1441 = vmul.f32 %v609, %v1313
        %v1442 = vmul.f32 %v610, %v1314
        %v1443 = vmul.f32 %v611, %v1315
        %v1444 = vmul.f32 %v612, %v1316
        %v1445 = vmul.f32 %v613, %v1317
        %v1446 = vmul.f32 %v614, %v1318
        %v1447 = vmul.f32 %v615, %v1319
        %v1448 = vmul.f32 %v616, %v1320
        %v1449 = vmul.f32 %v617, %v1321
        %v1450 = vmul.f32 %v618, %v1322
        %v1451 = vmul.f32 %v619, %v1323
        %v1452 = vmul.f32 %v620, %v1324
        %v1453 = vmul.f32 %v621, %v1325
        %v1454 = vmul.f32 %v622, %v1326
        %v1455 = vmul.f32 %v623, %v1327
        %v1456 = vmul.f32 %v624, %v1328
        %v1457 = vmul.f32 %v625, %v1329
        %v1458 = vmul.f32 %v626, %v1330
        %v1459 = vmul.f32 %v627, %v1331
        %v1460 = vmul.f32 %v628, %v1332
        %v1461 = vmul.f32 %v629, %v1333
        %v1462 = vmul.f32 %v630, %v1334
        %v1463 = vmul.f32 %v631, %v1335
        %v1464 = vmul.f32 %v632, %v1336
        %v1465 = vmul.f32 %v633, %v1337
        %v1466 = vmul.f32 %v634, %v1338
        %v1467 = vmul.f32 %v635, %v1339
        %v1468 = vmul.f32 %v636, %v1340
        %v1469 = vmul.f32 %v637, %v1341
        %v1470 = vmul.f32 %v638, %v1342
        %v1471 = vmul.f32 %v639, %v1343
        %v1472 = vsub.f32 %v1344, %v1408
        %v1473 = vsub.f32 %v1345, %v1409
        %v1474 = vsub.f32 %v1346, %v1410
        %v1475 = vsub.f32 %v1347, %v1411
        %v1476 = vsub.f32 %v1348, %v1412
        %v1477 = vsub.f32 %v1349, %v1413
        %v1478 = vsub.f32 %v1350, %v1414
        %v1479 = vsub.f32 %v1351, %v1415
        %v1480 = vsub.f32 %v1352, %v1416
        %v1481 = vsub.f32 %v1353, %v1417
        %v1482 = vsub.f32 %v1354, %v1418
        %v1483 = vsub.f32 %v1355, %v1419
        %v1484 = vsub.f32 %v1356, %v1420
        %v1485 = vsub.f32 %v1357, %v1421
        %v1486 = vsub.f32 %v1358, %v1422
        %v1487 = vsub.f32 %v1359, %v1423
        %v1488 = vsub.f32 %v1360, %v1424
        %v1489 = vsub.f32 %v1361, %v1425
        %v1490 = vsub.f32 %v1362, %v1426
        %v1491 = vsub.f32 %v1363, %v1427
        %v1492 = vsub.f32 %v1364, %v1428
        %v1493 = vsub.f32 %v1365, %v1429
        %v1494 = vsub.f32 %v1366, %v1430
        %v1495 = vsub.f32 %v1367, %v1431
        %v1496 = vsub.f32 %v1368, %v1432
        %v1497 = vsub.f32 %v1369, %v1433
        %v1498 = vsub.f32 %v1370, %v1434
        %v1499 = vsub.f32 %v1371, %v1435
        %v1500 = vsub.f32 %v1372, %v1436
        %v1501 = vsub.f32 %v1373, %v1437
        %v1502 = vsub.f32 %v1374, %v1438
        %v1503 = vsub.f32 %v1375, %v1439
        %v1504 = vsub.f32 %v1376, %v1440
        %v1505 = vsub.f32 %v1377, %v1441
        %v1506 = vsub.f32 %v1378, %v1442
        %v1507 = vsub.f32 %v1379, %v1443
        %v1508 = vsub.f32 %v1380, %v1444
        %v1509 = vsub.f32 %v1381, %v1445
        %v1510 = vsub.f32 %v1382, %v1446
        %v1511 = vsub.f32 %v1383, %v1447
        %v1512 = vsub.f32 %v1384, %v1448
        %v1513 = vsub.f32 %v1385, %v1449
        %v1514 = vsub.f32 %v1386, %v1450
        %v1515 = vsub.f32 %v1387, %v1451
        %v1516 = vsub.f32 %v1388, %v1452
        %v1517 = vsub.f32 %v1389, %v1453
        %v1518 = vsub.f32 %v1390, %v1454
        %v1519 = vsub.f32 %v1391, %v1455
        %v1520 = vsub.f32 %v1392, %v1456
        %v1521 = vsub.f32 %v1393, %v1457
        %v1522 = vsub.f32 %v1394, %v1458
        %v1523 = vsub.f32 %v1395, %v1459
        %v1524 = vsub.f32 %v1396, %v1460
        %v1525 = vsub.f32 %v1397, %v1461
        %v1526 = vsub.f32 %v1398, %v1462
        %v1527 = vsub.f32 %v1399, %v1463
        %v1528 = vsub.f32 %v1400, %v1464
        %v1529 = vsub.f32 %v1401, %v1465
        %v1530 = vsub.f32 %v1402, %v1466
        %v1531 = vsub.f32 %v1403, %v1467
        %v1532 = vsub.f32 %v1404, %v1468
        %v1533 = vsub.f32 %v1405, %v1469
        %v1534 = vsub.f32 %v1406, %v1470
        %v1535 = vsub.f32 %v1407, %v1471
        %1537 = vset.pattern.permute.xlu0 0
        %1538 = vperm.xlu0 %1537, %v1280
        %v1539 = vpop.permute.xlu0 %1538
        %1542 = vset.pattern.permute.xlu0 0
        %1543 = vperm.xlu0 %1542, %v1281
        %v1544 = vpop.permute.xlu0 %1543
        %1547 = vset.pattern.permute.xlu0 0
        %1548 = vperm.xlu0 %1547, %v1282
        %v1549 = vpop.permute.xlu0 %1548
        %1552 = vset.pattern.permute.xlu0 0
        %1553 = vperm.xlu0 %1552, %v1283
        %v1554 = vpop.permute.xlu0 %1553
        %1557 = vset.pattern.permute.xlu0 0
        %1558 = vperm.xlu0 %1557, %v1284
        %v1559 = vpop.permute.xlu0 %1558
        %1562 = vset.pattern.permute.xlu0 0
        %1563 = vperm.xlu0 %1562, %v1285
        %v1564 = vpop.permute.xlu0 %1563
        %1567 = vset.pattern.permute.xlu0 0
        %1568 = vperm.xlu0 %1567, %v1286
        %v1569 = vpop.permute.xlu0 %1568
        %1572 = vset.pattern.permute.xlu0 0
        %1573 = vperm.xlu0 %1572, %v1287
        %v1574 = vpop.permute.xlu0 %1573
        %1577 = vset.pattern.permute.xlu0 0
        %1578 = vperm.xlu0 %1577, %v1288
        %v1579 = vpop.permute.xlu0 %1578
        %1582 = vset.pattern.permute.xlu0 0
        %1583 = vperm.xlu0 %1582, %v1289
        %v1584 = vpop.permute.xlu0 %1583
        %1587 = vset.pattern.permute.xlu0 0
        %1588 = vperm.xlu0 %1587, %v1290
        %v1589 = vpop.permute.xlu0 %1588
        %1592 = vset.pattern.permute.xlu0 0
        %1593 = vperm.xlu0 %1592, %v1291
        %v1594 = vpop.permute.xlu0 %1593
        %1597 = vset.pattern.permute.xlu0 0
        %1598 = vperm.xlu0 %1597, %v1292
        %v1599 = vpop.permute.xlu0 %1598
        %1602 = vset.pattern.permute.xlu0 0
        %1603 = vperm.xlu0 %1602, %v1293
        %v1604 = vpop.permute.xlu0 %1603
        %1607 = vset.pattern.permute.xlu0 0
        %1608 = vperm.xlu0 %1607, %v1294
        %v1609 = vpop.permute.xlu0 %1608
        %1612 = vset.pattern.permute.xlu0 0
        %1613 = vperm.xlu0 %1612, %v1295
        %v1614 = vpop.permute.xlu0 %1613
        %1617 = vset.pattern.permute.xlu0 0
        %1618 = vperm.xlu0 %1617, %v1296
        %v1619 = vpop.permute.xlu0 %1618
        %1622 = vset.pattern.permute.xlu0 0
        %1623 = vperm.xlu0 %1622, %v1297
        %v1624 = vpop.permute.xlu0 %1623
        %1627 = vset.pattern.permute.xlu0 0
        %1628 = vperm.xlu0 %1627, %v1298
        %v1629 = vpop.permute.xlu0 %1628
        %1632 = vset.pattern.permute.xlu0 0
        %1633 = vperm.xlu0 %1632, %v1299
        %v1634 = vpop.permute.xlu0 %1633
        %1637 = vset.pattern.permute.xlu0 0
        %1638 = vperm.xlu0 %1637, %v1300
        %v1639 = vpop.permute.xlu0 %1638
        %1642 = vset.pattern.permute.xlu0 0
        %1643 = vperm.xlu0 %1642, %v1301
        %v1644 = vpop.permute.xlu0 %1643
        %1647 = vset.pattern.permute.xlu0 0
        %1648 = vperm.xlu0 %1647, %v1302
        %v1649 = vpop.permute.xlu0 %1648
        %1652 = vset.pattern.permute.xlu0 0
        %1653 = vperm.xlu0 %1652, %v1303
        %v1654 = vpop.permute.xlu0 %1653
        %1657 = vset.pattern.permute.xlu0 0
        %1658 = vperm.xlu0 %1657, %v1304
        %v1659 = vpop.permute.xlu0 %1658
        %1662 = vset.pattern.permute.xlu0 0
        %1663 = vperm.xlu0 %1662, %v1305
        %v1664 = vpop.permute.xlu0 %1663
        %1667 = vset.pattern.permute.xlu0 0
        %1668 = vperm.xlu0 %1667, %v1306
        %v1669 = vpop.permute.xlu0 %1668
        %1672 = vset.pattern.permute.xlu0 0
        %1673 = vperm.xlu0 %1672, %v1307
        %v1674 = vpop.permute.xlu0 %1673
        %1677 = vset.pattern.permute.xlu0 0
        %1678 = vperm.xlu0 %1677, %v1308
        %v1679 = vpop.permute.xlu0 %1678
        %1682 = vset.pattern.permute.xlu0 0
        %1683 = vperm.xlu0 %1682, %v1309
        %v1684 = vpop.permute.xlu0 %1683
        %1687 = vset.pattern.permute.xlu0 0
        %1688 = vperm.xlu0 %1687, %v1310
        %v1689 = vpop.permute.xlu0 %1688
        %1692 = vset.pattern.permute.xlu0 0
        %1693 = vperm.xlu0 %1692, %v1311
        %v1694 = vpop.permute.xlu0 %1693
        %1697 = vset.pattern.permute.xlu0 0
        %1698 = vperm.xlu0 %1697, %v1312
        %v1699 = vpop.permute.xlu0 %1698
        %1702 = vset.pattern.permute.xlu0 0
        %1703 = vperm.xlu0 %1702, %v1313
        %v1704 = vpop.permute.xlu0 %1703
        %1707 = vset.pattern.permute.xlu0 0
        %1708 = vperm.xlu0 %1707, %v1314
        %v1709 = vpop.permute.xlu0 %1708
        %1712 = vset.pattern.permute.xlu0 0
        %1713 = vperm.xlu0 %1712, %v1315
        %v1714 = vpop.permute.xlu0 %1713
        %1717 = vset.pattern.permute.xlu0 0
        %1718 = vperm.xlu0 %1717, %v1316
        %v1719 = vpop.permute.xlu0 %1718
        %1722 = vset.pattern.permute.xlu0 0
        %1723 = vperm.xlu0 %1722, %v1317
        %v1724 = vpop.permute.xlu0 %1723
        %1727 = vset.pattern.permute.xlu0 0
        %1728 = vperm.xlu0 %1727, %v1318
        %v1729 = vpop.permute.xlu0 %1728
        %1732 = vset.pattern.permute.xlu0 0
        %1733 = vperm.xlu0 %1732, %v1319
        %v1734 = vpop.permute.xlu0 %1733
        %1737 = vset.pattern.permute.xlu0 0
        %1738 = vperm.xlu0 %1737, %v1320
        %v1739 = vpop.permute.xlu0 %1738
        %1742 = vset.pattern.permute.xlu0 0
        %1743 = vperm.xlu0 %1742, %v1321
        %v1744 = vpop.permute.xlu0 %1743
        %1747 = vset.pattern.permute.xlu0 0
        %1748 = vperm.xlu0 %1747, %v1322
        %v1749 = vpop.permute.xlu0 %1748
        %1752 = vset.pattern.permute.xlu0 0
        %1753 = vperm.xlu0 %1752, %v1323
        %v1754 = vpop.permute.xlu0 %1753
        %1757 = vset.pattern.permute.xlu0 0
        %1758 = vperm.xlu0 %1757, %v1324
        %v1759 = vpop.permute.xlu0 %1758
        %1762 = vset.pattern.permute.xlu0 0
        %1763 = vperm.xlu0 %1762, %v1325
        %v1764 = vpop.permute.xlu0 %1763
        %1767 = vset.pattern.permute.xlu0 0
        %1768 = vperm.xlu0 %1767, %v1326
        %v1769 = vpop.permute.xlu0 %1768
        %1772 = vset.pattern.permute.xlu0 0
        %1773 = vperm.xlu0 %1772, %v1327
        %v1774 = vpop.permute.xlu0 %1773
        %1777 = vset.pattern.permute.xlu0 0
        %1778 = vperm.xlu0 %1777, %v1328
        %v1779 = vpop.permute.xlu0 %1778
        %1782 = vset.pattern.permute.xlu0 0
        %1783 = vperm.xlu0 %1782, %v1329
        %v1784 = vpop.permute.xlu0 %1783
        %1787 = vset.pattern.permute.xlu0 0
        %1788 = vperm.xlu0 %1787, %v1330
        %v1789 = vpop.permute.xlu0 %1788
        %1792 = vset.pattern.permute.xlu0 0
        %1793 = vperm.xlu0 %1792, %v1331
        %v1794 = vpop.permute.xlu0 %1793
        %1797 = vset.pattern.permute.xlu0 0
        %1798 = vperm.xlu0 %1797, %v1332
        %v1799 = vpop.permute.xlu0 %1798
        %1802 = vset.pattern.permute.xlu0 0
        %1803 = vperm.xlu0 %1802, %v1333
        %v1804 = vpop.permute.xlu0 %1803
        %1807 = vset.pattern.permute.xlu0 0
        %1808 = vperm.xlu0 %1807, %v1334
        %v1809 = vpop.permute.xlu0 %1808
        %1812 = vset.pattern.permute.xlu0 0
        %1813 = vperm.xlu0 %1812, %v1335
        %v1814 = vpop.permute.xlu0 %1813
        %1817 = vset.pattern.permute.xlu0 0
        %1818 = vperm.xlu0 %1817, %v1336
        %v1819 = vpop.permute.xlu0 %1818
        %1822 = vset.pattern.permute.xlu0 0
        %1823 = vperm.xlu0 %1822, %v1337
        %v1824 = vpop.permute.xlu0 %1823
        %1827 = vset.pattern.permute.xlu0 0
        %1828 = vperm.xlu0 %1827, %v1338
        %v1829 = vpop.permute.xlu0 %1828
        %1832 = vset.pattern.permute.xlu0 0
        %1833 = vperm.xlu0 %1832, %v1339
        %v1834 = vpop.permute.xlu0 %1833
        %1837 = vset.pattern.permute.xlu0 0
        %1838 = vperm.xlu0 %1837, %v1340
        %v1839 = vpop.permute.xlu0 %1838
        %1842 = vset.pattern.permute.xlu0 0
        %1843 = vperm.xlu0 %1842, %v1341
        %v1844 = vpop.permute.xlu0 %1843
        %1847 = vset.pattern.permute.xlu0 0
        %1848 = vperm.xlu0 %1847, %v1342
        %v1849 = vpop.permute.xlu0 %1848
        %1852 = vset.pattern.permute.xlu0 0
        %1853 = vperm.xlu0 %1852, %v1343
        %v1854 = vpop.permute.xlu0 %1853
        %v1856 = vmul.f32 %v319, %v1539
        %v1857 = vmul.f32 %v320, %v1544
        %v1858 = vmul.f32 %v321, %v1549
        %v1859 = vmul.f32 %v322, %v1554
        %v1860 = vmul.f32 %v323, %v1559
        %v1861 = vmul.f32 %v324, %v1564
        %v1862 = vmul.f32 %v325, %v1569
        %v1863 = vmul.f32 %v326, %v1574
        %v1864 = vmul.f32 %v327, %v1579
        %v1865 = vmul.f32 %v328, %v1584
        %v1866 = vmul.f32 %v329, %v1589
        %v1867 = vmul.f32 %v330, %v1594
        %v1868 = vmul.f32 %v331, %v1599
        %v1869 = vmul.f32 %v332, %v1604
        %v1870 = vmul.f32 %v333, %v1609
        %v1871 = vmul.f32 %v334, %v1614
        %v1872 = vmul.f32 %v335, %v1619
        %v1873 = vmul.f32 %v336, %v1624
        %v1874 = vmul.f32 %v337, %v1629
        %v1875 = vmul.f32 %v338, %v1634
        %v1876 = vmul.f32 %v339, %v1639
        %v1877 = vmul.f32 %v340, %v1644
        %v1878 = vmul.f32 %v341, %v1649
        %v1879 = vmul.f32 %v342, %v1654
        %v1880 = vmul.f32 %v343, %v1659
        %v1881 = vmul.f32 %v344, %v1664
        %v1882 = vmul.f32 %v345, %v1669
        %v1883 = vmul.f32 %v346, %v1674
        %v1884 = vmul.f32 %v347, %v1679
        %v1885 = vmul.f32 %v348, %v1684
        %v1886 = vmul.f32 %v349, %v1689
        %v1887 = vmul.f32 %v350, %v1694
        %v1888 = vmul.f32 %v351, %v1699
        %v1889 = vmul.f32 %v352, %v1704
        %v1890 = vmul.f32 %v353, %v1709
        %v1891 = vmul.f32 %v354, %v1714
        %v1892 = vmul.f32 %v355, %v1719
        %v1893 = vmul.f32 %v356, %v1724
        %v1894 = vmul.f32 %v357, %v1729
        %v1895 = vmul.f32 %v358, %v1734
        %v1896 = vmul.f32 %v359, %v1739
        %v1897 = vmul.f32 %v360, %v1744
        %v1898 = vmul.f32 %v361, %v1749
        %v1899 = vmul.f32 %v362, %v1754
        %v1900 = vmul.f32 %v363, %v1759
        %v1901 = vmul.f32 %v364, %v1764
        %v1902 = vmul.f32 %v365, %v1769
        %v1903 = vmul.f32 %v366, %v1774
        %v1904 = vmul.f32 %v367, %v1779
        %v1905 = vmul.f32 %v368, %v1784
        %v1906 = vmul.f32 %v369, %v1789
        %v1907 = vmul.f32 %v370, %v1794
        %v1908 = vmul.f32 %v371, %v1799
        %v1909 = vmul.f32 %v372, %v1804
        %v1910 = vmul.f32 %v373, %v1809
        %v1911 = vmul.f32 %v374, %v1814
        %v1912 = vmul.f32 %v375, %v1819
        %v1913 = vmul.f32 %v376, %v1824
        %v1914 = vmul.f32 %v377, %v1829
        %v1915 = vmul.f32 %v378, %v1834
        %v1916 = vmul.f32 %v379, %v1839
        %v1917 = vmul.f32 %v380, %v1844
        %v1918 = vmul.f32 %v381, %v1849
        %v1919 = vmul.f32 %v382, %v1854
        %1921 = vset.pattern.permute.xlu0 0
        %1922 = vperm.xlu0 %1921, %v1472
        %v1923 = vpop.permute.xlu0 %1922
        %1926 = vset.pattern.permute.xlu0 0
        %1927 = vperm.xlu0 %1926, %v1473
        %v1928 = vpop.permute.xlu0 %1927
        %1931 = vset.pattern.permute.xlu0 0
        %1932 = vperm.xlu0 %1931, %v1474
        %v1933 = vpop.permute.xlu0 %1932
        %1936 = vset.pattern.permute.xlu0 0
        %1937 = vperm.xlu0 %1936, %v1475
        %v1938 = vpop.permute.xlu0 %1937
        %1941 = vset.pattern.permute.xlu0 0
        %1942 = vperm.xlu0 %1941, %v1476
        %v1943 = vpop.permute.xlu0 %1942
        %1946 = vset.pattern.permute.xlu0 0
        %1947 = vperm.xlu0 %1946, %v1477
        %v1948 = vpop.permute.xlu0 %1947
        %1951 = vset.pattern.permute.xlu0 0
        %1952 = vperm.xlu0 %1951, %v1478
        %v1953 = vpop.permute.xlu0 %1952
        %1956 = vset.pattern.permute.xlu0 0
        %1957 = vperm.xlu0 %1956, %v1479
        %v1958 = vpop.permute.xlu0 %1957
        %1961 = vset.pattern.permute.xlu0 0
        %1962 = vperm.xlu0 %1961, %v1480
        %v1963 = vpop.permute.xlu0 %1962
        %1966 = vset.pattern.permute.xlu0 0
        %1967 = vperm.xlu0 %1966, %v1481
        %v1968 = vpop.permute.xlu0 %1967
        %1971 = vset.pattern.permute.xlu0 0
        %1972 = vperm.xlu0 %1971, %v1482
        %v1973 = vpop.permute.xlu0 %1972
        %1976 = vset.pattern.permute.xlu0 0
        %1977 = vperm.xlu0 %1976, %v1483
        %v1978 = vpop.permute.xlu0 %1977
        %1981 = vset.pattern.permute.xlu0 0
        %1982 = vperm.xlu0 %1981, %v1484
        %v1983 = vpop.permute.xlu0 %1982
        %1986 = vset.pattern.permute.xlu0 0
        %1987 = vperm.xlu0 %1986, %v1485
        %v1988 = vpop.permute.xlu0 %1987
        %1991 = vset.pattern.permute.xlu0 0
        %1992 = vperm.xlu0 %1991, %v1486
        %v1993 = vpop.permute.xlu0 %1992
        %1996 = vset.pattern.permute.xlu0 0
        %1997 = vperm.xlu0 %1996, %v1487
        %v1998 = vpop.permute.xlu0 %1997
        %2001 = vset.pattern.permute.xlu0 0
        %2002 = vperm.xlu0 %2001, %v1488
        %v2003 = vpop.permute.xlu0 %2002
        %2006 = vset.pattern.permute.xlu0 0
        %2007 = vperm.xlu0 %2006, %v1489
        %v2008 = vpop.permute.xlu0 %2007
        %2011 = vset.pattern.permute.xlu0 0
        %2012 = vperm.xlu0 %2011, %v1490
        %v2013 = vpop.permute.xlu0 %2012
        %2016 = vset.pattern.permute.xlu0 0
        %2017 = vperm.xlu0 %2016, %v1491
        %v2018 = vpop.permute.xlu0 %2017
        %2021 = vset.pattern.permute.xlu0 0
        %2022 = vperm.xlu0 %2021, %v1492
        %v2023 = vpop.permute.xlu0 %2022
        %2026 = vset.pattern.permute.xlu0 0
        %2027 = vperm.xlu0 %2026, %v1493
        %v2028 = vpop.permute.xlu0 %2027
        %2031 = vset.pattern.permute.xlu0 0
        %2032 = vperm.xlu0 %2031, %v1494
        %v2033 = vpop.permute.xlu0 %2032
        %2036 = vset.pattern.permute.xlu0 0
        %2037 = vperm.xlu0 %2036, %v1495
        %v2038 = vpop.permute.xlu0 %2037
        %2041 = vset.pattern.permute.xlu0 0
        %2042 = vperm.xlu0 %2041, %v1496
        %v2043 = vpop.permute.xlu0 %2042
        %2046 = vset.pattern.permute.xlu0 0
        %2047 = vperm.xlu0 %2046, %v1497
        %v2048 = vpop.permute.xlu0 %2047
        %2051 = vset.pattern.permute.xlu0 0
        %2052 = vperm.xlu0 %2051, %v1498
        %v2053 = vpop.permute.xlu0 %2052
        %2056 = vset.pattern.permute.xlu0 0
        %2057 = vperm.xlu0 %2056, %v1499
        %v2058 = vpop.permute.xlu0 %2057
        %2061 = vset.pattern.permute.xlu0 0
        %2062 = vperm.xlu0 %2061, %v1500
        %v2063 = vpop.permute.xlu0 %2062
        %2066 = vset.pattern.permute.xlu0 0
        %2067 = vperm.xlu0 %2066, %v1501
        %v2068 = vpop.permute.xlu0 %2067
        %2071 = vset.pattern.permute.xlu0 0
        %2072 = vperm.xlu0 %2071, %v1502
        %v2073 = vpop.permute.xlu0 %2072
        %2076 = vset.pattern.permute.xlu0 0
        %2077 = vperm.xlu0 %2076, %v1503
        %v2078 = vpop.permute.xlu0 %2077
        %2081 = vset.pattern.permute.xlu0 0
        %2082 = vperm.xlu0 %2081, %v1504
        %v2083 = vpop.permute.xlu0 %2082
        %2086 = vset.pattern.permute.xlu0 0
        %2087 = vperm.xlu0 %2086, %v1505
        %v2088 = vpop.permute.xlu0 %2087
        %2091 = vset.pattern.permute.xlu0 0
        %2092 = vperm.xlu0 %2091, %v1506
        %v2093 = vpop.permute.xlu0 %2092
        %2096 = vset.pattern.permute.xlu0 0
        %2097 = vperm.xlu0 %2096, %v1507
        %v2098 = vpop.permute.xlu0 %2097
        %2101 = vset.pattern.permute.xlu0 0
        %2102 = vperm.xlu0 %2101, %v1508
        %v2103 = vpop.permute.xlu0 %2102
        %2106 = vset.pattern.permute.xlu0 0
        %2107 = vperm.xlu0 %2106, %v1509
        %v2108 = vpop.permute.xlu0 %2107
        %2111 = vset.pattern.permute.xlu0 0
        %2112 = vperm.xlu0 %2111, %v1510
        %v2113 = vpop.permute.xlu0 %2112
        %2116 = vset.pattern.permute.xlu0 0
        %2117 = vperm.xlu0 %2116, %v1511
        %v2118 = vpop.permute.xlu0 %2117
        %2121 = vset.pattern.permute.xlu0 0
        %2122 = vperm.xlu0 %2121, %v1512
        %v2123 = vpop.permute.xlu0 %2122
        %2126 = vset.pattern.permute.xlu0 0
        %2127 = vperm.xlu0 %2126, %v1513
        %v2128 = vpop.permute.xlu0 %2127
        %2131 = vset.pattern.permute.xlu0 0
        %2132 = vperm.xlu0 %2131, %v1514
        %v2133 = vpop.permute.xlu0 %2132
        %2136 = vset.pattern.permute.xlu0 0
        %2137 = vperm.xlu0 %2136, %v1515
        %v2138 = vpop.permute.xlu0 %2137
        %2141 = vset.pattern.permute.xlu0 0
        %2142 = vperm.xlu0 %2141, %v1516
        %v2143 = vpop.permute.xlu0 %2142
        %2146 = vset.pattern.permute.xlu0 0
        %2147 = vperm.xlu0 %2146, %v1517
        %v2148 = vpop.permute.xlu0 %2147
        %2151 = vset.pattern.permute.xlu0 0
        %2152 = vperm.xlu0 %2151, %v1518
        %v2153 = vpop.permute.xlu0 %2152
        %2156 = vset.pattern.permute.xlu0 0
        %2157 = vperm.xlu0 %2156, %v1519
        %v2158 = vpop.permute.xlu0 %2157
        %2161 = vset.pattern.permute.xlu0 0
        %2162 = vperm.xlu0 %2161, %v1520
        %v2163 = vpop.permute.xlu0 %2162
        %2166 = vset.pattern.permute.xlu0 0
        %2167 = vperm.xlu0 %2166, %v1521
        %v2168 = vpop.permute.xlu0 %2167
        %2171 = vset.pattern.permute.xlu0 0
        %2172 = vperm.xlu0 %2171, %v1522
        %v2173 = vpop.permute.xlu0 %2172
        %2176 = vset.pattern.permute.xlu0 0
        %2177 = vperm.xlu0 %2176, %v1523
        %v2178 = vpop.permute.xlu0 %2177
        %2181 = vset.pattern.permute.xlu0 0
        %2182 = vperm.xlu0 %2181, %v1524
        %v2183 = vpop.permute.xlu0 %2182
        %2186 = vset.pattern.permute.xlu0 0
        %2187 = vperm.xlu0 %2186, %v1525
        %v2188 = vpop.permute.xlu0 %2187
        %2191 = vset.pattern.permute.xlu0 0
        %2192 = vperm.xlu0 %2191, %v1526
        %v2193 = vpop.permute.xlu0 %2192
        %2196 = vset.pattern.permute.xlu0 0
        %2197 = vperm.xlu0 %2196, %v1527
        %v2198 = vpop.permute.xlu0 %2197
        %2201 = vset.pattern.permute.xlu0 0
        %2202 = vperm.xlu0 %2201, %v1528
        %v2203 = vpop.permute.xlu0 %2202
        %2206 = vset.pattern.permute.xlu0 0
        %2207 = vperm.xlu0 %2206, %v1529
        %v2208 = vpop.permute.xlu0 %2207
        %2211 = vset.pattern.permute.xlu0 0
        %2212 = vperm.xlu0 %2211, %v1530
        %v2213 = vpop.permute.xlu0 %2212
        %2216 = vset.pattern.permute.xlu0 0
        %2217 = vperm.xlu0 %2216, %v1531
        %v2218 = vpop.permute.xlu0 %2217
        %2221 = vset.pattern.permute.xlu0 0
        %2222 = vperm.xlu0 %2221, %v1532
        %v2223 = vpop.permute.xlu0 %2222
        %2226 = vset.pattern.permute.xlu0 0
        %2227 = vperm.xlu0 %2226, %v1533
        %v2228 = vpop.permute.xlu0 %2227
        %2231 = vset.pattern.permute.xlu0 0
        %2232 = vperm.xlu0 %2231, %v1534
        %v2233 = vpop.permute.xlu0 %2232
        %2236 = vset.pattern.permute.xlu0 0
        %2237 = vperm.xlu0 %2236, %v1535
        %v2238 = vpop.permute.xlu0 %2237
        %v2240 = vadd.f32 %v1856, %v1923
        %v2241 = vadd.f32 %v1857, %v1928
        %v2242 = vadd.f32 %v1858, %v1933
        %v2243 = vadd.f32 %v1859, %v1938
        %v2244 = vadd.f32 %v1860, %v1943
        %v2245 = vadd.f32 %v1861, %v1948
        %v2246 = vadd.f32 %v1862, %v1953
        %v2247 = vadd.f32 %v1863, %v1958
        %v2248 = vadd.f32 %v1864, %v1963
        %v2249 = vadd.f32 %v1865, %v1968
        %v2250 = vadd.f32 %v1866, %v1973
        %v2251 = vadd.f32 %v1867, %v1978
        %v2252 = vadd.f32 %v1868, %v1983
        %v2253 = vadd.f32 %v1869, %v1988
        %v2254 = vadd.f32 %v1870, %v1993
        %v2255 = vadd.f32 %v1871, %v1998
        %v2256 = vadd.f32 %v1872, %v2003
        %v2257 = vadd.f32 %v1873, %v2008
        %v2258 = vadd.f32 %v1874, %v2013
        %v2259 = vadd.f32 %v1875, %v2018
        %v2260 = vadd.f32 %v1876, %v2023
        %v2261 = vadd.f32 %v1877, %v2028
        %v2262 = vadd.f32 %v1878, %v2033
        %v2263 = vadd.f32 %v1879, %v2038
        %v2264 = vadd.f32 %v1880, %v2043
        %v2265 = vadd.f32 %v1881, %v2048
        %v2266 = vadd.f32 %v1882, %v2053
        %v2267 = vadd.f32 %v1883, %v2058
        %v2268 = vadd.f32 %v1884, %v2063
        %v2269 = vadd.f32 %v1885, %v2068
        %v2270 = vadd.f32 %v1886, %v2073
        %v2271 = vadd.f32 %v1887, %v2078
        %v2272 = vadd.f32 %v1888, %v2083
        %v2273 = vadd.f32 %v1889, %v2088
        %v2274 = vadd.f32 %v1890, %v2093
        %v2275 = vadd.f32 %v1891, %v2098
        %v2276 = vadd.f32 %v1892, %v2103
        %v2277 = vadd.f32 %v1893, %v2108
        %v2278 = vadd.f32 %v1894, %v2113
        %v2279 = vadd.f32 %v1895, %v2118
        %v2280 = vadd.f32 %v1896, %v2123
        %v2281 = vadd.f32 %v1897, %v2128
        %v2282 = vadd.f32 %v1898, %v2133
        %v2283 = vadd.f32 %v1899, %v2138
        %v2284 = vadd.f32 %v1900, %v2143
        %v2285 = vadd.f32 %v1901, %v2148
        %v2286 = vadd.f32 %v1902, %v2153
        %v2287 = vadd.f32 %v1903, %v2158
        %v2288 = vadd.f32 %v1904, %v2163
        %v2289 = vadd.f32 %v1905, %v2168
        %v2290 = vadd.f32 %v1906, %v2173
        %v2291 = vadd.f32 %v1907, %v2178
        %v2292 = vadd.f32 %v1908, %v2183
        %v2293 = vadd.f32 %v1909, %v2188
        %v2294 = vadd.f32 %v1910, %v2193
        %v2295 = vadd.f32 %v1911, %v2198
        %v2296 = vadd.f32 %v1912, %v2203
        %v2297 = vadd.f32 %v1913, %v2208
        %v2298 = vadd.f32 %v1914, %v2213
        %v2299 = vadd.f32 %v1915, %v2218
        %v2300 = vadd.f32 %v1916, %v2223
        %v2301 = vadd.f32 %v1917, %v2228
        %v2302 = vadd.f32 %v1918, %v2233
        %v2303 = vadd.f32 %v1919, %v2238
        %v2304 = vmax.f32 %v2240, 0.0
        %v2305 = vmax.f32 %v2241, 0.0
        %v2306 = vmax.f32 %v2242, 0.0
        %v2307 = vmax.f32 %v2243, 0.0
        %v2308 = vmax.f32 %v2244, 0.0
        %v2309 = vmax.f32 %v2245, 0.0
        %v2310 = vmax.f32 %v2246, 0.0
        %v2311 = vmax.f32 %v2247, 0.0
        %v2312 = vmax.f32 %v2248, 0.0
        %v2313 = vmax.f32 %v2249, 0.0
        %v2314 = vmax.f32 %v2250, 0.0
        %v2315 = vmax.f32 %v2251, 0.0
        %v2316 = vmax.f32 %v2252, 0.0
        %v2317 = vmax.f32 %v2253, 0.0
        %v2318 = vmax.f32 %v2254, 0.0
        %v2319 = vmax.f32 %v2255, 0.0
        %v2320 = vmax.f32 %v2256, 0.0
        %v2321 = vmax.f32 %v2257, 0.0
        %v2322 = vmax.f32 %v2258, 0.0
        %v2323 = vmax.f32 %v2259, 0.0
        %v2324 = vmax.f32 %v2260, 0.0
        %v2325 = vmax.f32 %v2261, 0.0
        %v2326 = vmax.f32 %v2262, 0.0
        %v2327 = vmax.f32 %v2263, 0.0
        %v2328 = vmax.f32 %v2264, 0.0
        %v2329 = vmax.f32 %v2265, 0.0
        %v2330 = vmax.f32 %v2266, 0.0
        %v2331 = vmax.f32 %v2267, 0.0
        %v2332 = vmax.f32 %v2268, 0.0
        %v2333 = vmax.f32 %v2269, 0.0
        %v2334 = vmax.f32 %v2270, 0.0
        %v2335 = vmax.f32 %v2271, 0.0
        %v2336 = vmax.f32 %v2272, 0.0
        %v2337 = vmax.f32 %v2273, 0.0
        %v2338 = vmax.f32 %v2274, 0.0
        %v2339 = vmax.f32 %v2275, 0.0
        %v2340 = vmax.f32 %v2276, 0.0
        %v2341 = vmax.f32 %v2277, 0.0
        %v2342 = vmax.f32 %v2278, 0.0
        %v2343 = vmax.f32 %v2279, 0.0
        %v2344 = vmax.f32 %v2280, 0.0
        %v2345 = vmax.f32 %v2281, 0.0
        %v2346 = vmax.f32 %v2282, 0.0
        %v2347 = vmax.f32 %v2283, 0.0
        %v2348 = vmax.f32 %v2284, 0.0
        %v2349 = vmax.f32 %v2285, 0.0
        %v2350 = vmax.f32 %v2286, 0.0
        %v2351 = vmax.f32 %v2287, 0.0
        %v2352 = vmax.f32 %v2288, 0.0
        %v2353 = vmax.f32 %v2289, 0.0
        %v2354 = vmax.f32 %v2290, 0.0
        %v2355 = vmax.f32 %v2291, 0.0
        %v2356 = vmax.f32 %v2292, 0.0
        %v2357 = vmax.f32 %v2293, 0.0
        %v2358 = vmax.f32 %v2294, 0.0
        %v2359 = vmax.f32 %v2295, 0.0
        %v2360 = vmax.f32 %v2296, 0.0
        %v2361 = vmax.f32 %v2297, 0.0
        %v2362 = vmax.f32 %v2298, 0.0
        %v2363 = vmax.f32 %v2299, 0.0
        %v2364 = vmax.f32 %v2300, 0.0
        %v2365 = vmax.f32 %v2301, 0.0
        %v2366 = vmax.f32 %v2302, 0.0
        %v2367 = vmax.f32 %v2303, 0.0
        %v2368 = vld [vmem:[%s261] sm:$0xff]
        %v2369 = vld [vmem:[%s261 + $0x8] sm:$0xff]
        %v2370 = vld [vmem:[%s261 + $0x10] sm:$0xff]
        %v2371 = vld [vmem:[%s261 + $0x18] sm:$0xff]
        %v2372 = vld [vmem:[%s261 + $0x20] sm:$0xff]
        %v2373 = vld [vmem:[%s261 + $0x28] sm:$0xff]
        %v2374 = vld [vmem:[%s261 + $0x30] sm:$0xff]
        %v2375 = vld [vmem:[%s261 + $0x38] sm:$0xff]
        %v2376 = vld [vmem:[%s261 + $0x40] sm:$0xff]
        %v2377 = vld [vmem:[%s261 + $0x48] sm:$0xff]
        %v2378 = vld [vmem:[%s261 + $0x50] sm:$0xff]
        %v2379 = vld [vmem:[%s261 + $0x58] sm:$0xff]
        %v2380 = vld [vmem:[%s261 + $0x60] sm:$0xff]
        %v2381 = vld [vmem:[%s261 + $0x68] sm:$0xff]
        %v2382 = vld [vmem:[%s261 + $0x70] sm:$0xff]
        %v2383 = vld [vmem:[%s261 + $0x78] sm:$0xff]
        %v2384 = vld [vmem:[%s261 + $0x80] sm:$0xff]
        %v2385 = vld [vmem:[%s261 + $0x88] sm:$0xff]
        %v2386 = vld [vmem:[%s261 + $0x90] sm:$0xff]
        %v2387 = vld [vmem:[%s261 + $0x98] sm:$0xff]
        %v2388 = vld [vmem:[%s261 + $0xa0] sm:$0xff]
        %v2389 = vld [vmem:[%s261 + $0xa8] sm:$0xff]
        %v2390 = vld [vmem:[%s261 + $0xb0] sm:$0xff]
        %v2391 = vld [vmem:[%s261 + $0xb8] sm:$0xff]
        %v2392 = vld [vmem:[%s261 + $0xc0] sm:$0xff]
        %v2393 = vld [vmem:[%s261 + $0xc8] sm:$0xff]
        %v2394 = vld [vmem:[%s261 + $0xd0] sm:$0xff]
        %v2395 = vld [vmem:[%s261 + $0xd8] sm:$0xff]
        %v2396 = vld [vmem:[%s261 + $0xe0] sm:$0xff]
        %v2397 = vld [vmem:[%s261 + $0xe8] sm:$0xff]
        %v2398 = vld [vmem:[%s261 + $0xf0] sm:$0xff]
        %v2399 = vld [vmem:[%s261 + $0xf8] sm:$0xff]
        %v2400 = vld [vmem:[%s261 + $0x100] sm:$0xff]
        %v2401 = vld [vmem:[%s261 + $0x108] sm:$0xff]
        %v2402 = vld [vmem:[%s261 + $0x110] sm:$0xff]
        %v2403 = vld [vmem:[%s261 + $0x118] sm:$0xff]
        %v2404 = vld [vmem:[%s261 + $0x120] sm:$0xff]
        %v2405 = vld [vmem:[%s261 + $0x128] sm:$0xff]
        %v2406 = vld [vmem:[%s261 + $0x130] sm:$0xff]
        %v2407 = vld [vmem:[%s261 + $0x138] sm:$0xff]
        %v2408 = vld [vmem:[%s261 + $0x140] sm:$0xff]
        %v2409 = vld [vmem:[%s261 + $0x148] sm:$0xff]
        %v2410 = vld [vmem:[%s261 + $0x150] sm:$0xff]
        %v2411 = vld [vmem:[%s261 + $0x158] sm:$0xff]
        %v2412 = vld [vmem:[%s261 + $0x160] sm:$0xff]
        %v2413 = vld [vmem:[%s261 + $0x168] sm:$0xff]
        %v2414 = vld [vmem:[%s261 + $0x170] sm:$0xff]
        %v2415 = vld [vmem:[%s261 + $0x178] sm:$0xff]
        %v2416 = vld [vmem:[%s261 + $0x180] sm:$0xff]
        %v2417 = vld [vmem:[%s261 + $0x188] sm:$0xff]
        %v2418 = vld [vmem:[%s261 + $0x190] sm:$0xff]
        %v2419 = vld [vmem:[%s261 + $0x198] sm:$0xff]
        %v2420 = vld [vmem:[%s261 + $0x1a0] sm:$0xff]
        %v2421 = vld [vmem:[%s261 + $0x1a8] sm:$0xff]
        %v2422 = vld [vmem:[%s261 + $0x1b0] sm:$0xff]
        %v2423 = vld [vmem:[%s261 + $0x1b8] sm:$0xff]
        %v2424 = vld [vmem:[%s261 + $0x1c0] sm:$0xff]
        %v2425 = vld [vmem:[%s261 + $0x1c8] sm:$0xff]
        %v2426 = vld [vmem:[%s261 + $0x1d0] sm:$0xff]
        %v2427 = vld [vmem:[%s261 + $0x1d8] sm:$0xff]
        %v2428 = vld [vmem:[%s261 + $0x1e0] sm:$0xff]
        %v2429 = vld [vmem:[%s261 + $0x1e8] sm:$0xff]
        %v2430 = vld [vmem:[%s261 + $0x1f0] sm:$0xff]
        %v2431 = vld [vmem:[%s261 + $0x1f8] sm:$0xff]
        %v2432 = vld [vmem:[%s261 + $0x200] sm:$0xff]
        %v2433 = vld [vmem:[%s261 + $0x208] sm:$0xff]
        %v2434 = vld [vmem:[%s261 + $0x210] sm:$0xff]
        %v2435 = vld [vmem:[%s261 + $0x218] sm:$0xff]
        %v2436 = vld [vmem:[%s261 + $0x220] sm:$0xff]
        %v2437 = vld [vmem:[%s261 + $0x228] sm:$0xff]
        %v2438 = vld [vmem:[%s261 + $0x230] sm:$0xff]
        %v2439 = vld [vmem:[%s261 + $0x238] sm:$0xff]
        %v2440 = vld [vmem:[%s261 + $0x240] sm:$0xff]
        %v2441 = vld [vmem:[%s261 + $0x248] sm:$0xff]
        %v2442 = vld [vmem:[%s261 + $0x250] sm:$0xff]
        %v2443 = vld [vmem:[%s261 + $0x258] sm:$0xff]
        %v2444 = vld [vmem:[%s261 + $0x260] sm:$0xff]
        %v2445 = vld [vmem:[%s261 + $0x268] sm:$0xff]
        %v2446 = vld [vmem:[%s261 + $0x270] sm:$0xff]
        %v2447 = vld [vmem:[%s261 + $0x278] sm:$0xff]
        %v2448 = vld [vmem:[%s261 + $0x280] sm:$0xff]
        %v2449 = vld [vmem:[%s261 + $0x288] sm:$0xff]
        %v2450 = vld [vmem:[%s261 + $0x290] sm:$0xff]
        %v2451 = vld [vmem:[%s261 + $0x298] sm:$0xff]
        %v2452 = vld [vmem:[%s261 + $0x2a0] sm:$0xff]
        %v2453 = vld [vmem:[%s261 + $0x2a8] sm:$0xff]
        %v2454 = vld [vmem:[%s261 + $0x2b0] sm:$0xff]
        %v2455 = vld [vmem:[%s261 + $0x2b8] sm:$0xff]
        %v2456 = vld [vmem:[%s261 + $0x2c0] sm:$0xff]
        %v2457 = vld [vmem:[%s261 + $0x2c8] sm:$0xff]
        %v2458 = vld [vmem:[%s261 + $0x2d0] sm:$0xff]
        %v2459 = vld [vmem:[%s261 + $0x2d8] sm:$0xff]
        %v2460 = vld [vmem:[%s261 + $0x2e0] sm:$0xff]
        %v2461 = vld [vmem:[%s261 + $0x2e8] sm:$0xff]
        %v2462 = vld [vmem:[%s261 + $0x2f0] sm:$0xff]
        %v2463 = vld [vmem:[%s261 + $0x2f8] sm:$0xff]
        %v2464 = vld [vmem:[%s261 + $0x300] sm:$0xff]
        %v2465 = vld [vmem:[%s261 + $0x308] sm:$0xff]
        %v2466 = vld [vmem:[%s261 + $0x310] sm:$0xff]
        %v2467 = vld [vmem:[%s261 + $0x318] sm:$0xff]
        %v2468 = vld [vmem:[%s261 + $0x320] sm:$0xff]
        %v2469 = vld [vmem:[%s261 + $0x328] sm:$0xff]
        %v2470 = vld [vmem:[%s261 + $0x330] sm:$0xff]
        %v2471 = vld [vmem:[%s261 + $0x338] sm:$0xff]
        %v2472 = vld [vmem:[%s261 + $0x340] sm:$0xff]
        %v2473 = vld [vmem:[%s261 + $0x348] sm:$0xff]
        %v2474 = vld [vmem:[%s261 + $0x350] sm:$0xff]
        %v2475 = vld [vmem:[%s261 + $0x358] sm:$0xff]
        %v2476 = vld [vmem:[%s261 + $0x360] sm:$0xff]
        %v2477 = vld [vmem:[%s261 + $0x368] sm:$0xff]
        %v2478 = vld [vmem:[%s261 + $0x370] sm:$0xff]
        %v2479 = vld [vmem:[%s261 + $0x378] sm:$0xff]
        %v2480 = vld [vmem:[%s261 + $0x380] sm:$0xff]
        %v2481 = vld [vmem:[%s261 + $0x388] sm:$0xff]
        %v2482 = vld [vmem:[%s261 + $0x390] sm:$0xff]
        %v2483 = vld [vmem:[%s261 + $0x398] sm:$0xff]
        %v2484 = vld [vmem:[%s261 + $0x3a0] sm:$0xff]
        %v2485 = vld [vmem:[%s261 + $0x3a8] sm:$0xff]
        %v2486 = vld [vmem:[%s261 + $0x3b0] sm:$0xff]
        %v2487 = vld [vmem:[%s261 + $0x3b8] sm:$0xff]
        %v2488 = vld [vmem:[%s261 + $0x3c0] sm:$0xff]
        %v2489 = vld [vmem:[%s261 + $0x3c8] sm:$0xff]
        %v2490 = vld [vmem:[%s261 + $0x3d0] sm:$0xff]
        %v2491 = vld [vmem:[%s261 + $0x3d8] sm:$0xff]
        %v2492 = vld [vmem:[%s261 + $0x3e0] sm:$0xff]
        %v2493 = vld [vmem:[%s261 + $0x3e8] sm:$0xff]
        %v2494 = vld [vmem:[%s261 + $0x3f0] sm:$0xff]
        %v2495 = vld [vmem:[%s261 + $0x3f8] sm:$0xff]
        %2496 = vmatprep.subr.mxu0 0.0
        %2497 = vmatpush1.msra.mxu0 %v2304
        %2498 = vmatprep.subr.mxu0 0.0
        %2499 = vmatpush1.msra.mxu0 %v2305
        %2500 = vmatprep.subr.mxu0 0.0
        %2501 = vmatpush1.msra.mxu0 %v2306
        %2502 = vmatprep.subr.mxu0 0.0
        %2503 = vmatpush1.msra.mxu0 %v2307
        %2504 = vmatprep.subr.mxu0 0.0
        %2505 = vmatpush1.msra.mxu0 %v2308
        %2506 = vmatprep.subr.mxu0 0.0
        %2507 = vmatpush1.msra.mxu0 %v2309
        %2508 = vmatprep.subr.mxu0 0.0
        %2509 = vmatpush1.msra.mxu0 %v2310
        %2510 = vmatprep.subr.mxu0 0.0
        %2511 = vmatpush1.msra.mxu0 %v2311
        %2512 = vmatprep.subr.mxu0 0.0
        %2513 = vmatpush1.msra.mxu0 %v2312
        %2514 = vmatprep.subr.mxu0 0.0
        %2515 = vmatpush1.msra.mxu0 %v2313
        %2516 = vmatprep.subr.mxu0 0.0
        %2517 = vmatpush1.msra.mxu0 %v2314
        %2518 = vmatprep.subr.mxu0 0.0
        %2519 = vmatpush1.msra.mxu0 %v2315
        %2520 = vmatprep.subr.mxu0 0.0
        %2521 = vmatpush1.msra.mxu0 %v2316
        %2522 = vmatprep.subr.mxu0 0.0
        %2523 = vmatpush1.msra.mxu0 %v2317
        %2524 = vmatprep.subr.mxu0 0.0
        %2525 = vmatpush1.msra.mxu0 %v2318
        %2526 = vmatprep.subr.mxu0 0.0
        %2527 = vmatpush1.msra.mxu0 %v2319
        %2528 = vmatprep.subr.mxu0 0.0
        %2529 = vmatpush1.msra.mxu0 %v2320
        %2530 = vmatprep.subr.mxu0 0.0
        %2531 = vmatpush1.msra.mxu0 %v2321
        %2532 = vmatprep.subr.mxu0 0.0
        %2533 = vmatpush1.msra.mxu0 %v2322
        %2534 = vmatprep.subr.mxu0 0.0
        %2535 = vmatpush1.msra.mxu0 %v2323
        %2536 = vmatprep.subr.mxu0 0.0
        %2537 = vmatpush1.msra.mxu0 %v2324
        %2538 = vmatprep.subr.mxu0 0.0
        %2539 = vmatpush1.msra.mxu0 %v2325
        %2540 = vmatprep.subr.mxu0 0.0
        %2541 = vmatpush1.msra.mxu0 %v2326
        %2542 = vmatprep.subr.mxu0 0.0
        %2543 = vmatpush1.msra.mxu0 %v2327
        %2544 = vmatprep.subr.mxu0 0.0
        %2545 = vmatpush1.msra.mxu0 %v2328
        %2546 = vmatprep.subr.mxu0 0.0
        %2547 = vmatpush1.msra.mxu0 %v2329
        %2548 = vmatprep.subr.mxu0 0.0
        %2549 = vmatpush1.msra.mxu0 %v2330
        %2550 = vmatprep.subr.mxu0 0.0
        %2551 = vmatpush1.msra.mxu0 %v2331
        %2552 = vmatprep.subr.mxu0 0.0
        %2553 = vmatpush1.msra.mxu0 %v2332
        %2554 = vmatprep.subr.mxu0 0.0
        %2555 = vmatpush1.msra.mxu0 %v2333
        %2556 = vmatprep.subr.mxu0 0.0
        %2557 = vmatpush1.msra.mxu0 %v2334
        %2558 = vmatprep.subr.mxu0 0.0
        %2559 = vmatpush1.msra.mxu0 %v2335
        %2560 = vmatprep.mubr.f32.mxu0 %v2369
        %2561 = vmatmul.mubr.f32.gmra.mrb[0].mxu0 %v2368
        %v2562 = vpop.f32.mrb[0].mxu0
        %v2563 = vadd.f32 0.0, %v2562
        %v2564 = vpop.f32.mrb[0].mxu0
        %2565 = vmatprep.mubr.f32.mxu0 %v2373
        %2566 = vmatmul.mubr.f32.gmra.mrb[0].mxu0 %v2372
        %v2567 = vpop.f32.mrb[0].mxu0
        %v2568 = vadd.f32 0.0, %v2567
        %v2569 = vpop.f32.mrb[0].mxu0
        %2570 = vmatprep.mubr.f32.mxu0 %v2377
        %2571 = vmatmul.mubr.f32.gmra.mrb[0].mxu0 %v2376
        %v2572 = vpop.f32.mrb[0].mxu0
        %v2573 = vadd.f32 0.0, %v2572
        %v2574 = vpop.f32.mrb[0].mxu0
        %2575 = vmatprep.mubr.f32.mxu0 %v2381
        %2576 = vmatmul.mubr.f32.gmra.mrb[0].mxu0 %v2380
        %v2577 = vpop.f32.mrb[0].mxu0
        %v2578 = vadd.f32 0.0, %v2577
        %v2579 = vpop.f32.mrb[0].mxu0
        %2580 = vmatprep.mubr.f32.mxu0 %v2385
        %2581 = vmatmul.mubr.f32.gmra.mrb[0].mxu0 %v2384
        %v2582 = vpop.f32.mrb[0].mxu0
        %v2583 = vadd.f32 0.0, %v2582
        %v2584 = vpop.f32.mrb[0].mxu0
        %2585 = vmatprep.mubr.f32.mxu0 %v2389
        %2586 = vmatmul.mubr.f32.gmra.mrb[0].mxu0 %v2388
        %v2587 = vpop.f32.mrb[0].mxu0
        %v2588 = vadd.f32 0.0, %v2587
        %v2589 = vpop.f32.mrb[0].mxu0
        %2590 = vmatprep.mubr.f32.mxu0 %v2393
        %2591 = vmatmul.mubr.f32.gmra.mrb[0].mxu0 %v2392
        %v2592 = vpop.f32.mrb[0].mxu0
        %v2593 = vadd.f32 0.0, %v2592
        %v2594 = vpop.f32.mrb[0].mxu0
        %2595 = vmatprep.mubr.f32.mxu0 %v2397
        %2596 = vmatmul.mubr.f32.gmra.mrb[0].mxu0 %v2396
        %v2597 = vpop.f32.mrb[0].mxu0
        %v2598 = vadd.f32 0.0, %v2597
        %v2599 = vpop.f32.mrb[0].mxu0
        %2600 = vmatprep.mubr.f32.mxu0 %v2401
        %2601 = vmatmul.mubr.f32.gmra.mrb[0].mxu0 %v2400
        %v2602 = vpop.f32.mrb[0].mxu0
        %v2603 = vadd.f32 0.0, %v2602
        %v2604 = vpop.f32.mrb[0].mxu0
        %2605 = vmatprep.mubr.f32.mxu0 %v2405
        %2606 = vmatmul.mubr.f32.gmra.mrb[0].mxu0 %v2404
        %v2607 = vpop.f32.mrb[0].mxu0
        %v2608 = vadd.f32 0.0, %v2607
        %v2609 = vpop.f32.mrb[0].mxu0
        %2610 = vmatprep.mubr.f32.mxu0 %v2409
        %2611 = vmatmul.mubr.f32.gmra.mrb[0].mxu0 %v2408
        %v2612 = vpop.f32.mrb[0].mxu0
        %v2613 = vadd.f32 0.0, %v2612
        %v2614 = vpop.f32.mrb[0].mxu0
        %2615 = vmatprep.mubr.f32.mxu0 %v2413
        %2616 = vmatmul.mubr.f32.gmra.mrb[0].mxu0 %v2412
        %v2617 = vpop.f32.mrb[0].mxu0
        %v2618 = vadd.f32 0.0, %v2617
        %v2619 = vpop.f32.mrb[0].mxu0
        %2620 = vmatprep.mubr.f32.mxu0 %v2417
        %2621 = vmatmul.mubr.f32.gmra.mrb[0].mxu0 %v2416
        %v2622 = vpop.f32.mrb[0].mxu0
        %v2623 = vadd.f32 0.0, %v2622
        %v2624 = vpop.f32.mrb[0].mxu0
        %2625 = vmatprep.mubr.f32.mxu0 %v2421
        %2626 = vmatmul.mubr.f32.gmra.mrb[0].mxu0 %v2420
        %v2627 = vpop.f32.mrb[0].mxu0
        %v2628 = vadd.f32 0.0, %v2627
        %v2629 = vpop.f32.mrb[0].mxu0
        %2630 = vmatprep.mubr.f32.mxu0 %v2425
        %2631 = vmatmul.mubr.f32.gmra.mrb[0].mxu0 %v2424
        %v2632 = vpop.f32.mrb[0].mxu0
        %v2633 = vadd.f32 0.0, %v2632
        %v2634 = vpop.f32.mrb[0].mxu0
        %2635 = vmatprep.mubr.f32.mxu0 %v2429
        %2636 = vmatmul.mubr.f32.gmra.mrb[0].mxu0 %v2428
        %v2637 = vpop.f32.mrb[0].mxu0
        %v2638 = vadd.f32 0.0, %v2637
        %v2639 = vpop.f32.mrb[0].mxu0
        %2640 = vmatprep.mubr.f32.mxu0 %v2433
        %2641 = vmatmul.mubr.f32.gmra.mrb[0].mxu0 %v2432
        %v2642 = vpop.f32.mrb[0].mxu0
        %v2643 = vadd.f32 0.0, %v2642
        %v2644 = vpop.f32.mrb[0].mxu0
        %2645 = vmatprep.mubr.f32.mxu0 %v2437
        %2646 = vmatmul.mubr.f32.gmra.mrb[0].mxu0 %v2436
        %v2647 = vpop.f32.mrb[0].mxu0
        %v2648 = vadd.f32 0.0, %v2647
        %v2649 = vpop.f32.mrb[0].mxu0
        %2650 = vmatprep.mubr.f32.mxu0 %v2441
        %2651 = vmatmul.mubr.f32.gmra.mrb[0].mxu0 %v2440
        %v2652 = vpop.f32.mrb[0].mxu0
        %v2653 = vadd.f32 0.0, %v2652
        %v2654 = vpop.f32.mrb[0].mxu0
        %2655 = vmatprep.mubr.f32.mxu0 %v2445
        %2656 = vmatmul.mubr.f32.gmra.mrb[0].mxu0 %v2444
        %v2657 = vpop.f32.mrb[0].mxu0
        %v2658 = vadd.f32 0.0, %v2657
        %v2659 = vpop.f32.mrb[0].mxu0
        %2660 = vmatprep.mubr.f32.mxu0 %v2449
        %2661 = vmatmul.mubr.f32.gmra.mrb[0].mxu0 %v2448
        %v2662 = vpop.f32.mrb[0].mxu0
        %v2663 = vadd.f32 0.0, %v2662
        %v2664 = vpop.f32.mrb[0].mxu0
        %2665 = vmatprep.mubr.f32.mxu0 %v2453
        %2666 = vmatmul.mubr.f32.gmra.mrb[0].mxu0 %v2452
        %v2667 = vpop.f32.mrb[0].mxu0
        %v2668 = vadd.f32 0.0, %v2667
        %v2669 = vpop.f32.mrb[0].mxu0
        %2670 = vmatprep.mubr.f32.mxu0 %v2457
        %2671 = vmatmul.mubr.f32.gmra.mrb[0].mxu0 %v2456
        %v2672 = vpop.f32.mrb[0].mxu0
        %v2673 = vadd.f32 0.0, %v2672
        %v2674 = vpop.f32.mrb[0].mxu0
        %2675 = vmatprep.mubr.f32.mxu0 %v2461
        %2676 = vmatmul.mubr.f32.gmra.mrb[0].mxu0 %v2460
        %v2677 = vpop.f32.mrb[0].mxu0
        %v2678 = vadd.f32 0.0, %v2677
        %v2679 = vpop.f32.mrb[0].mxu0
        %2680 = vmatprep.mubr.f32.mxu0 %v2465
        %2681 = vmatmul.mubr.f32.gmra.mrb[0].mxu0 %v2464
        %v2682 = vpop.f32.mrb[0].mxu0
        %v2683 = vadd.f32 0.0, %v2682
        %v2684 = vpop.f32.mrb[0].mxu0
        %2685 = vmatprep.mubr.f32.mxu0 %v2469
        %2686 = vmatmul.mubr.f32.gmra.mrb[0].mxu0 %v2468
        %v2687 = vpop.f32.mrb[0].mxu0
        %v2688 = vadd.f32 0.0, %v2687
        %v2689 = vpop.f32.mrb[0].mxu0
        %2690 = vmatprep.mubr.f32.mxu0 %v2473
        %2691 = vmatmul.mubr.f32.gmra.mrb[0].mxu0 %v2472
        %v2692 = vpop.f32.mrb[0].mxu0
        %v2693 = vadd.f32 0.0, %v2692
        %v2694 = vpop.f32.mrb[0].mxu0
        %2695 = vmatprep.mubr.f32.mxu0 %v2477
        %2696 = vmatmul.mubr.f32.gmra.mrb[0].mxu0 %v2476
        %v2697 = vpop.f32.mrb[0].mxu0
        %v2698 = vadd.f32 0.0, %v2697
        %v2699 = vpop.f32.mrb[0].mxu0
        %2700 = vmatprep.mubr.f32.mxu0 %v2481
        %2701 = vmatmul.mubr.f32.gmra.mrb[0].mxu0 %v2480
        %v2702 = vpop.f32.mrb[0].mxu0
        %v2703 = vadd.f32 0.0, %v2702
        %v2704 = vpop.f32.mrb[0].mxu0
        %2705 = vmatprep.mubr.f32.mxu0 %v2485
        %2706 = vmatmul.mubr.f32.gmra.mrb[0].mxu0 %v2484
        %v2707 = vpop.f32.mrb[0].mxu0
        %v2708 = vadd.f32 0.0, %v2707
        %v2709 = vpop.f32.mrb[0].mxu0
        %2710 = vmatprep.mubr.f32.mxu0 %v2489
        %2711 = vmatmul.mubr.f32.gmra.mrb[0].mxu0 %v2488
        %v2712 = vpop.f32.mrb[0].mxu0
        %v2713 = vadd.f32 0.0, %v2712
        %v2714 = vpop.f32.mrb[0].mxu0
        %2715 = vmatprep.mubr.f32.mxu0 %v2493
        %2716 = vmatmul.mubr.f32.gmra.mrb[0].mxu0 %v2492
        %v2717 = vpop.f32.mrb[0].mxu0
        %v2718 = vadd.f32 0.0, %v2717
        %v2719 = vpop.f32.mrb[0].mxu0
        %2720 = vdwg.mxu0
        %2721 = vmatprep.subr.mxu0 0.0
        %2722 = vmatpush1.msra.mxu0 %v2336
        %2723 = vmatprep.subr.mxu0 0.0
        %2724 = vmatpush1.msra.mxu0 %v2337
        %2725 = vmatprep.subr.mxu0 0.0
        %2726 = vmatpush1.msra.mxu0 %v2338
        %2727 = vmatprep.subr.mxu0 0.0
        %2728 = vmatpush1.msra.mxu0 %v2339
        %2729 = vmatprep.subr.mxu0 0.0
        %2730 = vmatpush1.msra.mxu0 %v2340
        %2731 = vmatprep.subr.mxu0 0.0
        %2732 = vmatpush1.msra.mxu0 %v2341
        %2733 = vmatprep.subr.mxu0 0.0
        %2734 = vmatpush1.msra.mxu0 %v2342
        %2735 = vmatprep.subr.mxu0 0.0
        %2736 = vmatpush1.msra.mxu0 %v2343
        %2737 = vmatprep.subr.mxu0 0.0
        %2738 = vmatpush1.msra.mxu0 %v2344
        %2739 = vmatprep.subr.mxu0 0.0
        %2740 = vmatpush1.msra.mxu0 %v2345
        %2741 = vmatprep.subr.mxu0 0.0
        %2742 = vmatpush1.msra.mxu0 %v2346
        %2743 = vmatprep.subr.mxu0 0.0
        %2744 = vmatpush1.msra.mxu0 %v2347
        %2745 = vmatprep.subr.mxu0 0.0
        %2746 = vmatpush1.msra.mxu0 %v2348
        %2747 = vmatprep.subr.mxu0 0.0
        %2748 = vmatpush1.msra.mxu0 %v2349
        %2749 = vmatprep.subr.mxu0 0.0
        %2750 = vmatpush1.msra.mxu0 %v2350
        %2751 = vmatprep.subr.mxu0 0.0
        %2752 = vmatpush1.msra.mxu0 %v2351
        %2753 = vmatprep.subr.mxu0 0.0
        %2754 = vmatpush1.msra.mxu0 %v2352
        %2755 = vmatprep.subr.mxu0 0.0
        %2756 = vmatpush1.msra.mxu0 %v2353
        %2757 = vmatprep.subr.mxu0 0.0
        %2758 = vmatpush1.msra.mxu0 %v2354
        %2759 = vmatprep.subr.mxu0 0.0
        %2760 = vmatpush1.msra.mxu0 %v2355
        %2761 = vmatprep.subr.mxu0 0.0
        %2762 = vmatpush1.msra.mxu0 %v2356
        %2763 = vmatprep.subr.mxu0 0.0
        %2764 = vmatpush1.msra.mxu0 %v2357
        %2765 = vmatprep.subr.mxu0 0.0
        %2766 = vmatpush1.msra.mxu0 %v2358
        %2767 = vmatprep.subr.mxu0 0.0
        %2768 = vmatpush1.msra.mxu0 %v2359
        %2769 = vmatprep.subr.mxu0 0.0
        %2770 = vmatpush1.msra.mxu0 %v2360
        %2771 = vmatprep.subr.mxu0 0.0
        %2772 = vmatpush1.msra.mxu0 %v2361
        %2773 = vmatprep.subr.mxu0 0.0
        %2774 = vmatpush1.msra.mxu0 %v2362
        %2775 = vmatprep.subr.mxu0 0.0
        %2776 = vmatpush1.msra.mxu0 %v2363
        %2777 = vmatprep.subr.mxu0 0.0
        %2778 = vmatpush1.msra.mxu0 %v2364
        %2779 = vmatprep.subr.mxu0 0.0
        %2780 = vmatpush1.msra.mxu0 %v2365
        %2781 = vmatprep.subr.mxu0 0.0
        %2782 = vmatpush1.msra.mxu0 %v2366
        %2783 = vmatprep.subr.mxu0 0.0
        %2784 = vmatpush1.msra.mxu0 %v2367
        %2785 = vmatprep.mubr.f32.mxu0 %v2371
        %2786 = vmatmul.mubr.f32.gmra.mrb[0].mxu0 %v2370
        %v2787 = vpop.f32.mrb[0].mxu0
        %v2788 = vadd.f32 %v2563, %v2787
        %v2789 = vpop.f32.mrb[0].mxu0
        %2790 = vmatprep.mubr.f32.mxu0 %v2375
        %2791 = vmatmul.mubr.f32.gmra.mrb[0].mxu0 %v2374
        %v2792 = vpop.f32.mrb[0].mxu0
        %v2793 = vadd.f32 %v2568, %v2792
        %v2794 = vpop.f32.mrb[0].mxu0
        %2795 = vmatprep.mubr.f32.mxu0 %v2379
        %2796 = vmatmul.mubr.f32.gmra.mrb[0].mxu0 %v2378
        %v2797 = vpop.f32.mrb[0].mxu0
        %v2798 = vadd.f32 %v2573, %v2797
        %v2799 = vpop.f32.mrb[0].mxu0
        %2800 = vmatprep.mubr.f32.mxu0 %v2383
        %2801 = vmatmul.mubr.f32.gmra.mrb[0].mxu0 %v2382
        %v2802 = vpop.f32.mrb[0].mxu0
        %v2803 = vadd.f32 %v2578, %v2802
        %v2804 = vpop.f32.mrb[0].mxu0
        %2805 = vmatprep.mubr.f32.mxu0 %v2387
        %2806 = vmatmul.mubr.f32.gmra.mrb[0].mxu0 %v2386
        %v2807 = vpop.f32.mrb[0].mxu0
        %v2808 = vadd.f32 %v2583, %v2807
        %v2809 = vpop.f32.mrb[0].mxu0
        %2810 = vmatprep.mubr.f32.mxu0 %v2391
        %2811 = vmatmul.mubr.f32.gmra.mrb[0].mxu0 %v2390
        %v2812 = vpop.f32.mrb[0].mxu0
        %v2813 = vadd.f32 %v2588, %v2812
        %v2814 = vpop.f32.mrb[0].mxu0
        %2815 = vmatprep.mubr.f32.mxu0 %v2395
        %2816 = vmatmul.mubr.f32.gmra.mrb[0].mxu0 %v2394
        %v2817 = vpop.f32.mrb[0].mxu0
        %v2818 = vadd.f32 %v2593, %v2817
        %v2819 = vpop.f32.mrb[0].mxu0
        %2820 = vmatprep.mubr.f32.mxu0 %v2399
        %2821 = vmatmul.mubr.f32.gmra.mrb[0].mxu0 %v2398
        %v2822 = vpop.f32.mrb[0].mxu0
        %v2823 = vadd.f32 %v2598, %v2822
        %v2824 = vpop.f32.mrb[0].mxu0
        %2825 = vmatprep.mubr.f32.mxu0 %v2403
        %2826 = vmatmul.mubr.f32.gmra.mrb[0].mxu0 %v2402
        %v2827 = vpop.f32.mrb[0].mxu0
        %v2828 = vadd.f32 %v2603, %v2827
        %v2829 = vpop.f32.mrb[0].mxu0
        %2830 = vmatprep.mubr.f32.mxu0 %v2407
        %2831 = vmatmul.mubr.f32.gmra.mrb[0].mxu0 %v2406
        %v2832 = vpop.f32.mrb[0].mxu0
        %v2833 = vadd.f32 %v2608, %v2832
        %v2834 = vpop.f32.mrb[0].mxu0
        %2835 = vmatprep.mubr.f32.mxu0 %v2411
        %2836 = vmatmul.mubr.f32.gmra.mrb[0].mxu0 %v2410
        %v2837 = vpop.f32.mrb[0].mxu0
        %v2838 = vadd.f32 %v2613, %v2837
        %v2839 = vpop.f32.mrb[0].mxu0
        %2840 = vmatprep.mubr.f32.mxu0 %v2415
        %2841 = vmatmul.mubr.f32.gmra.mrb[0].mxu0 %v2414
        %v2842 = vpop.f32.mrb[0].mxu0
        %v2843 = vadd.f32 %v2618, %v2842
        %v2844 = vpop.f32.mrb[0].mxu0
        %2845 = vmatprep.mubr.f32.mxu0 %v2419
        %2846 = vmatmul.mubr.f32.gmra.mrb[0].mxu0 %v2418
        %v2847 = vpop.f32.mrb[0].mxu0
        %v2848 = vadd.f32 %v2623, %v2847
        %v2849 = vpop.f32.mrb[0].mxu0
        %2850 = vmatprep.mubr.f32.mxu0 %v2423
        %2851 = vmatmul.mubr.f32.gmra.mrb[0].mxu0 %v2422
        %v2852 = vpop.f32.mrb[0].mxu0
        %v2853 = vadd.f32 %v2628, %v2852
        %v2854 = vpop.f32.mrb[0].mxu0
        %2855 = vmatprep.mubr.f32.mxu0 %v2427
        %2856 = vmatmul.mubr.f32.gmra.mrb[0].mxu0 %v2426
        %v2857 = vpop.f32.mrb[0].mxu0
        %v2858 = vadd.f32 %v2633, %v2857
        %v2859 = vpop.f32.mrb[0].mxu0
        %2860 = vmatprep.mubr.f32.mxu0 %v2431
        %2861 = vmatmul.mubr.f32.gmra.mrb[0].mxu0 %v2430
        %v2862 = vpop.f32.mrb[0].mxu0
        %v2863 = vadd.f32 %v2638, %v2862
        %v2864 = vpop.f32.mrb[0].mxu0
        %2865 = vmatprep.mubr.f32.mxu0 %v2435
        %2866 = vmatmul.mubr.f32.gmra.mrb[0].mxu0 %v2434
        %v2867 = vpop.f32.mrb[0].mxu0
        %v2868 = vadd.f32 %v2643, %v2867
        %v2869 = vpop.f32.mrb[0].mxu0
        %2870 = vmatprep.mubr.f32.mxu0 %v2439
        %2871 = vmatmul.mubr.f32.gmra.mrb[0].mxu0 %v2438
        %v2872 = vpop.f32.mrb[0].mxu0
        %v2873 = vadd.f32 %v2648, %v2872
        %v2874 = vpop.f32.mrb[0].mxu0
        %2875 = vmatprep.mubr.f32.mxu0 %v2443
        %2876 = vmatmul.mubr.f32.gmra.mrb[0].mxu0 %v2442
        %v2877 = vpop.f32.mrb[0].mxu0
        %v2878 = vadd.f32 %v2653, %v2877
        %v2879 = vpop.f32.mrb[0].mxu0
        %2880 = vmatprep.mubr.f32.mxu0 %v2447
        %2881 = vmatmul.mubr.f32.gmra.mrb[0].mxu0 %v2446
        %v2882 = vpop.f32.mrb[0].mxu0
        %v2883 = vadd.f32 %v2658, %v2882
        %v2884 = vpop.f32.mrb[0].mxu0
        %2885 = vmatprep.mubr.f32.mxu0 %v2451
        %2886 = vmatmul.mubr.f32.gmra.mrb[0].mxu0 %v2450
        %v2887 = vpop.f32.mrb[0].mxu0
        %v2888 = vadd.f32 %v2663, %v2887
        %v2889 = vpop.f32.mrb[0].mxu0
        %2890 = vmatprep.mubr.f32.mxu0 %v2455
        %2891 = vmatmul.mubr.f32.gmra.mrb[0].mxu0 %v2454
        %v2892 = vpop.f32.mrb[0].mxu0
        %v2893 = vadd.f32 %v2668, %v2892
        %v2894 = vpop.f32.mrb[0].mxu0
        %2895 = vmatprep.mubr.f32.mxu0 %v2459
        %2896 = vmatmul.mubr.f32.gmra.mrb[0].mxu0 %v2458
        %v2897 = vpop.f32.mrb[0].mxu0
        %v2898 = vadd.f32 %v2673, %v2897
        %v2899 = vpop.f32.mrb[0].mxu0
        %2900 = vmatprep.mubr.f32.mxu0 %v2463
        %2901 = vmatmul.mubr.f32.gmra.mrb[0].mxu0 %v2462
        %v2902 = vpop.f32.mrb[0].mxu0
        %v2903 = vadd.f32 %v2678, %v2902
        %v2904 = vpop.f32.mrb[0].mxu0
        %2905 = vmatprep.mubr.f32.mxu0 %v2467
        %2906 = vmatmul.mubr.f32.gmra.mrb[0].mxu0 %v2466
        %v2907 = vpop.f32.mrb[0].mxu0
        %v2908 = vadd.f32 %v2683, %v2907
        %v2909 = vpop.f32.mrb[0].mxu0
        %2910 = vmatprep.mubr.f32.mxu0 %v2471
        %2911 = vmatmul.mubr.f32.gmra.mrb[0].mxu0 %v2470
        %v2912 = vpop.f32.mrb[0].mxu0
        %v2913 = vadd.f32 %v2688, %v2912
        %v2914 = vpop.f32.mrb[0].mxu0
        %2915 = vmatprep.mubr.f32.mxu0 %v2475
        %2916 = vmatmul.mubr.f32.gmra.mrb[0].mxu0 %v2474
        %v2917 = vpop.f32.mrb[0].mxu0
        %v2918 = vadd.f32 %v2693, %v2917
        %v2919 = vpop.f32.mrb[0].mxu0
        %2920 = vmatprep.mubr.f32.mxu0 %v2479
        %2921 = vmatmul.mubr.f32.gmra.mrb[0].mxu0 %v2478
        %v2922 = vpop.f32.mrb[0].mxu0
        %v2923 = vadd.f32 %v2698, %v2922
        %v2924 = vpop.f32.mrb[0].mxu0
        %2925 = vmatprep.mubr.f32.mxu0 %v2483
        %2926 = vmatmul.mubr.f32.gmra.mrb[0].mxu0 %v2482
        %v2927 = vpop.f32.mrb[0].mxu0
        %v2928 = vadd.f32 %v2703, %v2927
        %v2929 = vpop.f32.mrb[0].mxu0
        %2930 = vmatprep.mubr.f32.mxu0 %v2487
        %2931 = vmatmul.mubr.f32.gmra.mrb[0].mxu0 %v2486
        %v2932 = vpop.f32.mrb[0].mxu0
        %v2933 = vadd.f32 %v2708, %v2932
        %v2934 = vpop.f32.mrb[0].mxu0
        %2935 = vmatprep.mubr.f32.mxu0 %v2491
        %2936 = vmatmul.mubr.f32.gmra.mrb[0].mxu0 %v2490
        %v2937 = vpop.f32.mrb[0].mxu0
        %v2938 = vadd.f32 %v2713, %v2937
        %v2939 = vpop.f32.mrb[0].mxu0
        %2940 = vmatprep.mubr.f32.mxu0 %v2495
        %2941 = vmatmul.mubr.f32.gmra.mrb[0].mxu0 %v2494
        %v2942 = vpop.f32.mrb[0].mxu0
        %v2943 = vadd.f32 %v2718, %v2942
        %v2944 = vpop.f32.mrb[0].mxu0
        %2945 = vdwg.mxu0
        %v2946 = vsel %vm383, %v2788, 0.0
        %2947 = vadd.xlane.f32.xlu0 %v2946
        %v2948 = vpop.xlane.xlu0 %2947
        %v2949 = vsel %vm383, %v2793, 0.0
        %2950 = vadd.xlane.f32.xlu0 %v2949
        %v2951 = vpop.xlane.xlu0 %2950
        %v2952 = vsel %vm383, %v2798, 0.0
        %2953 = vadd.xlane.f32.xlu0 %v2952
        %v2954 = vpop.xlane.xlu0 %2953
        %v2955 = vsel %vm383, %v2803, 0.0
        %2956 = vadd.xlane.f32.xlu0 %v2955
        %v2957 = vpop.xlane.xlu0 %2956
        %v2958 = vsel %vm383, %v2808, 0.0
        %2959 = vadd.xlane.f32.xlu0 %v2958
        %v2960 = vpop.xlane.xlu0 %2959
        %v2961 = vsel %vm383, %v2813, 0.0
        %2962 = vadd.xlane.f32.xlu0 %v2961
        %v2963 = vpop.xlane.xlu0 %2962
        %v2964 = vsel %vm383, %v2818, 0.0
        %2965 = vadd.xlane.f32.xlu0 %v2964
        %v2966 = vpop.xlane.xlu0 %2965
        %v2967 = vsel %vm383, %v2823, 0.0
        %2968 = vadd.xlane.f32.xlu0 %v2967
        %v2969 = vpop.xlane.xlu0 %2968
        %v2970 = vsel %vm383, %v2828, 0.0
        %2971 = vadd.xlane.f32.xlu0 %v2970
        %v2972 = vpop.xlane.xlu0 %2971
        %v2973 = vsel %vm383, %v2833, 0.0
        %2974 = vadd.xlane.f32.xlu0 %v2973
        %v2975 = vpop.xlane.xlu0 %2974
        %v2976 = vsel %vm383, %v2838, 0.0
        %2977 = vadd.xlane.f32.xlu0 %v2976
        %v2978 = vpop.xlane.xlu0 %2977
        %v2979 = vsel %vm383, %v2843, 0.0
        %2980 = vadd.xlane.f32.xlu0 %v2979
        %v2981 = vpop.xlane.xlu0 %2980
        %v2982 = vsel %vm383, %v2848, 0.0
        %2983 = vadd.xlane.f32.xlu0 %v2982
        %v2984 = vpop.xlane.xlu0 %2983
        %v2985 = vsel %vm383, %v2853, 0.0
        %2986 = vadd.xlane.f32.xlu0 %v2985
        %v2987 = vpop.xlane.xlu0 %2986
        %v2988 = vsel %vm383, %v2858, 0.0
        %2989 = vadd.xlane.f32.xlu0 %v2988
        %v2990 = vpop.xlane.xlu0 %2989
        %v2991 = vsel %vm383, %v2863, 0.0
        %2992 = vadd.xlane.f32.xlu0 %v2991
        %v2993 = vpop.xlane.xlu0 %2992
        %v2994 = vsel %vm383, %v2868, 0.0
        %2995 = vadd.xlane.f32.xlu0 %v2994
        %v2996 = vpop.xlane.xlu0 %2995
        %v2997 = vsel %vm383, %v2873, 0.0
        %2998 = vadd.xlane.f32.xlu0 %v2997
        %v2999 = vpop.xlane.xlu0 %2998
        %v3000 = vsel %vm383, %v2878, 0.0
        %3001 = vadd.xlane.f32.xlu0 %v3000
        %v3002 = vpop.xlane.xlu0 %3001
        %v3003 = vsel %vm383, %v2883, 0.0
        %3004 = vadd.xlane.f32.xlu0 %v3003
        %v3005 = vpop.xlane.xlu0 %3004
        %v3006 = vsel %vm383, %v2888, 0.0
        %3007 = vadd.xlane.f32.xlu0 %v3006
        %v3008 = vpop.xlane.xlu0 %3007
        %v3009 = vsel %vm383, %v2893, 0.0
        %3010 = vadd.xlane.f32.xlu0 %v3009
        %v3011 = vpop.xlane.xlu0 %3010
        %v3012 = vsel %vm383, %v2898, 0.0
        %3013 = vadd.xlane.f32.xlu0 %v3012
        %v3014 = vpop.xlane.xlu0 %3013
        %v3015 = vsel %vm383, %v2903, 0.0
        %3016 = vadd.xlane.f32.xlu0 %v3015
        %v3017 = vpop.xlane.xlu0 %3016
        %v3018 = vsel %vm383, %v2908, 0.0
        %3019 = vadd.xlane.f32.xlu0 %v3018
        %v3020 = vpop.xlane.xlu0 %3019
        %v3021 = vsel %vm383, %v2913, 0.0
        %3022 = vadd.xlane.f32.xlu0 %v3021
        %v3023 = vpop.xlane.xlu0 %3022
        %v3024 = vsel %vm383, %v2918, 0.0
        %3025 = vadd.xlane.f32.xlu0 %v3024
        %v3026 = vpop.xlane.xlu0 %3025
        %v3027 = vsel %vm383, %v2923, 0.0
        %3028 = vadd.xlane.f32.xlu0 %v3027
        %v3029 = vpop.xlane.xlu0 %3028
        %v3030 = vsel %vm383, %v2928, 0.0
        %3031 = vadd.xlane.f32.xlu0 %v3030
        %v3032 = vpop.xlane.xlu0 %3031
        %v3033 = vsel %vm383, %v2933, 0.0
        %3034 = vadd.xlane.f32.xlu0 %v3033
        %v3035 = vpop.xlane.xlu0 %3034
        %v3036 = vsel %vm383, %v2938, 0.0
        %3037 = vadd.xlane.f32.xlu0 %v3036
        %v3038 = vpop.xlane.xlu0 %3037
        %v3039 = vsel %vm383, %v2943, 0.0
        %3040 = vadd.xlane.f32.xlu0 %v3039
        %v3041 = vpop.xlane.xlu0 %3040
        %v3042 = vmul.f32 %v2948, 0.020408163
        %v3043 = vmul.f32 %v2951, 0.020408163
        %v3044 = vmul.f32 %v2954, 0.020408163
        %v3045 = vmul.f32 %v2957, 0.020408163
        %v3046 = vmul.f32 %v2960, 0.020408163
        %v3047 = vmul.f32 %v2963, 0.020408163
        %v3048 = vmul.f32 %v2966, 0.020408163
        %v3049 = vmul.f32 %v2969, 0.020408163
        %v3050 = vmul.f32 %v2972, 0.020408163
        %v3051 = vmul.f32 %v2975, 0.020408163
        %v3052 = vmul.f32 %v2978, 0.020408163
        %v3053 = vmul.f32 %v2981, 0.020408163
        %v3054 = vmul.f32 %v2984, 0.020408163
        %v3055 = vmul.f32 %v2987, 0.020408163
        %v3056 = vmul.f32 %v2990, 0.020408163
        %v3057 = vmul.f32 %v2993, 0.020408163
        %v3058 = vmul.f32 %v2996, 0.020408163
        %v3059 = vmul.f32 %v2999, 0.020408163
        %v3060 = vmul.f32 %v3002, 0.020408163
        %v3061 = vmul.f32 %v3005, 0.020408163
        %v3062 = vmul.f32 %v3008, 0.020408163
        %v3063 = vmul.f32 %v3011, 0.020408163
        %v3064 = vmul.f32 %v3014, 0.020408163
        %v3065 = vmul.f32 %v3017, 0.020408163
        %v3066 = vmul.f32 %v3020, 0.020408163
        %v3067 = vmul.f32 %v3023, 0.020408163
        %v3068 = vmul.f32 %v3026, 0.020408163
        %v3069 = vmul.f32 %v3029, 0.020408163
        %v3070 = vmul.f32 %v3032, 0.020408163
        %v3071 = vmul.f32 %v3035, 0.020408163
        %v3072 = vmul.f32 %v3038, 0.020408163
        %v3073 = vmul.f32 %v3041, 0.020408163
        %v3074 = vmul.f32 %v2788, %v2788
        %v3075 = vmul.f32 %v2793, %v2793
        %v3076 = vmul.f32 %v2798, %v2798
        %v3077 = vmul.f32 %v2803, %v2803
        %v3078 = vmul.f32 %v2808, %v2808
        %v3079 = vmul.f32 %v2813, %v2813
        %v3080 = vmul.f32 %v2818, %v2818
        %v3081 = vmul.f32 %v2823, %v2823
        %v3082 = vmul.f32 %v2828, %v2828
        %v3083 = vmul.f32 %v2833, %v2833
        %v3084 = vmul.f32 %v2838, %v2838
        %v3085 = vmul.f32 %v2843, %v2843
        %v3086 = vmul.f32 %v2848, %v2848
        %v3087 = vmul.f32 %v2853, %v2853
        %v3088 = vmul.f32 %v2858, %v2858
        %v3089 = vmul.f32 %v2863, %v2863
        %v3090 = vmul.f32 %v2868, %v2868
        %v3091 = vmul.f32 %v2873, %v2873
        %v3092 = vmul.f32 %v2878, %v2878
        %v3093 = vmul.f32 %v2883, %v2883
        %v3094 = vmul.f32 %v2888, %v2888
        %v3095 = vmul.f32 %v2893, %v2893
        %v3096 = vmul.f32 %v2898, %v2898
        %v3097 = vmul.f32 %v2903, %v2903
        %v3098 = vmul.f32 %v2908, %v2908
        %v3099 = vmul.f32 %v2913, %v2913
        %v3100 = vmul.f32 %v2918, %v2918
        %v3101 = vmul.f32 %v2923, %v2923
        %v3102 = vmul.f32 %v2928, %v2928
        %v3103 = vmul.f32 %v2933, %v2933
        %v3104 = vmul.f32 %v2938, %v2938
        %v3105 = vmul.f32 %v2943, %v2943
        %v3106 = vsel %vm383, %v3074, 0.0
        %3107 = vadd.xlane.f32.xlu0 %v3106
        %v3108 = vpop.xlane.xlu0 %3107
        %v3109 = vsel %vm383, %v3075, 0.0
        %3110 = vadd.xlane.f32.xlu0 %v3109
        %v3111 = vpop.xlane.xlu0 %3110
        %v3112 = vsel %vm383, %v3076, 0.0
        %3113 = vadd.xlane.f32.xlu0 %v3112
        %v3114 = vpop.xlane.xlu0 %3113
        %v3115 = vsel %vm383, %v3077, 0.0
        %3116 = vadd.xlane.f32.xlu0 %v3115
        %v3117 = vpop.xlane.xlu0 %3116
        %v3118 = vsel %vm383, %v3078, 0.0
        %3119 = vadd.xlane.f32.xlu0 %v3118
        %v3120 = vpop.xlane.xlu0 %3119
        %v3121 = vsel %vm383, %v3079, 0.0
        %3122 = vadd.xlane.f32.xlu0 %v3121
        %v3123 = vpop.xlane.xlu0 %3122
        %v3124 = vsel %vm383, %v3080, 0.0
        %3125 = vadd.xlane.f32.xlu0 %v3124
        %v3126 = vpop.xlane.xlu0 %3125
        %v3127 = vsel %vm383, %v3081, 0.0
        %3128 = vadd.xlane.f32.xlu0 %v3127
        %v3129 = vpop.xlane.xlu0 %3128
        %v3130 = vsel %vm383, %v3082, 0.0
        %3131 = vadd.xlane.f32.xlu0 %v3130
        %v3132 = vpop.xlane.xlu0 %3131
        %v3133 = vsel %vm383, %v3083, 0.0
        %3134 = vadd.xlane.f32.xlu0 %v3133
        %v3135 = vpop.xlane.xlu0 %3134
        %v3136 = vsel %vm383, %v3084, 0.0
        %3137 = vadd.xlane.f32.xlu0 %v3136
        %v3138 = vpop.xlane.xlu0 %3137
        %v3139 = vsel %vm383, %v3085, 0.0
        %3140 = vadd.xlane.f32.xlu0 %v3139
        %v3141 = vpop.xlane.xlu0 %3140
        %v3142 = vsel %vm383, %v3086, 0.0
        %3143 = vadd.xlane.f32.xlu0 %v3142
        %v3144 = vpop.xlane.xlu0 %3143
        %v3145 = vsel %vm383, %v3087, 0.0
        %3146 = vadd.xlane.f32.xlu0 %v3145
        %v3147 = vpop.xlane.xlu0 %3146
        %v3148 = vsel %vm383, %v3088, 0.0
        %3149 = vadd.xlane.f32.xlu0 %v3148
        %v3150 = vpop.xlane.xlu0 %3149
        %v3151 = vsel %vm383, %v3089, 0.0
        %3152 = vadd.xlane.f32.xlu0 %v3151
        %v3153 = vpop.xlane.xlu0 %3152
        %v3154 = vsel %vm383, %v3090, 0.0
        %3155 = vadd.xlane.f32.xlu0 %v3154
        %v3156 = vpop.xlane.xlu0 %3155
        %v3157 = vsel %vm383, %v3091, 0.0
        %3158 = vadd.xlane.f32.xlu0 %v3157
        %v3159 = vpop.xlane.xlu0 %3158
        %v3160 = vsel %vm383, %v3092, 0.0
        %3161 = vadd.xlane.f32.xlu0 %v3160
        %v3162 = vpop.xlane.xlu0 %3161
        %v3163 = vsel %vm383, %v3093, 0.0
        %3164 = vadd.xlane.f32.xlu0 %v3163
        %v3165 = vpop.xlane.xlu0 %3164
        %v3166 = vsel %vm383, %v3094, 0.0
        %3167 = vadd.xlane.f32.xlu0 %v3166
        %v3168 = vpop.xlane.xlu0 %3167
        %v3169 = vsel %vm383, %v3095, 0.0
        %3170 = vadd.xlane.f32.xlu0 %v3169
        %v3171 = vpop.xlane.xlu0 %3170
        %v3172 = vsel %vm383, %v3096, 0.0
        %3173 = vadd.xlane.f32.xlu0 %v3172
        %v3174 = vpop.xlane.xlu0 %3173
        %v3175 = vsel %vm383, %v3097, 0.0
        %3176 = vadd.xlane.f32.xlu0 %v3175
        %v3177 = vpop.xlane.xlu0 %3176
        %v3178 = vsel %vm383, %v3098, 0.0
        %3179 = vadd.xlane.f32.xlu0 %v3178
        %v3180 = vpop.xlane.xlu0 %3179
        %v3181 = vsel %vm383, %v3099, 0.0
        %3182 = vadd.xlane.f32.xlu0 %v3181
        %v3183 = vpop.xlane.xlu0 %3182
        %v3184 = vsel %vm383, %v3100, 0.0
        %3185 = vadd.xlane.f32.xlu0 %v3184
        %v3186 = vpop.xlane.xlu0 %3185
        %v3187 = vsel %vm383, %v3101, 0.0
        %3188 = vadd.xlane.f32.xlu0 %v3187
        %v3189 = vpop.xlane.xlu0 %3188
        %v3190 = vsel %vm383, %v3102, 0.0
        %3191 = vadd.xlane.f32.xlu0 %v3190
        %v3192 = vpop.xlane.xlu0 %3191
        %v3193 = vsel %vm383, %v3103, 0.0
        %3194 = vadd.xlane.f32.xlu0 %v3193
        %v3195 = vpop.xlane.xlu0 %3194
        %v3196 = vsel %vm383, %v3104, 0.0
        %3197 = vadd.xlane.f32.xlu0 %v3196
        %v3198 = vpop.xlane.xlu0 %3197
        %v3199 = vsel %vm383, %v3105, 0.0
        %3200 = vadd.xlane.f32.xlu0 %v3199
        %v3201 = vpop.xlane.xlu0 %3200
        %v3202 = vmul.f32 %v3108, 0.020408163
        %v3203 = vmul.f32 %v3111, 0.020408163
        %v3204 = vmul.f32 %v3114, 0.020408163
        %v3205 = vmul.f32 %v3117, 0.020408163
        %v3206 = vmul.f32 %v3120, 0.020408163
        %v3207 = vmul.f32 %v3123, 0.020408163
        %v3208 = vmul.f32 %v3126, 0.020408163
        %v3209 = vmul.f32 %v3129, 0.020408163
        %v3210 = vmul.f32 %v3132, 0.020408163
        %v3211 = vmul.f32 %v3135, 0.020408163
        %v3212 = vmul.f32 %v3138, 0.020408163
        %v3213 = vmul.f32 %v3141, 0.020408163
        %v3214 = vmul.f32 %v3144, 0.020408163
        %v3215 = vmul.f32 %v3147, 0.020408163
        %v3216 = vmul.f32 %v3150, 0.020408163
        %v3217 = vmul.f32 %v3153, 0.020408163
        %v3218 = vmul.f32 %v3156, 0.020408163
        %v3219 = vmul.f32 %v3159, 0.020408163
        %v3220 = vmul.f32 %v3162, 0.020408163
        %v3221 = vmul.f32 %v3165, 0.020408163
        %v3222 = vmul.f32 %v3168, 0.020408163
        %v3223 = vmul.f32 %v3171, 0.020408163
        %v3224 = vmul.f32 %v3174, 0.020408163
        %v3225 = vmul.f32 %v3177, 0.020408163
        %v3226 = vmul.f32 %v3180, 0.020408163
        %v3227 = vmul.f32 %v3183, 0.020408163
        %v3228 = vmul.f32 %v3186, 0.020408163
        %v3229 = vmul.f32 %v3189, 0.020408163
        %v3230 = vmul.f32 %v3192, 0.020408163
        %v3231 = vmul.f32 %v3195, 0.020408163
        %v3232 = vmul.f32 %v3198, 0.020408163
        %v3233 = vmul.f32 %v3201, 0.020408163
        %v3234 = vmul.f32 %v3042, %v3042
        %v3235 = vmul.f32 %v3043, %v3043
        %v3236 = vmul.f32 %v3044, %v3044
        %v3237 = vmul.f32 %v3045, %v3045
        %v3238 = vmul.f32 %v3046, %v3046
        %v3239 = vmul.f32 %v3047, %v3047
        %v3240 = vmul.f32 %v3048, %v3048
        %v3241 = vmul.f32 %v3049, %v3049
        %v3242 = vmul.f32 %v3050, %v3050
        %v3243 = vmul.f32 %v3051, %v3051
        %v3244 = vmul.f32 %v3052, %v3052
        %v3245 = vmul.f32 %v3053, %v3053
        %v3246 = vmul.f32 %v3054, %v3054
        %v3247 = vmul.f32 %v3055, %v3055
        %v3248 = vmul.f32 %v3056, %v3056
        %v3249 = vmul.f32 %v3057, %v3057
        %v3250 = vmul.f32 %v3058, %v3058
        %v3251 = vmul.f32 %v3059, %v3059
        %v3252 = vmul.f32 %v3060, %v3060
        %v3253 = vmul.f32 %v3061, %v3061
        %v3254 = vmul.f32 %v3062, %v3062
        %v3255 = vmul.f32 %v3063, %v3063
        %v3256 = vmul.f32 %v3064, %v3064
        %v3257 = vmul.f32 %v3065, %v3065
        %v3258 = vmul.f32 %v3066, %v3066
        %v3259 = vmul.f32 %v3067, %v3067
        %v3260 = vmul.f32 %v3068, %v3068
        %v3261 = vmul.f32 %v3069, %v3069
        %v3262 = vmul.f32 %v3070, %v3070
        %v3263 = vmul.f32 %v3071, %v3071
        %v3264 = vmul.f32 %v3072, %v3072
        %v3265 = vmul.f32 %v3073, %v3073
        %v3266 = vsub.f32 %v3202, %v3234
        %v3267 = vsub.f32 %v3203, %v3235
        %v3268 = vsub.f32 %v3204, %v3236
        %v3269 = vsub.f32 %v3205, %v3237
        %v3270 = vsub.f32 %v3206, %v3238
        %v3271 = vsub.f32 %v3207, %v3239
        %v3272 = vsub.f32 %v3208, %v3240
        %v3273 = vsub.f32 %v3209, %v3241
        %v3274 = vsub.f32 %v3210, %v3242
        %v3275 = vsub.f32 %v3211, %v3243
        %v3276 = vsub.f32 %v3212, %v3244
        %v3277 = vsub.f32 %v3213, %v3245
        %v3278 = vsub.f32 %v3214, %v3246
        %v3279 = vsub.f32 %v3215, %v3247
        %v3280 = vsub.f32 %v3216, %v3248
        %v3281 = vsub.f32 %v3217, %v3249
        %v3282 = vsub.f32 %v3218, %v3250
        %v3283 = vsub.f32 %v3219, %v3251
        %v3284 = vsub.f32 %v3220, %v3252
        %v3285 = vsub.f32 %v3221, %v3253
        %v3286 = vsub.f32 %v3222, %v3254
        %v3287 = vsub.f32 %v3223, %v3255
        %v3288 = vsub.f32 %v3224, %v3256
        %v3289 = vsub.f32 %v3225, %v3257
        %v3290 = vsub.f32 %v3226, %v3258
        %v3291 = vsub.f32 %v3227, %v3259
        %v3292 = vsub.f32 %v3228, %v3260
        %v3293 = vsub.f32 %v3229, %v3261
        %v3294 = vsub.f32 %v3230, %v3262
        %v3295 = vsub.f32 %v3231, %v3263
        %v3296 = vsub.f32 %v3232, %v3264
        %v3297 = vsub.f32 %v3233, %v3265
        %v3298 = vld [vmem:[%s305] sm:$0xff]
        %v3299 = vld [vmem:[%s305 + $0x8] sm:$0xff]
        %v3300 = vld [vmem:[%s305 + $0x10] sm:$0xff]
        %v3301 = vld [vmem:[%s305 + $0x18] sm:$0xff]
        %v3302 = vld [vmem:[%s305 + $0x20] sm:$0xff]
        %v3303 = vld [vmem:[%s305 + $0x28] sm:$0xff]
        %v3304 = vld [vmem:[%s305 + $0x30] sm:$0xff]
        %v3305 = vld [vmem:[%s305 + $0x38] sm:$0xff]
        %v3306 = vld [vmem:[%s305 + $0x40] sm:$0xff]
        %v3307 = vld [vmem:[%s305 + $0x48] sm:$0xff]
        %v3308 = vld [vmem:[%s305 + $0x50] sm:$0xff]
        %v3309 = vld [vmem:[%s305 + $0x58] sm:$0xff]
        %v3310 = vld [vmem:[%s305 + $0x60] sm:$0xff]
        %v3311 = vld [vmem:[%s305 + $0x68] sm:$0xff]
        %v3312 = vld [vmem:[%s305 + $0x70] sm:$0xff]
        %v3313 = vld [vmem:[%s305 + $0x78] sm:$0xff]
        %v3314 = vld [vmem:[%s305 + $0x80] sm:$0xff]
        %v3315 = vld [vmem:[%s305 + $0x88] sm:$0xff]
        %v3316 = vld [vmem:[%s305 + $0x90] sm:$0xff]
        %v3317 = vld [vmem:[%s305 + $0x98] sm:$0xff]
        %v3318 = vld [vmem:[%s305 + $0xa0] sm:$0xff]
        %v3319 = vld [vmem:[%s305 + $0xa8] sm:$0xff]
        %v3320 = vld [vmem:[%s305 + $0xb0] sm:$0xff]
        %v3321 = vld [vmem:[%s305 + $0xb8] sm:$0xff]
        %v3322 = vld [vmem:[%s305 + $0xc0] sm:$0xff]
        %v3323 = vld [vmem:[%s305 + $0xc8] sm:$0xff]
        %v3324 = vld [vmem:[%s305 + $0xd0] sm:$0xff]
        %v3325 = vld [vmem:[%s305 + $0xd8] sm:$0xff]
        %v3326 = vld [vmem:[%s305 + $0xe0] sm:$0xff]
        %v3327 = vld [vmem:[%s305 + $0xe8] sm:$0xff]
        %v3328 = vld [vmem:[%s305 + $0xf0] sm:$0xff]
        %v3329 = vld [vmem:[%s305 + $0xf8] sm:$0xff]
        %v3330 = vadd.f32 %v3266, 1e-05
        %v3331 = vadd.f32 %v3267, 1e-05
        %v3332 = vadd.f32 %v3268, 1e-05
        %v3333 = vadd.f32 %v3269, 1e-05
        %v3334 = vadd.f32 %v3270, 1e-05
        %v3335 = vadd.f32 %v3271, 1e-05
        %v3336 = vadd.f32 %v3272, 1e-05
        %v3337 = vadd.f32 %v3273, 1e-05
        %v3338 = vadd.f32 %v3274, 1e-05
        %v3339 = vadd.f32 %v3275, 1e-05
        %v3340 = vadd.f32 %v3276, 1e-05
        %v3341 = vadd.f32 %v3277, 1e-05
        %v3342 = vadd.f32 %v3278, 1e-05
        %v3343 = vadd.f32 %v3279, 1e-05
        %v3344 = vadd.f32 %v3280, 1e-05
        %v3345 = vadd.f32 %v3281, 1e-05
        %v3346 = vadd.f32 %v3282, 1e-05
        %v3347 = vadd.f32 %v3283, 1e-05
        %v3348 = vadd.f32 %v3284, 1e-05
        %v3349 = vadd.f32 %v3285, 1e-05
        %v3350 = vadd.f32 %v3286, 1e-05
        %v3351 = vadd.f32 %v3287, 1e-05
        %v3352 = vadd.f32 %v3288, 1e-05
        %v3353 = vadd.f32 %v3289, 1e-05
        %v3354 = vadd.f32 %v3290, 1e-05
        %v3355 = vadd.f32 %v3291, 1e-05
        %v3356 = vadd.f32 %v3292, 1e-05
        %v3357 = vadd.f32 %v3293, 1e-05
        %v3358 = vadd.f32 %v3294, 1e-05
        %v3359 = vadd.f32 %v3295, 1e-05
        %v3360 = vadd.f32 %v3296, 1e-05
        %v3361 = vadd.f32 %v3297, 1e-05
        %v3362 = vrsqrt.pop %v3330
        %v3363 = vrsqrt.pop %v3331
        %v3364 = vrsqrt.pop %v3332
        %v3365 = vrsqrt.pop %v3333
        %v3366 = vrsqrt.pop %v3334
        %v3367 = vrsqrt.pop %v3335
        %v3368 = vrsqrt.pop %v3336
        %v3369 = vrsqrt.pop %v3337
        %v3370 = vrsqrt.pop %v3338
        %v3371 = vrsqrt.pop %v3339
        %v3372 = vrsqrt.pop %v3340
        %v3373 = vrsqrt.pop %v3341
        %v3374 = vrsqrt.pop %v3342
        %v3375 = vrsqrt.pop %v3343
        %v3376 = vrsqrt.pop %v3344
        %v3377 = vrsqrt.pop %v3345
        %v3378 = vrsqrt.pop %v3346
        %v3379 = vrsqrt.pop %v3347
        %v3380 = vrsqrt.pop %v3348
        %v3381 = vrsqrt.pop %v3349
        %v3382 = vrsqrt.pop %v3350
        %v3383 = vrsqrt.pop %v3351
        %v3384 = vrsqrt.pop %v3352
        %v3385 = vrsqrt.pop %v3353
        %v3386 = vrsqrt.pop %v3354
        %v3387 = vrsqrt.pop %v3355
        %v3388 = vrsqrt.pop %v3356
        %v3389 = vrsqrt.pop %v3357
        %v3390 = vrsqrt.pop %v3358
        %v3391 = vrsqrt.pop %v3359
        %v3392 = vrsqrt.pop %v3360
        %v3393 = vrsqrt.pop %v3361
        %v3394 = vmul.f32 %v3298, %v3362
        %v3395 = vmul.f32 %v3299, %v3363
        %v3396 = vmul.f32 %v3300, %v3364
        %v3397 = vmul.f32 %v3301, %v3365
        %v3398 = vmul.f32 %v3302, %v3366
        %v3399 = vmul.f32 %v3303, %v3367
        %v3400 = vmul.f32 %v3304, %v3368
        %v3401 = vmul.f32 %v3305, %v3369
        %v3402 = vmul.f32 %v3306, %v3370
        %v3403 = vmul.f32 %v3307, %v3371
        %v3404 = vmul.f32 %v3308, %v3372
        %v3405 = vmul.f32 %v3309, %v3373
        %v3406 = vmul.f32 %v3310, %v3374
        %v3407 = vmul.f32 %v3311, %v3375
        %v3408 = vmul.f32 %v3312, %v3376
        %v3409 = vmul.f32 %v3313, %v3377
        %v3410 = vmul.f32 %v3314, %v3378
        %v3411 = vmul.f32 %v3315, %v3379
        %v3412 = vmul.f32 %v3316, %v3380
        %v3413 = vmul.f32 %v3317, %v3381
        %v3414 = vmul.f32 %v3318, %v3382
        %v3415 = vmul.f32 %v3319, %v3383
        %v3416 = vmul.f32 %v3320, %v3384
        %v3417 = vmul.f32 %v3321, %v3385
        %v3418 = vmul.f32 %v3322, %v3386
        %v3419 = vmul.f32 %v3323, %v3387
        %v3420 = vmul.f32 %v3324, %v3388
        %v3421 = vmul.f32 %v3325, %v3389
        %v3422 = vmul.f32 %v3326, %v3390
        %v3423 = vmul.f32 %v3327, %v3391
        %v3424 = vmul.f32 %v3328, %v3392
        %v3425 = vmul.f32 %v3329, %v3393
        %v3426 = vld [vmem:[%s311] sm:$0xff]
        %v3427 = vld [vmem:[%s311 + $0x8] sm:$0xff]
        %v3428 = vld [vmem:[%s311 + $0x10] sm:$0xff]
        %v3429 = vld [vmem:[%s311 + $0x18] sm:$0xff]
        %v3430 = vld [vmem:[%s311 + $0x20] sm:$0xff]
        %v3431 = vld [vmem:[%s311 + $0x28] sm:$0xff]
        %v3432 = vld [vmem:[%s311 + $0x30] sm:$0xff]
        %v3433 = vld [vmem:[%s311 + $0x38] sm:$0xff]
        %v3434 = vld [vmem:[%s311 + $0x40] sm:$0xff]
        %v3435 = vld [vmem:[%s311 + $0x48] sm:$0xff]
        %v3436 = vld [vmem:[%s311 + $0x50] sm:$0xff]
        %v3437 = vld [vmem:[%s311 + $0x58] sm:$0xff]
        %v3438 = vld [vmem:[%s311 + $0x60] sm:$0xff]
        %v3439 = vld [vmem:[%s311 + $0x68] sm:$0xff]
        %v3440 = vld [vmem:[%s311 + $0x70] sm:$0xff]
        %v3441 = vld [vmem:[%s311 + $0x78] sm:$0xff]
        %v3442 = vld [vmem:[%s311 + $0x80] sm:$0xff]
        %v3443 = vld [vmem:[%s311 + $0x88] sm:$0xff]
        %v3444 = vld [vmem:[%s311 + $0x90] sm:$0xff]
        %v3445 = vld [vmem:[%s311 + $0x98] sm:$0xff]
        %v3446 = vld [vmem:[%s311 + $0xa0] sm:$0xff]
        %v3447 = vld [vmem:[%s311 + $0xa8] sm:$0xff]
        %v3448 = vld [vmem:[%s311 + $0xb0] sm:$0xff]
        %v3449 = vld [vmem:[%s311 + $0xb8] sm:$0xff]
        %v3450 = vld [vmem:[%s311 + $0xc0] sm:$0xff]
        %v3451 = vld [vmem:[%s311 + $0xc8] sm:$0xff]
        %v3452 = vld [vmem:[%s311 + $0xd0] sm:$0xff]
        %v3453 = vld [vmem:[%s311 + $0xd8] sm:$0xff]
        %v3454 = vld [vmem:[%s311 + $0xe0] sm:$0xff]
        %v3455 = vld [vmem:[%s311 + $0xe8] sm:$0xff]
        %v3456 = vld [vmem:[%s311 + $0xf0] sm:$0xff]
        %v3457 = vld [vmem:[%s311 + $0xf8] sm:$0xff]
        %v3458 = vmul.f32 %v3042, %v3394
        %v3459 = vmul.f32 %v3043, %v3395
        %v3460 = vmul.f32 %v3044, %v3396
        %v3461 = vmul.f32 %v3045, %v3397
        %v3462 = vmul.f32 %v3046, %v3398
        %v3463 = vmul.f32 %v3047, %v3399
        %v3464 = vmul.f32 %v3048, %v3400
        %v3465 = vmul.f32 %v3049, %v3401
        %v3466 = vmul.f32 %v3050, %v3402
        %v3467 = vmul.f32 %v3051, %v3403
        %v3468 = vmul.f32 %v3052, %v3404
        %v3469 = vmul.f32 %v3053, %v3405
        %v3470 = vmul.f32 %v3054, %v3406
        %v3471 = vmul.f32 %v3055, %v3407
        %v3472 = vmul.f32 %v3056, %v3408
        %v3473 = vmul.f32 %v3057, %v3409
        %v3474 = vmul.f32 %v3058, %v3410
        %v3475 = vmul.f32 %v3059, %v3411
        %v3476 = vmul.f32 %v3060, %v3412
        %v3477 = vmul.f32 %v3061, %v3413
        %v3478 = vmul.f32 %v3062, %v3414
        %v3479 = vmul.f32 %v3063, %v3415
        %v3480 = vmul.f32 %v3064, %v3416
        %v3481 = vmul.f32 %v3065, %v3417
        %v3482 = vmul.f32 %v3066, %v3418
        %v3483 = vmul.f32 %v3067, %v3419
        %v3484 = vmul.f32 %v3068, %v3420
        %v3485 = vmul.f32 %v3069, %v3421
        %v3486 = vmul.f32 %v3070, %v3422
        %v3487 = vmul.f32 %v3071, %v3423
        %v3488 = vmul.f32 %v3072, %v3424
        %v3489 = vmul.f32 %v3073, %v3425
        %v3490 = vsub.f32 %v3426, %v3458
        %v3491 = vsub.f32 %v3427, %v3459
        %v3492 = vsub.f32 %v3428, %v3460
        %v3493 = vsub.f32 %v3429, %v3461
        %v3494 = vsub.f32 %v3430, %v3462
        %v3495 = vsub.f32 %v3431, %v3463
        %v3496 = vsub.f32 %v3432, %v3464
        %v3497 = vsub.f32 %v3433, %v3465
        %v3498 = vsub.f32 %v3434, %v3466
        %v3499 = vsub.f32 %v3435, %v3467
        %v3500 = vsub.f32 %v3436, %v3468
        %v3501 = vsub.f32 %v3437, %v3469
        %v3502 = vsub.f32 %v3438, %v3470
        %v3503 = vsub.f32 %v3439, %v3471
        %v3504 = vsub.f32 %v3440, %v3472
        %v3505 = vsub.f32 %v3441, %v3473
        %v3506 = vsub.f32 %v3442, %v3474
        %v3507 = vsub.f32 %v3443, %v3475
        %v3508 = vsub.f32 %v3444, %v3476
        %v3509 = vsub.f32 %v3445, %v3477
        %v3510 = vsub.f32 %v3446, %v3478
        %v3511 = vsub.f32 %v3447, %v3479
        %v3512 = vsub.f32 %v3448, %v3480
        %v3513 = vsub.f32 %v3449, %v3481
        %v3514 = vsub.f32 %v3450, %v3482
        %v3515 = vsub.f32 %v3451, %v3483
        %v3516 = vsub.f32 %v3452, %v3484
        %v3517 = vsub.f32 %v3453, %v3485
        %v3518 = vsub.f32 %v3454, %v3486
        %v3519 = vsub.f32 %v3455, %v3487
        %v3520 = vsub.f32 %v3456, %v3488
        %v3521 = vsub.f32 %v3457, %v3489
        %3523 = vset.pattern.permute.xlu0 0
        %3524 = vperm.xlu0 %3523, %v3394
        %v3525 = vpop.permute.xlu0 %3524
        %3528 = vset.pattern.permute.xlu0 0
        %3529 = vperm.xlu0 %3528, %v3395
        %v3530 = vpop.permute.xlu0 %3529
        %3533 = vset.pattern.permute.xlu0 0
        %3534 = vperm.xlu0 %3533, %v3396
        %v3535 = vpop.permute.xlu0 %3534
        %3538 = vset.pattern.permute.xlu0 0
        %3539 = vperm.xlu0 %3538, %v3397
        %v3540 = vpop.permute.xlu0 %3539
        %3543 = vset.pattern.permute.xlu0 0
        %3544 = vperm.xlu0 %3543, %v3398
        %v3545 = vpop.permute.xlu0 %3544
        %3548 = vset.pattern.permute.xlu0 0
        %3549 = vperm.xlu0 %3548, %v3399
        %v3550 = vpop.permute.xlu0 %3549
        %3553 = vset.pattern.permute.xlu0 0
        %3554 = vperm.xlu0 %3553, %v3400
        %v3555 = vpop.permute.xlu0 %3554
        %3558 = vset.pattern.permute.xlu0 0
        %3559 = vperm.xlu0 %3558, %v3401
        %v3560 = vpop.permute.xlu0 %3559
        %3563 = vset.pattern.permute.xlu0 0
        %3564 = vperm.xlu0 %3563, %v3402
        %v3565 = vpop.permute.xlu0 %3564
        %3568 = vset.pattern.permute.xlu0 0
        %3569 = vperm.xlu0 %3568, %v3403
        %v3570 = vpop.permute.xlu0 %3569
        %3573 = vset.pattern.permute.xlu0 0
        %3574 = vperm.xlu0 %3573, %v3404
        %v3575 = vpop.permute.xlu0 %3574
        %3578 = vset.pattern.permute.xlu0 0
        %3579 = vperm.xlu0 %3578, %v3405
        %v3580 = vpop.permute.xlu0 %3579
        %3583 = vset.pattern.permute.xlu0 0
        %3584 = vperm.xlu0 %3583, %v3406
        %v3585 = vpop.permute.xlu0 %3584
        %3588 = vset.pattern.permute.xlu0 0
        %3589 = vperm.xlu0 %3588, %v3407
        %v3590 = vpop.permute.xlu0 %3589
        %3593 = vset.pattern.permute.xlu0 0
        %3594 = vperm.xlu0 %3593, %v3408
        %v3595 = vpop.permute.xlu0 %3594
        %3598 = vset.pattern.permute.xlu0 0
        %3599 = vperm.xlu0 %3598, %v3409
        %v3600 = vpop.permute.xlu0 %3599
        %3603 = vset.pattern.permute.xlu0 0
        %3604 = vperm.xlu0 %3603, %v3410
        %v3605 = vpop.permute.xlu0 %3604
        %3608 = vset.pattern.permute.xlu0 0
        %3609 = vperm.xlu0 %3608, %v3411
        %v3610 = vpop.permute.xlu0 %3609
        %3613 = vset.pattern.permute.xlu0 0
        %3614 = vperm.xlu0 %3613, %v3412
        %v3615 = vpop.permute.xlu0 %3614
        %3618 = vset.pattern.permute.xlu0 0
        %3619 = vperm.xlu0 %3618, %v3413
        %v3620 = vpop.permute.xlu0 %3619
        %3623 = vset.pattern.permute.xlu0 0
        %3624 = vperm.xlu0 %3623, %v3414
        %v3625 = vpop.permute.xlu0 %3624
        %3628 = vset.pattern.permute.xlu0 0
        %3629 = vperm.xlu0 %3628, %v3415
        %v3630 = vpop.permute.xlu0 %3629
        %3633 = vset.pattern.permute.xlu0 0
        %3634 = vperm.xlu0 %3633, %v3416
        %v3635 = vpop.permute.xlu0 %3634
        %3638 = vset.pattern.permute.xlu0 0
        %3639 = vperm.xlu0 %3638, %v3417
        %v3640 = vpop.permute.xlu0 %3639
        %3643 = vset.pattern.permute.xlu0 0
        %3644 = vperm.xlu0 %3643, %v3418
        %v3645 = vpop.permute.xlu0 %3644
        %3648 = vset.pattern.permute.xlu0 0
        %3649 = vperm.xlu0 %3648, %v3419
        %v3650 = vpop.permute.xlu0 %3649
        %3653 = vset.pattern.permute.xlu0 0
        %3654 = vperm.xlu0 %3653, %v3420
        %v3655 = vpop.permute.xlu0 %3654
        %3658 = vset.pattern.permute.xlu0 0
        %3659 = vperm.xlu0 %3658, %v3421
        %v3660 = vpop.permute.xlu0 %3659
        %3663 = vset.pattern.permute.xlu0 0
        %3664 = vperm.xlu0 %3663, %v3422
        %v3665 = vpop.permute.xlu0 %3664
        %3668 = vset.pattern.permute.xlu0 0
        %3669 = vperm.xlu0 %3668, %v3423
        %v3670 = vpop.permute.xlu0 %3669
        %3673 = vset.pattern.permute.xlu0 0
        %3674 = vperm.xlu0 %3673, %v3424
        %v3675 = vpop.permute.xlu0 %3674
        %3678 = vset.pattern.permute.xlu0 0
        %3679 = vperm.xlu0 %3678, %v3425
        %v3680 = vpop.permute.xlu0 %3679
        %v3682 = vmul.f32 %v2788, %v3525
        %v3683 = vmul.f32 %v2793, %v3530
        %v3684 = vmul.f32 %v2798, %v3535
        %v3685 = vmul.f32 %v2803, %v3540
        %v3686 = vmul.f32 %v2808, %v3545
        %v3687 = vmul.f32 %v2813, %v3550
        %v3688 = vmul.f32 %v2818, %v3555
        %v3689 = vmul.f32 %v2823, %v3560
        %v3690 = vmul.f32 %v2828, %v3565
        %v3691 = vmul.f32 %v2833, %v3570
        %v3692 = vmul.f32 %v2838, %v3575
        %v3693 = vmul.f32 %v2843, %v3580
        %v3694 = vmul.f32 %v2848, %v3585
        %v3695 = vmul.f32 %v2853, %v3590
        %v3696 = vmul.f32 %v2858, %v3595
        %v3697 = vmul.f32 %v2863, %v3600
        %v3698 = vmul.f32 %v2868, %v3605
        %v3699 = vmul.f32 %v2873, %v3610
        %v3700 = vmul.f32 %v2878, %v3615
        %v3701 = vmul.f32 %v2883, %v3620
        %v3702 = vmul.f32 %v2888, %v3625
        %v3703 = vmul.f32 %v2893, %v3630
        %v3704 = vmul.f32 %v2898, %v3635
        %v3705 = vmul.f32 %v2903, %v3640
        %v3706 = vmul.f32 %v2908, %v3645
        %v3707 = vmul.f32 %v2913, %v3650
        %v3708 = vmul.f32 %v2918, %v3655
        %v3709 = vmul.f32 %v2923, %v3660
        %v3710 = vmul.f32 %v2928, %v3665
        %v3711 = vmul.f32 %v2933, %v3670
        %v3712 = vmul.f32 %v2938, %v3675
        %v3713 = vmul.f32 %v2943, %v3680
        %3715 = vset.pattern.permute.xlu0 0
        %3716 = vperm.xlu0 %3715, %v3490
        %v3717 = vpop.permute.xlu0 %3716
        %3720 = vset.pattern.permute.xlu0 0
        %3721 = vperm.xlu0 %3720, %v3491
        %v3722 = vpop.permute.xlu0 %3721
        %3725 = vset.pattern.permute.xlu0 0
        %3726 = vperm.xlu0 %3725, %v3492
        %v3727 = vpop.permute.xlu0 %3726
        %3730 = vset.pattern.permute.xlu0 0
        %3731 = vperm.xlu0 %3730, %v3493
        %v3732 = vpop.permute.xlu0 %3731
        %3735 = vset.pattern.permute.xlu0 0
        %3736 = vperm.xlu0 %3735, %v3494
        %v3737 = vpop.permute.xlu0 %3736
        %3740 = vset.pattern.permute.xlu0 0
        %3741 = vperm.xlu0 %3740, %v3495
        %v3742 = vpop.permute.xlu0 %3741
        %3745 = vset.pattern.permute.xlu0 0
        %3746 = vperm.xlu0 %3745, %v3496
        %v3747 = vpop.permute.xlu0 %3746
        %3750 = vset.pattern.permute.xlu0 0
        %3751 = vperm.xlu0 %3750, %v3497
        %v3752 = vpop.permute.xlu0 %3751
        %3755 = vset.pattern.permute.xlu0 0
        %3756 = vperm.xlu0 %3755, %v3498
        %v3757 = vpop.permute.xlu0 %3756
        %3760 = vset.pattern.permute.xlu0 0
        %3761 = vperm.xlu0 %3760, %v3499
        %v3762 = vpop.permute.xlu0 %3761
        %3765 = vset.pattern.permute.xlu0 0
        %3766 = vperm.xlu0 %3765, %v3500
        %v3767 = vpop.permute.xlu0 %3766
        %3770 = vset.pattern.permute.xlu0 0
        %3771 = vperm.xlu0 %3770, %v3501
        %v3772 = vpop.permute.xlu0 %3771
        %3775 = vset.pattern.permute.xlu0 0
        %3776 = vperm.xlu0 %3775, %v3502
        %v3777 = vpop.permute.xlu0 %3776
        %3780 = vset.pattern.permute.xlu0 0
        %3781 = vperm.xlu0 %3780, %v3503
        %v3782 = vpop.permute.xlu0 %3781
        %3785 = vset.pattern.permute.xlu0 0
        %3786 = vperm.xlu0 %3785, %v3504
        %v3787 = vpop.permute.xlu0 %3786
        %3790 = vset.pattern.permute.xlu0 0
        %3791 = vperm.xlu0 %3790, %v3505
        %v3792 = vpop.permute.xlu0 %3791
        %3795 = vset.pattern.permute.xlu0 0
        %3796 = vperm.xlu0 %3795, %v3506
        %v3797 = vpop.permute.xlu0 %3796
        %3800 = vset.pattern.permute.xlu0 0
        %3801 = vperm.xlu0 %3800, %v3507
        %v3802 = vpop.permute.xlu0 %3801
        %3805 = vset.pattern.permute.xlu0 0
        %3806 = vperm.xlu0 %3805, %v3508
        %v3807 = vpop.permute.xlu0 %3806
        %3810 = vset.pattern.permute.xlu0 0
        %3811 = vperm.xlu0 %3810, %v3509
        %v3812 = vpop.permute.xlu0 %3811
        %3815 = vset.pattern.permute.xlu0 0
        %3816 = vperm.xlu0 %3815, %v3510
        %v3817 = vpop.permute.xlu0 %3816
        %3820 = vset.pattern.permute.xlu0 0
        %3821 = vperm.xlu0 %3820, %v3511
        %v3822 = vpop.permute.xlu0 %3821
        %3825 = vset.pattern.permute.xlu0 0
        %3826 = vperm.xlu0 %3825, %v3512
        %v3827 = vpop.permute.xlu0 %3826
        %3830 = vset.pattern.permute.xlu0 0
        %3831 = vperm.xlu0 %3830, %v3513
        %v3832 = vpop.permute.xlu0 %3831
        %3835 = vset.pattern.permute.xlu0 0
        %3836 = vperm.xlu0 %3835, %v3514
        %v3837 = vpop.permute.xlu0 %3836
        %3840 = vset.pattern.permute.xlu0 0
        %3841 = vperm.xlu0 %3840, %v3515
        %v3842 = vpop.permute.xlu0 %3841
        %3845 = vset.pattern.permute.xlu0 0
        %3846 = vperm.xlu0 %3845, %v3516
        %v3847 = vpop.permute.xlu0 %3846
        %3850 = vset.pattern.permute.xlu0 0
        %3851 = vperm.xlu0 %3850, %v3517
        %v3852 = vpop.permute.xlu0 %3851
        %3855 = vset.pattern.permute.xlu0 0
        %3856 = vperm.xlu0 %3855, %v3518
        %v3857 = vpop.permute.xlu0 %3856
        %3860 = vset.pattern.permute.xlu0 0
        %3861 = vperm.xlu0 %3860, %v3519
        %v3862 = vpop.permute.xlu0 %3861
        %3865 = vset.pattern.permute.xlu0 0
        %3866 = vperm.xlu0 %3865, %v3520
        %v3867 = vpop.permute.xlu0 %3866
        %3870 = vset.pattern.permute.xlu0 0
        %3871 = vperm.xlu0 %3870, %v3521
        %v3872 = vpop.permute.xlu0 %3871
        %v3874 = vadd.f32 %v3682, %v3717
        %v3875 = vadd.f32 %v3683, %v3722
        %v3876 = vadd.f32 %v3684, %v3727
        %v3877 = vadd.f32 %v3685, %v3732
        %v3878 = vadd.f32 %v3686, %v3737
        %v3879 = vadd.f32 %v3687, %v3742
        %v3880 = vadd.f32 %v3688, %v3747
        %v3881 = vadd.f32 %v3689, %v3752
        %v3882 = vadd.f32 %v3690, %v3757
        %v3883 = vadd.f32 %v3691, %v3762
        %v3884 = vadd.f32 %v3692, %v3767
        %v3885 = vadd.f32 %v3693, %v3772
        %v3886 = vadd.f32 %v3694, %v3777
        %v3887 = vadd.f32 %v3695, %v3782
        %v3888 = vadd.f32 %v3696, %v3787
        %v3889 = vadd.f32 %v3697, %v3792
        %v3890 = vadd.f32 %v3698, %v3797
        %v3891 = vadd.f32 %v3699, %v3802
        %v3892 = vadd.f32 %v3700, %v3807
        %v3893 = vadd.f32 %v3701, %v3812
        %v3894 = vadd.f32 %v3702, %v3817
        %v3895 = vadd.f32 %v3703, %v3822
        %v3896 = vadd.f32 %v3704, %v3827
        %v3897 = vadd.f32 %v3705, %v3832
        %v3898 = vadd.f32 %v3706, %v3837
        %v3899 = vadd.f32 %v3707, %v3842
        %v3900 = vadd.f32 %v3708, %v3847
        %v3901 = vadd.f32 %v3709, %v3852
        %v3902 = vadd.f32 %v3710, %v3857
        %v3903 = vadd.f32 %v3711, %v3862
        %v3904 = vadd.f32 %v3712, %v3867
        %v3905 = vadd.f32 %v3713, %v3872
        %3906 = vst.msk [vmem:[%s317] sm:$0xff] %vm383, %v3874
        %3907 = vst.msk [vmem:[%s317 + $0x8] sm:$0xff] %vm383, %v3875
        %3908 = vst.msk [vmem:[%s317 + $0x10] sm:$0xff] %vm383, %v3876
        %3909 = vst.msk [vmem:[%s317 + $0x18] sm:$0xff] %vm383, %v3877
        %3910 = vst.msk [vmem:[%s317 + $0x20] sm:$0xff] %vm383, %v3878
        %3911 = vst.msk [vmem:[%s317 + $0x28] sm:$0xff] %vm383, %v3879
        %3912 = vst.msk [vmem:[%s317 + $0x30] sm:$0xff] %vm383, %v3880
        %3913 = vst.msk [vmem:[%s317 + $0x38] sm:$0xff] %vm383, %v3881
        %3914 = vst.msk [vmem:[%s317 + $0x40] sm:$0xff] %vm383, %v3882
        %3915 = vst.msk [vmem:[%s317 + $0x48] sm:$0xff] %vm383, %v3883
        %3916 = vst.msk [vmem:[%s317 + $0x50] sm:$0xff] %vm383, %v3884
        %3917 = vst.msk [vmem:[%s317 + $0x58] sm:$0xff] %vm383, %v3885
        %3918 = vst.msk [vmem:[%s317 + $0x60] sm:$0xff] %vm383, %v3886
        %3919 = vst.msk [vmem:[%s317 + $0x68] sm:$0xff] %vm383, %v3887
        %3920 = vst.msk [vmem:[%s317 + $0x70] sm:$0xff] %vm383, %v3888
        %3921 = vst.msk [vmem:[%s317 + $0x78] sm:$0xff] %vm383, %v3889
        %3922 = vst.msk [vmem:[%s317 + $0x80] sm:$0xff] %vm383, %v3890
        %3923 = vst.msk [vmem:[%s317 + $0x88] sm:$0xff] %vm383, %v3891
        %3924 = vst.msk [vmem:[%s317 + $0x90] sm:$0xff] %vm383, %v3892
        %3925 = vst.msk [vmem:[%s317 + $0x98] sm:$0xff] %vm383, %v3893
        %3926 = vst.msk [vmem:[%s317 + $0xa0] sm:$0xff] %vm383, %v3894
        %3927 = vst.msk [vmem:[%s317 + $0xa8] sm:$0xff] %vm383, %v3895
        %3928 = vst.msk [vmem:[%s317 + $0xb0] sm:$0xff] %vm383, %v3896
        %3929 = vst.msk [vmem:[%s317 + $0xb8] sm:$0xff] %vm383, %v3897
        %3930 = vst.msk [vmem:[%s317 + $0xc0] sm:$0xff] %vm383, %v3898
        %3931 = vst.msk [vmem:[%s317 + $0xc8] sm:$0xff] %vm383, %v3899
        %3932 = vst.msk [vmem:[%s317 + $0xd0] sm:$0xff] %vm383, %v3900
        %3933 = vst.msk [vmem:[%s317 + $0xd8] sm:$0xff] %vm383, %v3901
        %3934 = vst.msk [vmem:[%s317 + $0xe0] sm:$0xff] %vm383, %v3902
        %3935 = vst.msk [vmem:[%s317 + $0xe8] sm:$0xff] %vm383, %v3903
        %3936 = vst.msk [vmem:[%s317 + $0xf0] sm:$0xff] %vm383, %v3904
        %3937 = vst.msk [vmem:[%s317 + $0xf8] sm:$0xff] %vm383, %v3905
        %s3938 = smul.u32 32, %s20
        %p3939 = scmp.lt.s32.totalorder %s3938, 255
        %s3940 = scalar_select %p3939, %s3938, 255
        %s3941 = smul.addr %s3940, 8
        %s3942 = scalar_lea.vmem %s6, %s3941
        // Predicated region
        $region49: #{tpu_custom_call.1} parent=43 // pred_check
          %p3943 = pneg %p179
        $region50: #{tpu_custom_call.1} parent=43 // pred_check_branch
          %3945 = sbr.rel (%p3943) target = $region52
        $region51: #{tpu_custom_call.1} parent=43 // pred_region
          %s3946 = smul.u32 32, %s20
        $region52: #{tpu_custom_call.1} parent=43 // pred_fallthru
          _
      $region44: #{tpu_custom_call.1} parent=5 // pred_fallthru
        _
      %p3947 = scmp.le.s32.totalorder 2, %s15
      // Predicated region
      $region53: #{tpu_custom_call.1} parent=5 // pred_check
        %p3948 = pneg %p3947
      $region54: #{tpu_custom_call.1} parent=5 // pred_check_branch
        %3950 = sbr.rel (%p3948) target = $region56
      $region55: #{tpu_custom_call.1} parent=5 // pred_region
        %s3951 = ssub.s32 %s15, 2
        // Predicated region
        $region57: #{tpu_custom_call.1} parent=55 // pred_check
          %p3952 = pneg %p185
        $region58: #{tpu_custom_call.1} parent=55 // pred_check_branch
          %3954 = sbr.rel (%p3952) target = $region60
        $region59: #{tpu_custom_call.1} parent=55 // pred_region
          %s3955 = smul.u32 32, %s21
          %p3956 = scmp.lt.s32.totalorder %s3955, 255
          %s3957 = scalar_select %p3956, %s3955, 255
          %s3958 = smul.addr %s3957, 8
          %s3959 = scalar_lea.vmem %s6, %s3958
        $region60: #{tpu_custom_call.1} parent=55 // pred_fallthru
          _
      $region56: #{tpu_custom_call.1} parent=5 // pred_fallthru
        _
    $region6: #{tpu_custom_call.1} parent=1 // loop_footer
      %s19 = sadd.s32 1, %s15
    $region7: #{tpu_custom_call.1} parent=1 // loop_footer_branch
      %14 = sbr.rel target = $region3
    $region8: #{tpu_custom_call.1} parent=1 // loop_exit
      _
    %3960 = vsyncpa [#allocation3], 1
    %s3961 = scalar_lea.sflag [#allocation3], 1
    %3962 = vsyncpa %s3961, 1

</llo_original>
